<compile_context>
chip_gen: v6e
topology: v6e:2x2x1
jax: 0.10.0
libtpu: 0.0.40
codegen_flags: <defaults>
</compile_context>

<pallas_src>
import functools

import jax
import jax.numpy as jnp
from jax.experimental import pallas as pl
from jax.experimental.pallas import tpu as pltpu


# --------------------------------------------------------------------------
# Fused kernel: one (channel, batch-block) slice per grid step.
#   x1_ref : (Bblk, T1, S)   x2_ref : (Bblk, S, S)
#   wq_ref : (S, S)          wkv_ref: (S, 2S)   [W_key | W_value]
#   o_ref  : (Bblk, T1, S)
# --------------------------------------------------------------------------
def _cross_attn_kernel(x1_ref, x2_ref, wq_ref, wkv_ref, o_ref, *, scale):
    bblk, t1, s = x1_ref.shape
    hp = jax.lax.Precision.HIGHEST   # keep f32 numerics identical to the ref

    x1 = x1_ref[...]
    x2 = x2_ref[...]
    wq = wq_ref[...]
    wkv = wkv_ref[...]

    # Projections: weight shared across the batch block -> flatten leading
    # dims and run plain 2-D MXU matmuls.
    q = jnp.dot(x1.reshape(bblk * t1, s), wq,
                preferred_element_type=jnp.float32, precision=hp)
    q = q.reshape(bblk, t1, s) * scale        # fold 1/sqrt(d_out_kq) into q

    kv = jnp.dot(x2.reshape(bblk * s, s), wkv,
                 preferred_element_type=jnp.float32, precision=hp)
    kv = kv.reshape(bblk, s, 2 * s)
    k = kv[:, :, :s]
    v = kv[:, :, s:]

    # attn_scores = queries_1 @ keys_2  (reference module has NO transpose).
    scores = jnp.einsum('bik,bkj->bij', q, k,
                        preferred_element_type=jnp.float32, precision=hp)

    # Numerically stable softmax over the last dim, all f32.
    scores = scores - jnp.max(scores, axis=-1, keepdims=True)
    p = jnp.exp(scores)
    p = p / jnp.sum(p, axis=-1, keepdims=True)

    # context = attn_weights @ values_2
    ctx = jnp.einsum('bik,bkj->bij', p, v,
                     preferred_element_type=jnp.float32, precision=hp)
    o_ref[...] = ctx.astype(o_ref.dtype)


def _pick_batch_block(batch):
    for cand in (8, 4, 2, 1):
        if cand <= batch and batch % cand == 0:
            return cand
    return 1


# --------------------------------------------------------------------------
# Wrapper
# --------------------------------------------------------------------------
@jax.jit
def _cross_attention_4d(x1, x2, w_query, w_key, w_value):
    B, d_in, T1, S = x1.shape
    assert x2.shape == (B, d_in, S, S), x2.shape
    assert w_query.shape == (d_in, S, S), w_query.shape
    assert w_key.shape == (d_in, S, S) and w_value.shape == (d_in, S, S)

    # self.d_out_kq == d_in in the PyTorch module.
    scale = 1.0 / (float(d_in) ** 0.5)

    f32 = jnp.float32
    x1 = x1.astype(f32)
    x2 = x2.astype(f32)
    w_query = w_query.astype(f32)
    # Fused K/V projection weight: single matmul with doubled N inside kernel.
    w_kv = jnp.concatenate([w_key.astype(f32), w_value.astype(f32)], axis=-1)

    bblk = _pick_batch_block(B)
    num_bb = B // bblk

    # Channel OUTER, batch INNER: weight block index is constant across the
    # inner axis -> Pallas keeps the weight tiles resident in VMEM.
    grid = (d_in, num_bb)

    def x_spec(rows):
        return pl.BlockSpec((bblk, None, rows, S), lambda c, b: (b, c, 0, 0))

    wq_spec = pl.BlockSpec((None, S, S), lambda c, b: (c, 0, 0))
    wkv_spec = pl.BlockSpec((None, S, 2 * S), lambda c, b: (c, 0, 0))
    out_spec = pl.BlockSpec((bblk, None, T1, S), lambda c, b: (b, c, 0, 0))

    return pl.pallas_call(
        functools.partial(_cross_attn_kernel, scale=scale),
        out_shape=jax.ShapeDtypeStruct((B, d_in, T1, S), jnp.float32),
        grid=grid,
        in_specs=[x_spec(T1), x_spec(S), wq_spec, wkv_spec],
        out_specs=out_spec,
        compiler_params=pltpu.CompilerParams(
            dimension_semantics=("parallel", "parallel")),
    )(x1, x2, w_query, w_kv)


def cross_attention(x1, x2, w_query, w_key, w_value):
    """CrossAttention.forward.  x1: (B, d_in, T1, S) or (d_in, T1, S);
    x2: (B, d_in, S, S) or (d_in, S, S); W_*: (d_in, S, S)."""
    squeeze = x1.ndim == 3
    if squeeze:
        x1, x2 = x1[None], x2[None]
    out = _cross_attention_4d(x1, x2, w_query, w_key, w_value)
    return out[0] if squeeze else out


# --------------------------------------------------------------------------
# Pure-JAX reference (same f32 / HIGHEST-precision numerics as the kernel).
# --------------------------------------------------------------------------
def cross_attention_ref(x1, x2, w_query, w_key, w_value):
    squeeze = x1.ndim == 3
    if squeeze:
        x1, x2 = x1[None], x2[None]
    hp = jax.lax.Precision.HIGHEST
    d_in = w_query.shape[0]
    scale = 1.0 / (float(d_in) ** 0.5)

    q = jnp.einsum('bcij,cjk->bcik', x1, w_query, precision=hp)
    k = jnp.einsum('bcij,cjk->bcik', x2, w_key, precision=hp)
    v = jnp.einsum('bcij,cjk->bcik', x2, w_value, precision=hp)
    s = jnp.einsum('bcij,bcjk->bcik', q, k, precision=hp) * scale
    p = jax.nn.softmax(s, axis=-1)
    out = jnp.einsum('bcij,bcjk->bcik', p, v, precision=hp)
    return out[0] if squeeze else out


# --------------------------------------------------------------------------
if __name__ == "__main__":
    B, d_in, S = 2, 4, 16                       # batch, channels, img_size
    key = jax.random.PRNGKey(0)
    k1, k2, k3, k4, k5 = jax.random.split(key, 5)
    # torch.rand-style uniform [0, 1) parameters and inputs.
    x1 = jax.random.uniform(k1, (B, d_in, S, S), jnp.float32)
    x2 = jax.random.uniform(k2, (B, d_in, S, S), jnp.float32)
    w_query = jax.random.uniform(k3, (d_in, S, S), jnp.float32)
    w_key = jax.random.uniform(k4, (d_in, S, S), jnp.float32)
    w_value = jax.random.uniform(k5, (d_in, S, S), jnp.float32)

    out = cross_attention(x1, x2, w_query, w_key, w_value)
    out = jax.block_until_ready(out)

    assert out.shape == (B, d_in, S, S), out.shape
    assert bool(jnp.all(jnp.isfinite(out)))

    ref = cross_attention_ref(x1, x2, w_query, w_key, w_value)
    ref = jax.block_until_ready(ref)
    assert bool(jnp.allclose(out, ref, rtol=3e-2, atol=3e-2)), \
        float(jnp.max(jnp.abs(out - ref)))

    print("KERNEL_OK")
</pallas_src>

<mosaic_0001>
module attributes {stable_mosaic.version = 11 : i64} {
  func.func @_cross_attn_kernel(%arg0: i32, %arg1: i32, %arg2: memref<2x1x16x16xf32, #tpu.memory_space<vmem>>, %arg3: memref<2x1x16x16xf32, #tpu.memory_space<vmem>>, %arg4: memref<1x16x16xf32, #tpu.memory_space<vmem>>, %arg5: memref<1x16x32xf32, #tpu.memory_space<vmem>>, %arg6: memref<2x1x16x16xf32, #tpu.memory_space<vmem>>) attributes {dimension_semantics = [#tpu.dimension_semantics<parallel>, #tpu.dimension_semantics<parallel>], iteration_bounds = array<i64: 4, 1>, scalar_prefetch = 0 : i64, scratch_operands = 0 : i64, tpu.core_type = #tpu.core_type<tc>, window_params = [{transform_indices = @transform_0, window_bounds = array<i64: 2, 1, 16, 16>}, {transform_indices = @transform_1, window_bounds = array<i64: 2, 1, 16, 16>}, {transform_indices = @transform_2, window_bounds = array<i64: 1, 16, 16>}, {transform_indices = @transform_3, window_bounds = array<i64: 1, 16, 32>}, {transform_indices = @transform_4, window_bounds = array<i64: 2, 1, 16, 16>}]} {
    %c0 = arith.constant 0 : index
    %c0_0 = arith.constant 0 : index
    %c0_1 = arith.constant 0 : index
    %c0_2 = arith.constant 0 : index
    %0 = vector.load %arg2[%c0, %c0_0, %c0_1, %c0_2] : memref<2x1x16x16xf32, #tpu.memory_space<vmem>>, vector<2x1x16x16xf32>
    %1 = vector.shape_cast %0 : vector<2x1x16x16xf32> to vector<2x16x16xf32>
    %c0_3 = arith.constant 0 : index
    %c0_4 = arith.constant 0 : index
    %c0_5 = arith.constant 0 : index
    %c0_6 = arith.constant 0 : index
    %2 = vector.load %arg3[%c0_3, %c0_4, %c0_5, %c0_6] : memref<2x1x16x16xf32, #tpu.memory_space<vmem>>, vector<2x1x16x16xf32>
    %3 = vector.shape_cast %2 : vector<2x1x16x16xf32> to vector<2x16x16xf32>
    %c0_7 = arith.constant 0 : index
    %c0_8 = arith.constant 0 : index
    %c0_9 = arith.constant 0 : index
    %4 = vector.load %arg4[%c0_7, %c0_8, %c0_9] : memref<1x16x16xf32, #tpu.memory_space<vmem>>, vector<1x16x16xf32>
    %5 = vector.shape_cast %4 : vector<1x16x16xf32> to vector<16x16xf32>
    %c0_10 = arith.constant 0 : index
    %c0_11 = arith.constant 0 : index
    %c0_12 = arith.constant 0 : index
    %6 = vector.load %arg5[%c0_10, %c0_11, %c0_12] : memref<1x16x32xf32, #tpu.memory_space<vmem>>, vector<1x16x32xf32>
    %7 = vector.shape_cast %6 : vector<1x16x32xf32> to vector<16x32xf32>
    %8 = vector.shape_cast %1 : vector<2x16x16xf32> to vector<32x16xf32>
    %cst = arith.constant dense<0.000000e+00> : vector<32x16xf32>
    %9 = tpu.matmul %8, %5, %cst {dimension_numbers = #tpu.dot_dimension_numbers<[1], [0], [0], [1], [0, 0, 1, 1], [], []>, precision = #tpu.contract_precision<fp32>} : vector<32x16xf32>, vector<16x16xf32>, vector<32x16xf32> -> vector<32x16xf32>
    %10 = vector.shape_cast %9 : vector<32x16xf32> to vector<2x16x16xf32>
    %cst_13 = arith.constant 5.000000e-01 : f32
    %11 = vector.broadcast %cst_13 : f32 to vector<2x16x16xf32>
    %12 = arith.mulf %10, %11 : vector<2x16x16xf32>
    %13 = vector.shape_cast %3 : vector<2x16x16xf32> to vector<32x16xf32>
    %cst_14 = arith.constant dense<0.000000e+00> : vector<32x32xf32>
    %14 = tpu.matmul %13, %7, %cst_14 {dimension_numbers = #tpu.dot_dimension_numbers<[1], [0], [0], [1], [0, 0, 1, 1], [], []>, precision = #tpu.contract_precision<fp32>} : vector<32x16xf32>, vector<16x32xf32>, vector<32x32xf32> -> vector<32x32xf32>
    %15 = vector.shape_cast %14 : vector<32x32xf32> to vector<2x16x32xf32>
    %16 = vector.extract_strided_slice %15 {offsets = [0, 0, 0], sizes = [2, 16, 16], strides = [1, 1, 1]} : vector<2x16x32xf32> to vector<2x16x16xf32>
    %17 = vector.extract_strided_slice %15 {offsets = [0, 0, 16], sizes = [2, 16, 16], strides = [1, 1, 1]} : vector<2x16x32xf32> to vector<2x16x16xf32>
    "tpu.trace_start"() <{level = 10 : i32, message = "bik,bkj->bij"}> : () -> ()
    %cst_15 = arith.constant dense<0.000000e+00> : vector<2x16x16xf32>
    %18 = tpu.matmul %12, %16, %cst_15 {dimension_numbers = #tpu.dot_dimension_numbers<[2], [1], [1], [2], [0, 0, 0, 1, 1, 2], [0], [0]>, precision = #tpu.contract_precision<fp32>} : vector<2x16x16xf32>, vector<2x16x16xf32>, vector<2x16x16xf32> -> vector<2x16x16xf32>
    "tpu.trace_stop"() : () -> ()
    %cst_16 = arith.constant dense<0xFF800000> : vector<2x16xf32>
    %19 = vector.multi_reduction <maximumf>, %18, %cst_16 [2] : vector<2x16x16xf32> to vector<2x16xf32>
    %20 = vector.shape_cast %19 : vector<2x16xf32> to vector<2x16x1xf32>
    %21 = vector.broadcast %20 : vector<2x16x1xf32> to vector<2x16x16xf32>
    %22 = arith.subf %18, %21 : vector<2x16x16xf32>
    %23 = math.exp %22 : vector<2x16x16xf32>
    %cst_17 = arith.constant dense<0.000000e+00> : vector<2x16xf32>
    %24 = vector.multi_reduction <add>, %23, %cst_17 [2] : vector<2x16x16xf32> to vector<2x16xf32>
    %25 = vector.shape_cast %24 : vector<2x16xf32> to vector<2x16x1xf32>
    %26 = vector.broadcast %25 : vector<2x16x1xf32> to vector<2x16x16xf32>
    %27 = arith.divf %23, %26 : vector<2x16x16xf32>
    "tpu.trace_start"() <{level = 10 : i32, message = "bik,bkj->bij"}> : () -> ()
    %cst_18 = arith.constant dense<0.000000e+00> : vector<2x16x16xf32>
    %28 = tpu.matmul %27, %17, %cst_18 {dimension_numbers = #tpu.dot_dimension_numbers<[2], [1], [1], [2], [0, 0, 0, 1, 1, 2], [0], [0]>, precision = #tpu.contract_precision<fp32>} : vector<2x16x16xf32>, vector<2x16x16xf32>, vector<2x16x16xf32> -> vector<2x16x16xf32>
    "tpu.trace_stop"() : () -> ()
    %c0_19 = arith.constant 0 : index
    %c0_20 = arith.constant 0 : index
    %c0_21 = arith.constant 0 : index
    %c0_22 = arith.constant 0 : index
    %29 = vector.load %arg6[%c0_19, %c0_20, %c0_21, %c0_22] : memref<2x1x16x16xf32, #tpu.memory_space<vmem>>, vector<2x1x16x16xf32>
    %30 = vector.shape_cast %29 : vector<2x1x16x16xf32> to vector<2x16x16xf32>
    %31 = vector.shape_cast %28 : vector<2x16x16xf32> to vector<2x1x16x16xf32>
    tpu.vector_store %arg6[%c0_19, %c0_20, %c0_21, %c0_22], %31 {strides = array<i32>} : memref<2x1x16x16xf32, #tpu.memory_space<vmem>>, vector<2x1x16x16xf32>,
    return
  }
  func.func @transform_0(%arg0: i32, %arg1: i32) -> (i32, i32, i32, i32) {
    %c0_i32 = arith.constant 0 : i32
    %c0_i32_0 = arith.constant 0 : i32
    %c0_i32_1 = arith.constant 0 : i32
    return %arg1, %arg0, %c0_i32, %c0_i32_0 : i32, i32, i32, i32
  }
  func.func @transform_1(%arg0: i32, %arg1: i32) -> (i32, i32, i32, i32) {
    %c0_i32 = arith.constant 0 : i32
    %c0_i32_0 = arith.constant 0 : i32
    %c0_i32_1 = arith.constant 0 : i32
    return %arg1, %arg0, %c0_i32, %c0_i32_0 : i32, i32, i32, i32
  }
  func.func @transform_2(%arg0: i32, %arg1: i32) -> (i32, i32, i32) {
    %c0_i32 = arith.constant 0 : i32
    %c0_i32_0 = arith.constant 0 : i32
    %c0_i32_1 = arith.constant 0 : i32
    return %arg0, %c0_i32, %c0_i32_0 : i32, i32, i32
  }
  func.func @transform_3(%arg0: i32, %arg1: i32) -> (i32, i32, i32) {
    %c0_i32 = arith.constant 0 : i32
    %c0_i32_0 = arith.constant 0 : i32
    %c0_i32_1 = arith.constant 0 : i32
    return %arg0, %c0_i32, %c0_i32_0 : i32, i32, i32
  }
  func.func @transform_4(%arg0: i32, %arg1: i32) -> (i32, i32, i32, i32) {
    %c0_i32 = arith.constant 0 : i32
    %c0_i32_0 = arith.constant 0 : i32
    %c0_i32_1 = arith.constant 0 : i32
    return %arg1, %arg0, %c0_i32, %c0_i32_0 : i32, i32, i32, i32
  }
}

</mosaic_0001>

<llo_original>
// kernel: _cross_attention_4d.1
$region0: #{_cross_attention_4d.1}
  #allocation0 [shape = 'u32[]', space=smem, size = 0x4, offset = 0x4, fixed_abs, tag = 'smem constant byte address 0x4 - core index']
  #allocation1 [shape = 'u32[144,128]{1,0:T(1,128)}', space=vmem, size = 0x12000, scoped, tag = 'internal scratch']
  #allocation7 [shape = 's32[]', space=sflag, size = 0x4, offset = 0, fixed_abs, tag = 'sflag constant byte address 0x0 - dummy sync flag']
  #allocation9 [shape = 's32[]', space=sflag, size = 0x4, offset = 0, fixed_abs, tag = 'sflag constant byte address 0x0 - dummy sync flag']
  %s0 = inlined_call_operand.vmem [shape: f32[2,4,16,16], index: 0, kind: input, shape index: {}]
  %s1 = inlined_call_operand.hbm [shape: f32[2,4,16,16], index: 1, kind: input, shape index: {}]
  %s2 = inlined_call_operand.vmem [shape: f32[4,16,16], index: 2, kind: input, shape index: {}]
  %s3 = inlined_call_operand.vmem [shape: f32[4,16,32], index: 3, kind: input, shape index: {}]
  %s4 = inlined_call_operand.hbm [shape: f32[2,4,16,16], index: 4, kind: output, shape index: {}]
  %s5 = sld [smem:[#allocation0]]
  $region91: #{_cross_attention_4d.1} parent=0
    _
  %s7 = ssub.s32 1, %s5
  %s8 = scalar_select 0, %s7, %s5
  $region1: #{_cross_attention_4d.1} parent=0
    #allocation2 [shape = 'u8[32768]{0}', space=vmem, size = 0x8000, scoped, tag = 'input window, operand 0']
    #allocation3 [shape = 'u8[32768]{0}', space=vmem, size = 0x8000, scoped, tag = 'input window, operand 1']
    #allocation4 [shape = 's32[2]{0}', space=sflag, size = 0x8, scoped, tag = 'scoped memory for _cross_attention_4d.1']
    #allocation5 [shape = 's32[2]{0}', space=sflag, size = 0x8, scoped, tag = 'scoped memory for _cross_attention_4d.1']
    #allocation6 [shape = 'u8[32768]{0}', space=vmem, size = 0x8000, scoped, tag = 'output window, operand 0']
    %9 = vsyncpa [#allocation4], 0
    %s10 = scalar_lea.sflag [#allocation4], 1
    %11 = vsyncpa %s10, 0
    %12 = vsyncpa [#allocation5], 0
    %s13 = scalar_lea.sflag [#allocation5], 1
    %14 = vsyncpa %s13, 0
    loop: start=0, step=1, limit=6
    $region2: #{_cross_attention_4d.1} parent=1 // loop_pre_header
      _
    $region3: #{_cross_attention_4d.1} parent=1 // loop_header
      %s16 = sphi 0, %s20
      %p17 = scmp.ge.s32.totalorder %s16, 6
      %s23 = sphi 0, %s35
      %s24 = sphi 0, %s31
      %s25 = sphi 0, %s23
      %s26 = sphi 0, %s24
      %s27 = sphi 0, %s25
      %s28 = sphi 0, %s26
      %s40 = sphi 0, %s42
      %s43 = sphi 0, %s40
      %s44 = sphi 0, %s43
      %s60 = sphi 0, %s44
      %s68 = sphi 0, %s70
      %s71 = sphi 0, %s68
      %s72 = sphi 0, %s71
      %s88 = sphi 0, %s72
      %s94 = sphi 0, %s96
      %s97 = sphi 0, %s94
      %s98 = sphi 0, %s97
      %s114 = sphi 0, %s98
      %s120 = sphi 0, %s122
      %s123 = sphi 0, %s120
      %s124 = sphi 0, %s123
      %s140 = sphi 0, %s124
      %s148 = sphi 0, %s150
      %s151 = sphi 0, %s148
      %s152 = sphi 0, %s151
      %s168 = sphi 0, %s152
    $region4: #{_cross_attention_4d.1} parent=1 // loop_header_branch
      %19 = sbr.rel (%p17) target = $region8
    $region5: #{_cross_attention_4d.1} parent=1 // loop_body
      %s21 = ssub.s32 %s16, 1
      %s22 = ssub.s32 %s16, 2
      %s29 = sadd.s32 1, %s24
      %p30 = scmp.ge.s32.totalorder %s29, 1
      %s31 = scalar_select %p30, 0, %s29
      %s32 = sadd.s32 1, %s23
      %s33 = scalar_select %p30, %s32, %s23
      %p34 = scmp.ge.s32.totalorder %s33, 4
      %s35 = scalar_select %p34, 0, %s33
      %s36 = ssub.s32 %s24, %s31
      %s37 = ssub.s32 %s23, %s35
      %s38 = sor.u32 %s36, %s37
      %p39 = scmp.eq.s32.totalorder %s38, 0
      %s41 = sadd.s32 %s40, 1
      %s42 = scalar_select %p39, %s40, %s41
      %p45 = pneg %p39
      %p46 = scmp.eq.s32.totalorder %s16, 3
      %p47 = por %p45, %p46
      %p48 = scmp.ne.s32.totalorder %s40, %s43
      %p49 = scmp.eq.s32.totalorder %s16, 0
      %p50 = por %p48, %p49
      %p51 = scmp.ne.s32.totalorder %s40, %s43
      %p52 = scmp.eq.s32.totalorder %s21, 3
      %p53 = por %p51, %p52
      %p54 = scmp.ne.s32.totalorder %s43, %s44
      %p55 = scmp.eq.s32.totalorder %s21, 0
      %p56 = por %p54, %p55
      %p57 = scmp.ne.s32.totalorder %s43, %s44
      %p58 = scmp.eq.s32.totalorder %s22, 3
      %p59 = por %p57, %p58
      %p61 = scmp.ne.s32.totalorder %s44, %s60
      %p62 = scmp.eq.s32.totalorder %s22, 0
      %p63 = por %p61, %p62
      %s64 = ssub.s32 %s24, %s31
      %s65 = ssub.s32 %s23, %s35
      %s66 = sor.u32 %s64, %s65
      %p67 = scmp.eq.s32.totalorder %s66, 0
      %s69 = sadd.s32 %s68, 1
      %s70 = scalar_select %p67, %s68, %s69
      %p73 = pneg %p67
      %p74 = scmp.eq.s32.totalorder %s16, 3
      %p75 = por %p73, %p74
      %p76 = scmp.ne.s32.totalorder %s68, %s71
      %p77 = scmp.eq.s32.totalorder %s16, 0
      %p78 = por %p76, %p77
      %p79 = scmp.ne.s32.totalorder %s68, %s71
      %p80 = scmp.eq.s32.totalorder %s21, 3
      %p81 = por %p79, %p80
      %p82 = scmp.ne.s32.totalorder %s71, %s72
      %p83 = scmp.eq.s32.totalorder %s21, 0
      %p84 = por %p82, %p83
      %p85 = scmp.ne.s32.totalorder %s71, %s72
      %p86 = scmp.eq.s32.totalorder %s22, 3
      %p87 = por %p85, %p86
      %p89 = scmp.ne.s32.totalorder %s72, %s88
      %p90 = scmp.eq.s32.totalorder %s22, 0
      %p91 = por %p89, %p90
      %s92 = ssub.s32 %s23, %s35
      %p93 = scmp.eq.s32.totalorder %s92, 0
      %s95 = sadd.s32 %s94, 1
      %s96 = scalar_select %p93, %s94, %s95
      %p99 = pneg %p93
      %p100 = scmp.eq.s32.totalorder %s16, 3
      %p101 = por %p99, %p100
      %p102 = scmp.ne.s32.totalorder %s94, %s97
      %p103 = scmp.eq.s32.totalorder %s16, 0
      %p104 = por %p102, %p103
      %p105 = scmp.ne.s32.totalorder %s94, %s97
      %p106 = scmp.eq.s32.totalorder %s21, 3
      %p107 = por %p105, %p106
      %p108 = scmp.ne.s32.totalorder %s97, %s98
      %p109 = scmp.eq.s32.totalorder %s21, 0
      %p110 = por %p108, %p109
      %p111 = scmp.ne.s32.totalorder %s97, %s98
      %p112 = scmp.eq.s32.totalorder %s22, 3
      %p113 = por %p111, %p112
      %p115 = scmp.ne.s32.totalorder %s98, %s114
      %p116 = scmp.eq.s32.totalorder %s22, 0
      %p117 = por %p115, %p116
      %s118 = ssub.s32 %s23, %s35
      %p119 = scmp.eq.s32.totalorder %s118, 0
      %s121 = sadd.s32 %s120, 1
      %s122 = scalar_select %p119, %s120, %s121
      %p125 = pneg %p119
      %p126 = scmp.eq.s32.totalorder %s16, 3
      %p127 = por %p125, %p126
      %p128 = scmp.ne.s32.totalorder %s120, %s123
      %p129 = scmp.eq.s32.totalorder %s16, 0
      %p130 = por %p128, %p129
      %p131 = scmp.ne.s32.totalorder %s120, %s123
      %p132 = scmp.eq.s32.totalorder %s21, 3
      %p133 = por %p131, %p132
      %p134 = scmp.ne.s32.totalorder %s123, %s124
      %p135 = scmp.eq.s32.totalorder %s21, 0
      %p136 = por %p134, %p135
      %p137 = scmp.ne.s32.totalorder %s123, %s124
      %p138 = scmp.eq.s32.totalorder %s22, 3
      %p139 = por %p137, %p138
      %p141 = scmp.ne.s32.totalorder %s124, %s140
      %p142 = scmp.eq.s32.totalorder %s22, 0
      %p143 = por %p141, %p142
      %s144 = ssub.s32 %s24, %s31
      %s145 = ssub.s32 %s23, %s35
      %s146 = sor.u32 %s144, %s145
      %p147 = scmp.eq.s32.totalorder %s146, 0
      %s149 = sadd.s32 %s148, 1
      %s150 = scalar_select %p147, %s148, %s149
      %p153 = pneg %p147
      %p154 = scmp.eq.s32.totalorder %s16, 3
      %p155 = por %p153, %p154
      %p156 = scmp.ne.s32.totalorder %s148, %s151
      %p157 = scmp.eq.s32.totalorder %s16, 0
      %p158 = por %p156, %p157
      %p159 = scmp.ne.s32.totalorder %s148, %s151
      %p160 = scmp.eq.s32.totalorder %s21, 3
      %p161 = por %p159, %p160
      %p162 = scmp.ne.s32.totalorder %s151, %s152
      %p163 = scmp.eq.s32.totalorder %s21, 0
      %p164 = por %p162, %p163
      %p165 = scmp.ne.s32.totalorder %s151, %s152
      %p166 = scmp.eq.s32.totalorder %s22, 3
      %p167 = por %p165, %p166
      %p169 = scmp.ne.s32.totalorder %s152, %s168
      %p170 = scmp.eq.s32.totalorder %s22, 0
      %p171 = por %p169, %p170
      %p172 = scmp.le.s32.totalorder 1, %s16
      %p173 = scmp.lt.s32.totalorder %s16, 5
      %p174 = pnand %p172, %p173
      %p175 = pneg %p174
      // Predicated region
      $region9: #{_cross_attention_4d.1} parent=5 // pred_check
        _
      $region10: #{_cross_attention_4d.1} parent=5 // pred_check_branch
        %177 = sbr.rel (%p174) target = $region12
      $region11: #{_cross_attention_4d.1} parent=5 // pred_region
        %s178 = ssub.s32 %s16, 1
      $region12: #{_cross_attention_4d.1} parent=5 // pred_fallthru
        _
      %p179 = scmp.lt.s32.totalorder %s16, 4
      // Predicated region
      $region13: #{_cross_attention_4d.1} parent=5 // pred_check
        %p180 = pneg %p179
      $region14: #{_cross_attention_4d.1} parent=5 // pred_check_branch
        %182 = sbr.rel (%p180) target = $region16
      $region15: #{_cross_attention_4d.1} parent=5 // pred_region
        // Predicated region
        $region17: #{_cross_attention_4d.1} parent=15 // pred_check
          %p183 = pneg %p50
        $region18: #{_cross_attention_4d.1} parent=15 // pred_check_branch
          %185 = sbr.rel (%p183) target = $region20
        $region19: #{_cross_attention_4d.1} parent=15 // pred_region
          %s186 = sand.u32 %s40, 1
          %s187 = sand.u32 %s40, 1
          %s188 = smul.addr %s187, 32
          %s189 = scalar_lea.vmem [#allocation2], %s188
          %s190 = smul.u32 2, %s24
          %s191 = smul.addr %s23, 2
          %s192 = smul.addr %s190, 8
          %s193 = sadd.s32 %s191, %s192
          %s194 = smul.addr %s193, 8
          %s195 = scalar_lea.vmem %s0, %s194
          // Predicated region
          $region21: #{_cross_attention_4d.1} parent=19 // pred_check
            _
          $region22: #{_cross_attention_4d.1} parent=19 // pred_check_branch
            %197 = sbr.rel (0) target = $region24
          $region23: #{_cross_attention_4d.1} parent=19 // pred_region
            // Predicated region
            $region25: #{_cross_attention_4d.1} parent=23 // pred_check
              _
            $region26: #{_cross_attention_4d.1} parent=23 // pred_check_branch
              %199 = sbr.rel (0) target = $region28
            $region27: #{_cross_attention_4d.1} parent=23 // pred_region
              // Predicated region
              $region40: #{_cross_attention_4d.1} parent=27 // pred_check
                _
              $region41: #{_cross_attention_4d.1} parent=27 // pred_check_branch
                %221 = sbr.rel (0) target = $region43
              $region42: #{_cross_attention_4d.1} parent=27 // pred_region
                loop: start=0, step=1, limit=1
                $region44: #{_cross_attention_4d.1} parent=42 // loop_pre_header
                  _
                $region45: #{_cross_attention_4d.1} parent=42 // loop_header
                  %s223 = sphi 0, %s227
                  %p224 = scmp.ge.s32.totalorder %s223, 1
                  %s228 = sphi %s195, %s195
                  %s229 = sphi %s189, %s189
                $region46: #{_cross_attention_4d.1} parent=42 // loop_header_branch
                  %226 = sbr.rel (%p224) target = $region50
                $region47: #{_cross_attention_4d.1} parent=42 // loop_body
                  %v230 = vld [vmem:[%s228] sm:$0xff]
                  %231 = vst [vmem:[%s229] sm:$0xff] %v230
                  %v232 = vld [vmem:[%s228 + $0x8] sm:$0xff]
                  %233 = vst [vmem:[%s229 + $0x8] sm:$0xff] %v232
                  %v234 = vld [vmem:[%s228 + $0x40] sm:$0xff]
                  %235 = vst [vmem:[%s229 + $0x10] sm:$0xff] %v234
                  %v236 = vld [vmem:[%s228 + $0x48] sm:$0xff]
                  %237 = vst [vmem:[%s229 + $0x18] sm:$0xff] %v236
                $region48: #{_cross_attention_4d.1} parent=42 // loop_footer
                  %s227 = sadd.s32 1, %s223
                $region49: #{_cross_attention_4d.1} parent=42 // loop_footer_branch
                  %222 = sbr.rel target = $region45
                $region50: #{_cross_attention_4d.1} parent=42 // loop_exit
                  _
              $region43: #{_cross_attention_4d.1} parent=27 // pred_fallthru
                _
              // Predicated region
              $region51: #{_cross_attention_4d.1} parent=27 // pred_check
                _
              $region52: #{_cross_attention_4d.1} parent=27 // pred_check_branch
                %239 = sbr.rel target = $region54
              $region53: #{_cross_attention_4d.1} parent=27 // pred_region
                _
              $region54: #{_cross_attention_4d.1} parent=27 // pred_fallthru
                _
            $region28: #{_cross_attention_4d.1} parent=23 // pred_fallthru
              _
            // Predicated region
            $region29: #{_cross_attention_4d.1} parent=23 // pred_check
              _
            $region30: #{_cross_attention_4d.1} parent=23 // pred_check_branch
              %201 = sbr.rel target = $region32
            $region31: #{_cross_attention_4d.1} parent=23 // pred_region
              %s203 = ssub.s32 256, 1
              loop: start=0, step=1, limit=1
              $region33: #{_cross_attention_4d.1} parent=31 // loop_pre_header
                _
              $region34: #{_cross_attention_4d.1} parent=31 // loop_header
                %s205 = sphi 0, %s209
                %p206 = scmp.ge.s32.totalorder %s205, 1
                %s210 = sphi %s195, %s195
                %s211 = sphi %s189, %s189
              $region35: #{_cross_attention_4d.1} parent=31 // loop_header_branch
                %208 = sbr.rel (%p206) target = $region39
              $region36: #{_cross_attention_4d.1} parent=31 // loop_body
                %v212 = vld [vmem:[%s210] sm:%s203]
                %213 = vst [vmem:[%s211] sm:%s203] %v212
                %v214 = vld [vmem:[%s210 + $0x8] sm:%s203]
                %215 = vst [vmem:[%s211 + $0x8] sm:%s203] %v214
                %v216 = vld [vmem:[%s210 + $0x40] sm:%s203]
                %217 = vst [vmem:[%s211 + $0x10] sm:%s203] %v216
                %v218 = vld [vmem:[%s210 + $0x48] sm:%s203]
                %219 = vst [vmem:[%s211 + $0x18] sm:%s203] %v218
              $region37: #{_cross_attention_4d.1} parent=31 // loop_footer
                %s209 = sadd.s32 1, %s205
              $region38: #{_cross_attention_4d.1} parent=31 // loop_footer_branch
                %204 = sbr.rel target = $region34
              $region39: #{_cross_attention_4d.1} parent=31 // loop_exit
                _
            $region32: #{_cross_attention_4d.1} parent=23 // pred_fallthru
              _
          $region24: #{_cross_attention_4d.1} parent=19 // pred_fallthru
            _
          %240 = vnop
        $region20: #{_cross_attention_4d.1} parent=15 // pred_fallthru
          _
        // Predicated region
        $region55: #{_cross_attention_4d.1} parent=15 // pred_check
          %p241 = pneg %p78
        $region56: #{_cross_attention_4d.1} parent=15 // pred_check_branch
          %243 = sbr.rel (%p241) target = $region58
        $region57: #{_cross_attention_4d.1} parent=15 // pred_region
          #allocation8 [shape = 'u32[6]{0}', space=smem, size = 0x18, scoped, tag = 'DMA stride descriptor']
          %s244 = sand.u32 %s68, 1
          %s245 = scalar_lea.sflag [#allocation4], %s244
          %s246 = sand.u32 %s68, 1
          %s247 = smul.addr %s246, 32
          %s248 = scalar_lea.vmem [#allocation3], %s247
          %s249 = smul.u32 2, %s24
          %s251 = ssub.s32 512, 512
          %252 = vsyncadd %s245, %s251
          %s253 = smul.addr %s23, 2
          %s254 = smul.addr %s249, 8
          %s255 = sadd.s32 %s253, %s254
          %s256 = smul.addr %s255, 128
          %s257 = scalar_lea.hbm %s1, %s256
          %s259 = sshll.u32 1, 14
          %s260 = sxor.u32 4294967295, %s259
          %s262 = sld [smem:[#allocation0]]
          %s263 = sadd.s32 2, %s262
          %s265 = sshll.u32 7, 26
          %s266 = sxor.u32 4294967295, %s265
          %s267 = sand.u32 0, %s266
          %s268 = sshll.u32 %s263, 26
          %s269 = sor.u32 %s267, %s268
          %s270 = sshll.u32 %s248, 4
          %s271 = int_to_ptr.vmem [resolvable:$true] %s270
          %277 = sst [smem:[#allocation8]] 1024
          %s278 = scalar_lea.smem [#allocation8], 1
          %279 = sst [smem:[%s278]] 256
          %s280 = scalar_lea.smem [#allocation8], 2
          %281 = sst [smem:[%s280]] 2
          %s282 = scalar_lea.smem [#allocation8], 3
          %283 = sst [smem:[%s282]] 128
          %s284 = scalar_lea.smem [#allocation8], 4
          %285 = sst [smem:[%s284]] 128
          %s286 = scalar_lea.smem [#allocation8], 5
          %287 = sst [smem:[%s286]] 8
          %289 = dma.general %s257, 512, %s271, %s245, 131072, [#allocation8], %s269, 0
        $region58: #{_cross_attention_4d.1} parent=15 // pred_fallthru
          _
        // Predicated region
        $region59: #{_cross_attention_4d.1} parent=15 // pred_check
          %p290 = pneg %p104
        $region60: #{_cross_attention_4d.1} parent=15 // pred_check_branch
          %292 = sbr.rel (%p290) target = $region62
        $region61: #{_cross_attention_4d.1} parent=15 // pred_region
          %p293 = scmp.lt.s32.totalorder %s23, 3
          %s294 = scalar_select %p293, %s23, 3
          %s295 = smul.addr %s294, 2
          %s296 = smul.addr %s295, 8
          %s297 = scalar_lea.vmem %s2, %s296
        $region62: #{_cross_attention_4d.1} parent=15 // pred_fallthru
          _
        // Predicated region
        $region63: #{_cross_attention_4d.1} parent=15 // pred_check
          %p298 = pneg %p130
        $region64: #{_cross_attention_4d.1} parent=15 // pred_check_branch
          %300 = sbr.rel (%p298) target = $region66
        $region65: #{_cross_attention_4d.1} parent=15 // pred_region
          %p301 = scmp.lt.s32.totalorder %s23, 3
          %s302 = scalar_select %p301, %s23, 3
          %s303 = smul.addr %s302, 2
          %s304 = smul.addr %s303, 8
          %s305 = scalar_lea.vmem %s3, %s304
        $region66: #{_cross_attention_4d.1} parent=15 // pred_fallthru
          _
      $region16: #{_cross_attention_4d.1} parent=5 // pred_fallthru
        _
      %p306 = scmp.le.s32.totalorder 1, %s16
      %p307 = scmp.lt.s32.totalorder %s16, 5
      %p308 = pnand %p306, %p307
      %p309 = pneg %p308
      // Predicated region
      $region67: #{_cross_attention_4d.1} parent=5 // pred_check
        _
      $region68: #{_cross_attention_4d.1} parent=5 // pred_check_branch
        %311 = sbr.rel (%p308) target = $region70
      $region69: #{_cross_attention_4d.1} parent=5 // pred_region
        %s312 = ssub.s32 %s16, 1
        %s313 = sand.u32 %s43, 1
        %s314 = sand.u32 %s43, 1
        %s315 = smul.addr %s314, 32
        %s316 = scalar_lea.vmem [#allocation2], %s315
        // Predicated region
        $region71: #{_cross_attention_4d.1} parent=69 // pred_check
          %p317 = pneg %p56
        $region72: #{_cross_attention_4d.1} parent=69 // pred_check_branch
          %319 = sbr.rel (%p317) target = $region74
        $region73: #{_cross_attention_4d.1} parent=69 // pred_region
          _
        $region74: #{_cross_attention_4d.1} parent=69 // pred_fallthru
          _
        %s320 = sand.u32 %s71, 1
        %s321 = scalar_lea.sflag [#allocation4], %s320
        %s322 = sand.u32 %s71, 1
        %s323 = smul.addr %s322, 32
        %s324 = scalar_lea.vmem [#allocation3], %s323
        // Predicated region
        $region75: #{_cross_attention_4d.1} parent=69 // pred_check
          %p325 = pneg %p84
        $region76: #{_cross_attention_4d.1} parent=69 // pred_check_branch
          %327 = sbr.rel (%p325) target = $region78
        $region77: #{_cross_attention_4d.1} parent=69 // pred_region
          %328 = dma.done %s321, 512
        $region78: #{_cross_attention_4d.1} parent=69 // pred_fallthru
          _
        %s329 = sand.u32 %s43, 1
        %s330 = sand.u32 %s43, 1
        %s331 = smul.addr %s330, 32
        %s332 = scalar_lea.vmem [#allocation2], %s331
        %p333 = pneg %p56
        %p334 = pneg %p53
        %s335 = sand.u32 %s71, 1
        %s336 = scalar_lea.sflag [#allocation4], %s335
        %s337 = sand.u32 %s71, 1
        %s338 = smul.addr %s337, 32
        %s339 = scalar_lea.vmem [#allocation3], %s338
        %p340 = pneg %p84
        %p341 = pneg %p81
        %p342 = scmp.lt.s32.totalorder %s25, 3
        %s343 = scalar_select %p342, %s25, 3
        %s344 = smul.addr %s343, 2
        %s345 = smul.addr %s344, 8
        %s346 = scalar_lea.vmem %s2, %s345
        %p347 = pneg %p110
        %p348 = pneg %p107
        %p349 = scmp.lt.s32.totalorder %s25, 3
        %s350 = scalar_select %p349, %s25, 3
        %s351 = smul.addr %s350, 2
        %s352 = smul.addr %s351, 8
        %s353 = scalar_lea.vmem %s3, %s352
        %p354 = pneg %p136
        %p355 = pneg %p133
        %p356 = pneg %p164
        %p357 = pneg %p161
        %s358 = sand.u32 %s151, 1
        %s359 = scalar_lea.sflag [#allocation5], %s358
        %s360 = sand.u32 %s151, 1
        %s361 = smul.addr %s360, 32
        %s362 = scalar_lea.vmem [#allocation6], %s361
        %s363 = smul.u32 2, %s26
        %s364 = smul.u32 2, %s26
        %p365 = scmp.lt.s32.totalorder %s25, 3
        %s366 = scalar_select %p365, %s25, 3
        %s367 = smul.addr %s366, 2
        %s368 = smul.addr %s367, 8
        %s369 = scalar_lea.vmem %s2, %s368
        %p370 = scmp.lt.s32.totalorder %s25, 3
        %s371 = scalar_select %p370, %s25, 3
        %s372 = smul.addr %s371, 2
        %s373 = smul.addr %s372, 8
        %s374 = scalar_lea.vmem %s3, %s373
        %s375 = smul.u32 2, %s26
        %v376 = vld [vmem:[%s316] sm:$0xff]
        %v377 = vld [vmem:[%s316 + $0x8] sm:$0xff]
        %v378 = vld [vmem:[%s316 + $0x10] sm:$0xff]
        %v379 = vld [vmem:[%s316 + $0x18] sm:$0xff]
        %v380 = vld [vmem:[%s324] sm:$0xff]
        %v381 = vld [vmem:[%s324 + $0x8] sm:$0xff]
        %v382 = vld [vmem:[%s324 + $0x10] sm:$0xff]
        %v383 = vld [vmem:[%s324 + $0x18] sm:$0xff]
        %v384 = vld [vmem:[%s369] sm:$0xff]
        %v385 = vld [vmem:[%s369 + $0x8] sm:$0xff]
        %v386 = vld [vmem:[%s374] sm:$0xff]
        %v387 = vld [vmem:[%s374 + $0x8] sm:$0xff]
        %vm388 = vcmask 130048
        %v390 = vsel %vm388, %v376, 0
        %v393 = vsel %vm388, %v377, 0
        %v396 = vsel %vm388, %v378, 0
        %v399 = vsel %vm388, %v379, 0
        %401 = vmatprep.subr.mxu0 0.0
        %402 = vmatpush1.msra.mxu0 0.0
        %403 = vmatprep.subr.mxu0 0.0
        %404 = vmatpush1.msra.mxu0 0.0
        %405 = vmatprep.subr.mxu0 0.0
        %406 = vmatpush1.msra.mxu0 0.0
        %407 = vmatprep.subr.mxu0 0.0
        %408 = vmatpush1.msra.mxu0 0.0
        %409 = vmatprep.subr.mxu0 0.0
        %410 = vmatpush1.msra.mxu0 0.0
        %411 = vmatprep.subr.mxu0 0.0
        %412 = vmatpush1.msra.mxu0 0.0
        %413 = vmatprep.subr.mxu0 0.0
        %414 = vmatpush1.msra.mxu0 0.0
        %415 = vmatprep.subr.mxu0 0.0
        %416 = vmatpush1.msra.mxu0 0.0
        %417 = vmatprep.subr.mxu0 0.0
        %418 = vmatpush1.msra.mxu0 0.0
        %419 = vmatprep.subr.mxu0 0.0
        %420 = vmatpush1.msra.mxu0 0.0
        %421 = vmatprep.subr.mxu0 0.0
        %422 = vmatpush1.msra.mxu0 0.0
        %423 = vmatprep.subr.mxu0 0.0
        %424 = vmatpush1.msra.mxu0 0.0
        %425 = vmatprep.subr.mxu0 0.0
        %426 = vmatpush1.msra.mxu0 0.0
        %427 = vmatprep.subr.mxu0 0.0
        %428 = vmatpush1.msra.mxu0 0.0
        %429 = vmatprep.subr.mxu0 0.0
        %v430 = vand.u32 %v385, 4294901760
        %431 = vmatpush1.msra.mxu0 %v430
        %432 = vmatprep.subr.mxu0 0.0
        %v433 = vand.u32 %v384, 4294901760
        %434 = vmatpush1.msra.mxu0 %v433
        %435 = vmatprep.subr.mxu0 0.0
        %436 = vmatpush2.msra.mxu0 0.0
        %437 = vmatprep.subr.mxu0 0.0
        %438 = vmatpush2.msra.mxu0 0.0
        %439 = vmatprep.subr.mxu0 0.0
        %440 = vmatpush2.msra.mxu0 0.0
        %441 = vmatprep.subr.mxu0 0.0
        %442 = vmatpush2.msra.mxu0 0.0
        %443 = vmatprep.subr.mxu0 0.0
        %444 = vmatpush2.msra.mxu0 0.0
        %445 = vmatprep.subr.mxu0 0.0
        %446 = vmatpush2.msra.mxu0 0.0
        %447 = vmatprep.subr.mxu0 0.0
        %448 = vmatpush2.msra.mxu0 0.0
        %449 = vmatprep.subr.mxu0 0.0
        %450 = vmatpush2.msra.mxu0 0.0
        %451 = vmatprep.subr.mxu0 0.0
        %452 = vmatpush2.msra.mxu0 0.0
        %453 = vmatprep.subr.mxu0 0.0
        %454 = vmatpush2.msra.mxu0 0.0
        %455 = vmatprep.subr.mxu0 0.0
        %456 = vmatpush2.msra.mxu0 0.0
        %457 = vmatprep.subr.mxu0 0.0
        %458 = vmatpush2.msra.mxu0 0.0
        %459 = vmatprep.subr.mxu0 0.0
        %460 = vmatpush2.msra.mxu0 0.0
        %461 = vmatprep.subr.mxu0 0.0
        %462 = vmatpush2.msra.mxu0 0.0
        %463 = vmatprep.subr.mxu0 0.0
        %464 = vmatpush2.msra.mxu0 0.0
        %465 = vmatprep.subr.mxu0 0.0
        %466 = vmatpush2.msra.mxu0 0.0
        %467 = vmatprep.mubr.f32.mxu0 0.0
        %v468 = vand.u32 %v390, 4294901760
        %v469 = vsub.f32 %v390, %v468
        %v470 = vand.u32 %v469, 4294901760
        %v471 = vsub.f32 %v469, %v470
        %v472 = vand.u32 %v471, 4294901760
        %473 = vmatmul.mubr.f32.gmra.mxu0 %v472
        %v474 = vpop.f32.mrf.mxu0
        %v475 = vadd.f32 0.0, %v474
        %v476 = vpop.f32.mrf.mxu0
        %477 = vmatprep.mubr.f32.mxu0 0.0
        %v478 = vand.u32 %v393, 4294901760
        %v479 = vsub.f32 %v393, %v478
        %v480 = vand.u32 %v479, 4294901760
        %v481 = vsub.f32 %v479, %v480
        %v482 = vand.u32 %v481, 4294901760
        %483 = vmatmul.mubr.f32.gmra.mxu0 %v482
        %v484 = vpop.f32.mrf.mxu0
        %v485 = vadd.f32 0.0, %v484
        %v486 = vpop.f32.mrf.mxu0
        %487 = vmatprep.mubr.f32.mxu0 0.0
        %v488 = vand.u32 %v396, 4294901760
        %v489 = vsub.f32 %v396, %v488
        %v490 = vand.u32 %v489, 4294901760
        %v491 = vsub.f32 %v489, %v490
        %v492 = vand.u32 %v491, 4294901760
        %493 = vmatmul.mubr.f32.gmra.mxu0 %v492
        %v494 = vpop.f32.mrf.mxu0
        %v495 = vadd.f32 0.0, %v494
        %v496 = vpop.f32.mrf.mxu0
        %497 = vmatprep.mubr.f32.mxu0 0.0
        %v498 = vand.u32 %v399, 4294901760
        %v499 = vsub.f32 %v399, %v498
        %v500 = vand.u32 %v499, 4294901760
        %v501 = vsub.f32 %v499, %v500
        %v502 = vand.u32 %v501, 4294901760
        %503 = vmatmul.mubr.f32.gmra.mxu0 %v502
        %v504 = vpop.f32.mrf.mxu0
        %v505 = vadd.f32 0.0, %v504
        %v506 = vpop.f32.mrf.mxu0
        %507 = vdwg.mxu0
        %508 = vmatprep.subr.mxu0 0.0
        %509 = vmatpush1.msra.mxu0 0.0
        %510 = vmatprep.subr.mxu0 0.0
        %511 = vmatpush1.msra.mxu0 0.0
        %512 = vmatprep.subr.mxu0 0.0
        %513 = vmatpush1.msra.mxu0 0.0
        %514 = vmatprep.subr.mxu0 0.0
        %515 = vmatpush1.msra.mxu0 0.0
        %516 = vmatprep.subr.mxu0 0.0
        %517 = vmatpush1.msra.mxu0 0.0
        %518 = vmatprep.subr.mxu0 0.0
        %519 = vmatpush1.msra.mxu0 0.0
        %520 = vmatprep.subr.mxu0 0.0
        %521 = vmatpush1.msra.mxu0 0.0
        %522 = vmatprep.subr.mxu0 0.0
        %523 = vmatpush1.msra.mxu0 0.0
        %524 = vmatprep.subr.mxu0 0.0
        %525 = vmatpush1.msra.mxu0 0.0
        %526 = vmatprep.subr.mxu0 0.0
        %527 = vmatpush1.msra.mxu0 0.0
        %528 = vmatprep.subr.mxu0 0.0
        %529 = vmatpush1.msra.mxu0 0.0
        %530 = vmatprep.subr.mxu0 0.0
        %531 = vmatpush1.msra.mxu0 0.0
        %532 = vmatprep.subr.mxu0 0.0
        %533 = vmatpush1.msra.mxu0 0.0
        %534 = vmatprep.subr.mxu0 0.0
        %535 = vmatpush1.msra.mxu0 0.0
        %536 = vmatprep.subr.mxu0 0.0
        %v537 = vand.u32 %v385, 4294901760
        %v538 = vsub.f32 %v385, %v537
        %v539 = vand.u32 %v538, 4294901760
        %v540 = vsub.f32 %v538, %v539
        %v541 = vand.u32 %v540, 4294901760
        %542 = vmatpush1.msra.mxu0 %v541
        %543 = vmatprep.subr.mxu0 0.0
        %v544 = vand.u32 %v384, 4294901760
        %v545 = vsub.f32 %v384, %v544
        %v546 = vand.u32 %v545, 4294901760
        %v547 = vsub.f32 %v545, %v546
        %v548 = vand.u32 %v547, 4294901760
        %549 = vmatpush1.msra.mxu0 %v548
        %550 = vmatprep.subr.mxu0 0.0
        %551 = vmatpush2.msra.mxu0 0.0
        %552 = vmatprep.subr.mxu0 0.0
        %553 = vmatpush2.msra.mxu0 0.0
        %554 = vmatprep.subr.mxu0 0.0
        %555 = vmatpush2.msra.mxu0 0.0
        %556 = vmatprep.subr.mxu0 0.0
        %557 = vmatpush2.msra.mxu0 0.0
        %558 = vmatprep.subr.mxu0 0.0
        %559 = vmatpush2.msra.mxu0 0.0
        %560 = vmatprep.subr.mxu0 0.0
        %561 = vmatpush2.msra.mxu0 0.0
        %562 = vmatprep.subr.mxu0 0.0
        %563 = vmatpush2.msra.mxu0 0.0
        %564 = vmatprep.subr.mxu0 0.0
        %565 = vmatpush2.msra.mxu0 0.0
        %566 = vmatprep.subr.mxu0 0.0
        %567 = vmatpush2.msra.mxu0 0.0
        %568 = vmatprep.subr.mxu0 0.0
        %569 = vmatpush2.msra.mxu0 0.0
        %570 = vmatprep.subr.mxu0 0.0
        %571 = vmatpush2.msra.mxu0 0.0
        %572 = vmatprep.subr.mxu0 0.0
        %573 = vmatpush2.msra.mxu0 0.0
        %574 = vmatprep.subr.mxu0 0.0
        %575 = vmatpush2.msra.mxu0 0.0
        %576 = vmatprep.subr.mxu0 0.0
        %577 = vmatpush2.msra.mxu0 0.0
        %578 = vmatprep.subr.mxu0 0.0
        %579 = vmatpush2.msra.mxu0 0.0
        %580 = vmatprep.subr.mxu0 0.0
        %581 = vmatpush2.msra.mxu0 0.0
        %582 = vmatprep.mubr.f32.mxu0 0.0
        %v583 = vand.u32 %v390, 4294901760
        %584 = vmatmul.mubr.f32.gmra.mxu0 %v583
        %v585 = vpop.f32.mrf.mxu0
        %v586 = vadd.f32 %v475, %v585
        %v587 = vpop.f32.mrf.mxu0
        %588 = vmatprep.mubr.f32.mxu0 0.0
        %v589 = vand.u32 %v393, 4294901760
        %590 = vmatmul.mubr.f32.gmra.mxu0 %v589
        %v591 = vpop.f32.mrf.mxu0
        %v592 = vadd.f32 %v485, %v591
        %v593 = vpop.f32.mrf.mxu0
        %594 = vmatprep.mubr.f32.mxu0 0.0
        %v595 = vand.u32 %v396, 4294901760
        %596 = vmatmul.mubr.f32.gmra.mxu0 %v595
        %v597 = vpop.f32.mrf.mxu0
        %v598 = vadd.f32 %v495, %v597
        %v599 = vpop.f32.mrf.mxu0
        %600 = vmatprep.mubr.f32.mxu0 0.0
        %v601 = vand.u32 %v399, 4294901760
        %602 = vmatmul.mubr.f32.gmra.mxu0 %v601
        %v603 = vpop.f32.mrf.mxu0
        %v604 = vadd.f32 %v505, %v603
        %v605 = vpop.f32.mrf.mxu0
        %606 = vdwg.mxu0
        %607 = vmatprep.subr.mxu0 0.0
        %608 = vmatpush1.msra.mxu0 0.0
        %609 = vmatprep.subr.mxu0 0.0
        %610 = vmatpush1.msra.mxu0 0.0
        %611 = vmatprep.subr.mxu0 0.0
        %612 = vmatpush1.msra.mxu0 0.0
        %613 = vmatprep.subr.mxu0 0.0
        %614 = vmatpush1.msra.mxu0 0.0
        %615 = vmatprep.subr.mxu0 0.0
        %616 = vmatpush1.msra.mxu0 0.0
        %617 = vmatprep.subr.mxu0 0.0
        %618 = vmatpush1.msra.mxu0 0.0
        %619 = vmatprep.subr.mxu0 0.0
        %620 = vmatpush1.msra.mxu0 0.0
        %621 = vmatprep.subr.mxu0 0.0
        %622 = vmatpush1.msra.mxu0 0.0
        %623 = vmatprep.subr.mxu0 0.0
        %624 = vmatpush1.msra.mxu0 0.0
        %625 = vmatprep.subr.mxu0 0.0
        %626 = vmatpush1.msra.mxu0 0.0
        %627 = vmatprep.subr.mxu0 0.0
        %628 = vmatpush1.msra.mxu0 0.0
        %629 = vmatprep.subr.mxu0 0.0
        %630 = vmatpush1.msra.mxu0 0.0
        %631 = vmatprep.subr.mxu0 0.0
        %632 = vmatpush1.msra.mxu0 0.0
        %633 = vmatprep.subr.mxu0 0.0
        %634 = vmatpush1.msra.mxu0 0.0
        %635 = vmatprep.subr.mxu0 0.0
        %v636 = vand.u32 %v385, 4294901760
        %v637 = vsub.f32 %v385, %v636
        %638 = vmatpush1.msra.mxu0 %v637
        %639 = vmatprep.subr.mxu0 0.0
        %v640 = vand.u32 %v384, 4294901760
        %v641 = vsub.f32 %v384, %v640
        %642 = vmatpush1.msra.mxu0 %v641
        %643 = vmatprep.subr.mxu0 0.0
        %644 = vmatpush2.msra.mxu0 0.0
        %645 = vmatprep.subr.mxu0 0.0
        %646 = vmatpush2.msra.mxu0 0.0
        %647 = vmatprep.subr.mxu0 0.0
        %648 = vmatpush2.msra.mxu0 0.0
        %649 = vmatprep.subr.mxu0 0.0
        %650 = vmatpush2.msra.mxu0 0.0
        %651 = vmatprep.subr.mxu0 0.0
        %652 = vmatpush2.msra.mxu0 0.0
        %653 = vmatprep.subr.mxu0 0.0
        %654 = vmatpush2.msra.mxu0 0.0
        %655 = vmatprep.subr.mxu0 0.0
        %656 = vmatpush2.msra.mxu0 0.0
        %657 = vmatprep.subr.mxu0 0.0
        %658 = vmatpush2.msra.mxu0 0.0
        %659 = vmatprep.subr.mxu0 0.0
        %660 = vmatpush2.msra.mxu0 0.0
        %661 = vmatprep.subr.mxu0 0.0
        %662 = vmatpush2.msra.mxu0 0.0
        %663 = vmatprep.subr.mxu0 0.0
        %664 = vmatpush2.msra.mxu0 0.0
        %665 = vmatprep.subr.mxu0 0.0
        %666 = vmatpush2.msra.mxu0 0.0
        %667 = vmatprep.subr.mxu0 0.0
        %668 = vmatpush2.msra.mxu0 0.0
        %669 = vmatprep.subr.mxu0 0.0
        %670 = vmatpush2.msra.mxu0 0.0
        %671 = vmatprep.subr.mxu0 0.0
        %672 = vmatpush2.msra.mxu0 0.0
        %673 = vmatprep.subr.mxu0 0.0
        %674 = vmatpush2.msra.mxu0 0.0
        %675 = vmatprep.mubr.f32.mxu0 0.0
        %v676 = vand.u32 %v390, 4294901760
        %v677 = vsub.f32 %v390, %v676
        %678 = vmatmul.mubr.f32.gmra.mxu0 %v677
        %v679 = vpop.f32.mrf.mxu0
        %v680 = vadd.f32 %v586, %v679
        %v681 = vpop.f32.mrf.mxu0
        %682 = vmatprep.mubr.f32.mxu0 0.0
        %v683 = vand.u32 %v393, 4294901760
        %v684 = vsub.f32 %v393, %v683
        %685 = vmatmul.mubr.f32.gmra.mxu0 %v684
        %v686 = vpop.f32.mrf.mxu0
        %v687 = vadd.f32 %v592, %v686
        %v688 = vpop.f32.mrf.mxu0
        %689 = vmatprep.mubr.f32.mxu0 0.0
        %v690 = vand.u32 %v396, 4294901760
        %v691 = vsub.f32 %v396, %v690
        %692 = vmatmul.mubr.f32.gmra.mxu0 %v691
        %v693 = vpop.f32.mrf.mxu0
        %v694 = vadd.f32 %v598, %v693
        %v695 = vpop.f32.mrf.mxu0
        %696 = vmatprep.mubr.f32.mxu0 0.0
        %v697 = vand.u32 %v399, 4294901760
        %v698 = vsub.f32 %v399, %v697
        %699 = vmatmul.mubr.f32.gmra.mxu0 %v698
        %v700 = vpop.f32.mrf.mxu0
        %v701 = vadd.f32 %v604, %v700
        %v702 = vpop.f32.mrf.mxu0
        %703 = vdwg.mxu0
        %704 = vmatprep.subr.mxu0 0.0
        %705 = vmatpush1.msra.mxu0 0.0
        %706 = vmatprep.subr.mxu0 0.0
        %707 = vmatpush1.msra.mxu0 0.0
        %708 = vmatprep.subr.mxu0 0.0
        %709 = vmatpush1.msra.mxu0 0.0
        %710 = vmatprep.subr.mxu0 0.0
        %711 = vmatpush1.msra.mxu0 0.0
        %712 = vmatprep.subr.mxu0 0.0
        %713 = vmatpush1.msra.mxu0 0.0
        %714 = vmatprep.subr.mxu0 0.0
        %715 = vmatpush1.msra.mxu0 0.0
        %716 = vmatprep.subr.mxu0 0.0
        %717 = vmatpush1.msra.mxu0 0.0
        %718 = vmatprep.subr.mxu0 0.0
        %719 = vmatpush1.msra.mxu0 0.0
        %720 = vmatprep.subr.mxu0 0.0
        %721 = vmatpush1.msra.mxu0 0.0
        %722 = vmatprep.subr.mxu0 0.0
        %723 = vmatpush1.msra.mxu0 0.0
        %724 = vmatprep.subr.mxu0 0.0
        %725 = vmatpush1.msra.mxu0 0.0
        %726 = vmatprep.subr.mxu0 0.0
        %727 = vmatpush1.msra.mxu0 0.0
        %728 = vmatprep.subr.mxu0 0.0
        %729 = vmatpush1.msra.mxu0 0.0
        %730 = vmatprep.subr.mxu0 0.0
        %731 = vmatpush1.msra.mxu0 0.0
        %732 = vmatprep.subr.mxu0 0.0
        %v733 = vand.u32 %v385, 4294901760
        %734 = vmatpush1.msra.mxu0 %v733
        %735 = vmatprep.subr.mxu0 0.0
        %v736 = vand.u32 %v384, 4294901760
        %737 = vmatpush1.msra.mxu0 %v736
        %738 = vmatprep.subr.mxu0 0.0
        %739 = vmatpush2.msra.mxu0 0.0
        %740 = vmatprep.subr.mxu0 0.0
        %741 = vmatpush2.msra.mxu0 0.0
        %742 = vmatprep.subr.mxu0 0.0
        %743 = vmatpush2.msra.mxu0 0.0
        %744 = vmatprep.subr.mxu0 0.0
        %745 = vmatpush2.msra.mxu0 0.0
        %746 = vmatprep.subr.mxu0 0.0
        %747 = vmatpush2.msra.mxu0 0.0
        %748 = vmatprep.subr.mxu0 0.0
        %749 = vmatpush2.msra.mxu0 0.0
        %750 = vmatprep.subr.mxu0 0.0
        %751 = vmatpush2.msra.mxu0 0.0
        %752 = vmatprep.subr.mxu0 0.0
        %753 = vmatpush2.msra.mxu0 0.0
        %754 = vmatprep.subr.mxu0 0.0
        %755 = vmatpush2.msra.mxu0 0.0
        %756 = vmatprep.subr.mxu0 0.0
        %757 = vmatpush2.msra.mxu0 0.0
        %758 = vmatprep.subr.mxu0 0.0
        %759 = vmatpush2.msra.mxu0 0.0
        %760 = vmatprep.subr.mxu0 0.0
        %761 = vmatpush2.msra.mxu0 0.0
        %762 = vmatprep.subr.mxu0 0.0
        %763 = vmatpush2.msra.mxu0 0.0
        %764 = vmatprep.subr.mxu0 0.0
        %765 = vmatpush2.msra.mxu0 0.0
        %766 = vmatprep.subr.mxu0 0.0
        %767 = vmatpush2.msra.mxu0 0.0
        %768 = vmatprep.subr.mxu0 0.0
        %769 = vmatpush2.msra.mxu0 0.0
        %770 = vmatprep.mubr.f32.mxu0 0.0
        %v771 = vand.u32 %v390, 4294901760
        %v772 = vsub.f32 %v390, %v771
        %v773 = vand.u32 %v772, 4294901760
        %774 = vmatmul.mubr.f32.gmra.mxu0 %v773
        %v775 = vpop.f32.mrf.mxu0
        %v776 = vadd.f32 %v680, %v775
        %v777 = vpop.f32.mrf.mxu0
        %778 = vmatprep.mubr.f32.mxu0 0.0
        %v779 = vand.u32 %v393, 4294901760
        %v780 = vsub.f32 %v393, %v779
        %v781 = vand.u32 %v780, 4294901760
        %782 = vmatmul.mubr.f32.gmra.mxu0 %v781
        %v783 = vpop.f32.mrf.mxu0
        %v784 = vadd.f32 %v687, %v783
        %v785 = vpop.f32.mrf.mxu0
        %786 = vmatprep.mubr.f32.mxu0 0.0
        %v787 = vand.u32 %v396, 4294901760
        %v788 = vsub.f32 %v396, %v787
        %v789 = vand.u32 %v788, 4294901760
        %790 = vmatmul.mubr.f32.gmra.mxu0 %v789
        %v791 = vpop.f32.mrf.mxu0
        %v792 = vadd.f32 %v694, %v791
        %v793 = vpop.f32.mrf.mxu0
        %794 = vmatprep.mubr.f32.mxu0 0.0
        %v795 = vand.u32 %v399, 4294901760
        %v796 = vsub.f32 %v399, %v795
        %v797 = vand.u32 %v796, 4294901760
        %798 = vmatmul.mubr.f32.gmra.mxu0 %v797
        %v799 = vpop.f32.mrf.mxu0
        %v800 = vadd.f32 %v701, %v799
        %v801 = vpop.f32.mrf.mxu0
        %802 = vdwg.mxu0
        %803 = vmatprep.subr.mxu0 0.0
        %804 = vmatpush1.msra.mxu0 0.0
        %805 = vmatprep.subr.mxu0 0.0
        %806 = vmatpush1.msra.mxu0 0.0
        %807 = vmatprep.subr.mxu0 0.0
        %808 = vmatpush1.msra.mxu0 0.0
        %809 = vmatprep.subr.mxu0 0.0
        %810 = vmatpush1.msra.mxu0 0.0
        %811 = vmatprep.subr.mxu0 0.0
        %812 = vmatpush1.msra.mxu0 0.0
        %813 = vmatprep.subr.mxu0 0.0
        %814 = vmatpush1.msra.mxu0 0.0
        %815 = vmatprep.subr.mxu0 0.0
        %816 = vmatpush1.msra.mxu0 0.0
        %817 = vmatprep.subr.mxu0 0.0
        %818 = vmatpush1.msra.mxu0 0.0
        %819 = vmatprep.subr.mxu0 0.0
        %820 = vmatpush1.msra.mxu0 0.0
        %821 = vmatprep.subr.mxu0 0.0
        %822 = vmatpush1.msra.mxu0 0.0
        %823 = vmatprep.subr.mxu0 0.0
        %824 = vmatpush1.msra.mxu0 0.0
        %825 = vmatprep.subr.mxu0 0.0
        %826 = vmatpush1.msra.mxu0 0.0
        %827 = vmatprep.subr.mxu0 0.0
        %828 = vmatpush1.msra.mxu0 0.0
        %829 = vmatprep.subr.mxu0 0.0
        %830 = vmatpush1.msra.mxu0 0.0
        %831 = vmatprep.subr.mxu0 0.0
        %v832 = vand.u32 %v385, 4294901760
        %v833 = vsub.f32 %v385, %v832
        %v834 = vand.u32 %v833, 4294901760
        %835 = vmatpush1.msra.mxu0 %v834
        %836 = vmatprep.subr.mxu0 0.0
        %v837 = vand.u32 %v384, 4294901760
        %v838 = vsub.f32 %v384, %v837
        %v839 = vand.u32 %v838, 4294901760
        %840 = vmatpush1.msra.mxu0 %v839
        %841 = vmatprep.subr.mxu0 0.0
        %842 = vmatpush2.msra.mxu0 0.0
        %843 = vmatprep.subr.mxu0 0.0
        %844 = vmatpush2.msra.mxu0 0.0
        %845 = vmatprep.subr.mxu0 0.0
        %846 = vmatpush2.msra.mxu0 0.0
        %847 = vmatprep.subr.mxu0 0.0
        %848 = vmatpush2.msra.mxu0 0.0
        %849 = vmatprep.subr.mxu0 0.0
        %850 = vmatpush2.msra.mxu0 0.0
        %851 = vmatprep.subr.mxu0 0.0
        %852 = vmatpush2.msra.mxu0 0.0
        %853 = vmatprep.subr.mxu0 0.0
        %854 = vmatpush2.msra.mxu0 0.0
        %855 = vmatprep.subr.mxu0 0.0
        %856 = vmatpush2.msra.mxu0 0.0
        %857 = vmatprep.subr.mxu0 0.0
        %858 = vmatpush2.msra.mxu0 0.0
        %859 = vmatprep.subr.mxu0 0.0
        %860 = vmatpush2.msra.mxu0 0.0
        %861 = vmatprep.subr.mxu0 0.0
        %862 = vmatpush2.msra.mxu0 0.0
        %863 = vmatprep.subr.mxu0 0.0
        %864 = vmatpush2.msra.mxu0 0.0
        %865 = vmatprep.subr.mxu0 0.0
        %866 = vmatpush2.msra.mxu0 0.0
        %867 = vmatprep.subr.mxu0 0.0
        %868 = vmatpush2.msra.mxu0 0.0
        %869 = vmatprep.subr.mxu0 0.0
        %870 = vmatpush2.msra.mxu0 0.0
        %871 = vmatprep.subr.mxu0 0.0
        %872 = vmatpush2.msra.mxu0 0.0
        %873 = vmatprep.mubr.f32.mxu0 0.0
        %v874 = vand.u32 %v390, 4294901760
        %875 = vmatmul.mubr.f32.gmra.mxu0 %v874
        %v876 = vpop.f32.mrf.mxu0
        %v877 = vadd.f32 %v776, %v876
        %v878 = vpop.f32.mrf.mxu0
        %879 = vmatprep.mubr.f32.mxu0 0.0
        %v880 = vand.u32 %v393, 4294901760
        %881 = vmatmul.mubr.f32.gmra.mxu0 %v880
        %v882 = vpop.f32.mrf.mxu0
        %v883 = vadd.f32 %v784, %v882
        %v884 = vpop.f32.mrf.mxu0
        %885 = vmatprep.mubr.f32.mxu0 0.0
        %v886 = vand.u32 %v396, 4294901760
        %887 = vmatmul.mubr.f32.gmra.mxu0 %v886
        %v888 = vpop.f32.mrf.mxu0
        %v889 = vadd.f32 %v792, %v888
        %v890 = vpop.f32.mrf.mxu0
        %891 = vmatprep.mubr.f32.mxu0 0.0
        %v892 = vand.u32 %v399, 4294901760
        %893 = vmatmul.mubr.f32.gmra.mxu0 %v892
        %v894 = vpop.f32.mrf.mxu0
        %v895 = vadd.f32 %v800, %v894
        %v896 = vpop.f32.mrf.mxu0
        %897 = vdwg.mxu0
        %898 = vmatprep.subr.mxu0 0.0
        %899 = vmatpush1.msra.mxu0 0.0
        %900 = vmatprep.subr.mxu0 0.0
        %901 = vmatpush1.msra.mxu0 0.0
        %902 = vmatprep.subr.mxu0 0.0
        %903 = vmatpush1.msra.mxu0 0.0
        %904 = vmatprep.subr.mxu0 0.0
        %905 = vmatpush1.msra.mxu0 0.0
        %906 = vmatprep.subr.mxu0 0.0
        %907 = vmatpush1.msra.mxu0 0.0
        %908 = vmatprep.subr.mxu0 0.0
        %909 = vmatpush1.msra.mxu0 0.0
        %910 = vmatprep.subr.mxu0 0.0
        %911 = vmatpush1.msra.mxu0 0.0
        %912 = vmatprep.subr.mxu0 0.0
        %913 = vmatpush1.msra.mxu0 0.0
        %914 = vmatprep.subr.mxu0 0.0
        %915 = vmatpush1.msra.mxu0 0.0
        %916 = vmatprep.subr.mxu0 0.0
        %917 = vmatpush1.msra.mxu0 0.0
        %918 = vmatprep.subr.mxu0 0.0
        %919 = vmatpush1.msra.mxu0 0.0
        %920 = vmatprep.subr.mxu0 0.0
        %921 = vmatpush1.msra.mxu0 0.0
        %922 = vmatprep.subr.mxu0 0.0
        %923 = vmatpush1.msra.mxu0 0.0
        %924 = vmatprep.subr.mxu0 0.0
        %925 = vmatpush1.msra.mxu0 0.0
        %926 = vmatprep.subr.mxu0 0.0
        %v927 = vand.u32 %v385, 4294901760
        %928 = vmatpush1.msra.mxu0 %v927
        %929 = vmatprep.subr.mxu0 0.0
        %v930 = vand.u32 %v384, 4294901760
        %931 = vmatpush1.msra.mxu0 %v930
        %932 = vmatprep.subr.mxu0 0.0
        %933 = vmatpush2.msra.mxu0 0.0
        %934 = vmatprep.subr.mxu0 0.0
        %935 = vmatpush2.msra.mxu0 0.0
        %936 = vmatprep.subr.mxu0 0.0
        %937 = vmatpush2.msra.mxu0 0.0
        %938 = vmatprep.subr.mxu0 0.0
        %939 = vmatpush2.msra.mxu0 0.0
        %940 = vmatprep.subr.mxu0 0.0
        %941 = vmatpush2.msra.mxu0 0.0
        %942 = vmatprep.subr.mxu0 0.0
        %943 = vmatpush2.msra.mxu0 0.0
        %944 = vmatprep.subr.mxu0 0.0
        %945 = vmatpush2.msra.mxu0 0.0
        %946 = vmatprep.subr.mxu0 0.0
        %947 = vmatpush2.msra.mxu0 0.0
        %948 = vmatprep.subr.mxu0 0.0
        %949 = vmatpush2.msra.mxu0 0.0
        %950 = vmatprep.subr.mxu0 0.0
        %951 = vmatpush2.msra.mxu0 0.0
        %952 = vmatprep.subr.mxu0 0.0
        %953 = vmatpush2.msra.mxu0 0.0
        %954 = vmatprep.subr.mxu0 0.0
        %955 = vmatpush2.msra.mxu0 0.0
        %956 = vmatprep.subr.mxu0 0.0
        %957 = vmatpush2.msra.mxu0 0.0
        %958 = vmatprep.subr.mxu0 0.0
        %959 = vmatpush2.msra.mxu0 0.0
        %960 = vmatprep.subr.mxu0 0.0
        %961 = vmatpush2.msra.mxu0 0.0
        %962 = vmatprep.subr.mxu0 0.0
        %963 = vmatpush2.msra.mxu0 0.0
        %964 = vmatprep.mubr.f32.mxu0 0.0
        %v965 = vand.u32 %v390, 4294901760
        %966 = vmatmul.mubr.f32.gmra.mxu0 %v965
        %v967 = vpop.f32.mrf.mxu0
        %v968 = vadd.f32 %v877, %v967
        %v969 = vpop.f32.mrf.mxu0
        %970 = vmatprep.mubr.f32.mxu0 0.0
        %v971 = vand.u32 %v393, 4294901760
        %972 = vmatmul.mubr.f32.gmra.mxu0 %v971
        %v973 = vpop.f32.mrf.mxu0
        %v974 = vadd.f32 %v883, %v973
        %v975 = vpop.f32.mrf.mxu0
        %976 = vmatprep.mubr.f32.mxu0 0.0
        %v977 = vand.u32 %v396, 4294901760
        %978 = vmatmul.mubr.f32.gmra.mxu0 %v977
        %v979 = vpop.f32.mrf.mxu0
        %v980 = vadd.f32 %v889, %v979
        %v981 = vpop.f32.mrf.mxu0
        %982 = vmatprep.mubr.f32.mxu0 0.0
        %v983 = vand.u32 %v399, 4294901760
        %984 = vmatmul.mubr.f32.gmra.mxu0 %v983
        %v985 = vpop.f32.mrf.mxu0
        %v986 = vadd.f32 %v895, %v985
        %v987 = vpop.f32.mrf.mxu0
        %988 = vdwg.mxu0
        %v989 = vmul.f32 %v968, 0.5
        %v990 = vmul.f32 %v974, 0.5
        %v991 = vmul.f32 %v980, 0.5
        %v992 = vmul.f32 %v986, 0.5
        %v994 = vsel %vm388, %v380, 0
        %v997 = vsel %vm388, %v381, 0
        %v1000 = vsel %vm388, %v382, 0
        %v1003 = vsel %vm388, %v383, 0
        %1005 = vmatprep.subr.mxu0 0.0
        %1006 = vmatpush1.msra.mxu0 0.0
        %1007 = vmatprep.subr.mxu0 0.0
        %1008 = vmatpush1.msra.mxu0 0.0
        %1009 = vmatprep.subr.mxu0 0.0
        %1010 = vmatpush1.msra.mxu0 0.0
        %1011 = vmatprep.subr.mxu0 0.0
        %1012 = vmatpush1.msra.mxu0 0.0
        %1013 = vmatprep.subr.mxu0 0.0
        %1014 = vmatpush1.msra.mxu0 0.0
        %1015 = vmatprep.subr.mxu0 0.0
        %1016 = vmatpush1.msra.mxu0 0.0
        %1017 = vmatprep.subr.mxu0 0.0
        %1018 = vmatpush1.msra.mxu0 0.0
        %1019 = vmatprep.subr.mxu0 0.0
        %1020 = vmatpush1.msra.mxu0 0.0
        %1021 = vmatprep.subr.mxu0 0.0
        %1022 = vmatpush1.msra.mxu0 0.0
        %1023 = vmatprep.subr.mxu0 0.0
        %1024 = vmatpush1.msra.mxu0 0.0
        %1025 = vmatprep.subr.mxu0 0.0
        %1026 = vmatpush1.msra.mxu0 0.0
        %1027 = vmatprep.subr.mxu0 0.0
        %1028 = vmatpush1.msra.mxu0 0.0
        %1029 = vmatprep.subr.mxu0 0.0
        %1030 = vmatpush1.msra.mxu0 0.0
        %1031 = vmatprep.subr.mxu0 0.0
        %1032 = vmatpush1.msra.mxu0 0.0
        %1033 = vmatprep.subr.mxu0 0.0
        %v1034 = vand.u32 %v387, 4294901760
        %1035 = vmatpush1.msra.mxu0 %v1034
        %1036 = vmatprep.subr.mxu0 0.0
        %v1037 = vand.u32 %v386, 4294901760
        %1038 = vmatpush1.msra.mxu0 %v1037
        %1039 = vmatprep.subr.mxu0 0.0
        %1040 = vmatpush2.msra.mxu0 0.0
        %1041 = vmatprep.subr.mxu0 0.0
        %1042 = vmatpush2.msra.mxu0 0.0
        %1043 = vmatprep.subr.mxu0 0.0
        %1044 = vmatpush2.msra.mxu0 0.0
        %1045 = vmatprep.subr.mxu0 0.0
        %1046 = vmatpush2.msra.mxu0 0.0
        %1047 = vmatprep.subr.mxu0 0.0
        %1048 = vmatpush2.msra.mxu0 0.0
        %1049 = vmatprep.subr.mxu0 0.0
        %1050 = vmatpush2.msra.mxu0 0.0
        %1051 = vmatprep.subr.mxu0 0.0
        %1052 = vmatpush2.msra.mxu0 0.0
        %1053 = vmatprep.subr.mxu0 0.0
        %1054 = vmatpush2.msra.mxu0 0.0
        %1055 = vmatprep.subr.mxu0 0.0
        %1056 = vmatpush2.msra.mxu0 0.0
        %1057 = vmatprep.subr.mxu0 0.0
        %1058 = vmatpush2.msra.mxu0 0.0
        %1059 = vmatprep.subr.mxu0 0.0
        %1060 = vmatpush2.msra.mxu0 0.0
        %1061 = vmatprep.subr.mxu0 0.0
        %1062 = vmatpush2.msra.mxu0 0.0
        %1063 = vmatprep.subr.mxu0 0.0
        %1064 = vmatpush2.msra.mxu0 0.0
        %1065 = vmatprep.subr.mxu0 0.0
        %1066 = vmatpush2.msra.mxu0 0.0
        %1067 = vmatprep.subr.mxu0 0.0
        %1068 = vmatpush2.msra.mxu0 0.0
        %1069 = vmatprep.subr.mxu0 0.0
        %1070 = vmatpush2.msra.mxu0 0.0
        %1071 = vmatprep.mubr.f32.mxu0 0.0
        %v1072 = vand.u32 %v994, 4294901760
        %v1073 = vsub.f32 %v994, %v1072
        %v1074 = vand.u32 %v1073, 4294901760
        %v1075 = vsub.f32 %v1073, %v1074
        %v1076 = vand.u32 %v1075, 4294901760
        %1077 = vmatmul.mubr.f32.gmra.mxu0 %v1076
        %v1078 = vpop.f32.mrf.mxu0
        %v1079 = vadd.f32 0.0, %v1078
        %v1080 = vpop.f32.mrf.mxu0
        %1081 = vmatprep.mubr.f32.mxu0 0.0
        %v1082 = vand.u32 %v997, 4294901760
        %v1083 = vsub.f32 %v997, %v1082
        %v1084 = vand.u32 %v1083, 4294901760
        %v1085 = vsub.f32 %v1083, %v1084
        %v1086 = vand.u32 %v1085, 4294901760
        %1087 = vmatmul.mubr.f32.gmra.mxu0 %v1086
        %v1088 = vpop.f32.mrf.mxu0
        %v1089 = vadd.f32 0.0, %v1088
        %v1090 = vpop.f32.mrf.mxu0
        %1091 = vmatprep.mubr.f32.mxu0 0.0
        %v1092 = vand.u32 %v1000, 4294901760
        %v1093 = vsub.f32 %v1000, %v1092
        %v1094 = vand.u32 %v1093, 4294901760
        %v1095 = vsub.f32 %v1093, %v1094
        %v1096 = vand.u32 %v1095, 4294901760
        %1097 = vmatmul.mubr.f32.gmra.mxu0 %v1096
        %v1098 = vpop.f32.mrf.mxu0
        %v1099 = vadd.f32 0.0, %v1098
        %v1100 = vpop.f32.mrf.mxu0
        %1101 = vmatprep.mubr.f32.mxu0 0.0
        %v1102 = vand.u32 %v1003, 4294901760
        %v1103 = vsub.f32 %v1003, %v1102
        %v1104 = vand.u32 %v1103, 4294901760
        %v1105 = vsub.f32 %v1103, %v1104
        %v1106 = vand.u32 %v1105, 4294901760
        %1107 = vmatmul.mubr.f32.gmra.mxu0 %v1106
        %v1108 = vpop.f32.mrf.mxu0
        %v1109 = vadd.f32 0.0, %v1108
        %v1110 = vpop.f32.mrf.mxu0
        %1111 = vdwg.mxu0
        %1112 = vmatprep.subr.mxu0 0.0
        %1113 = vmatpush1.msra.mxu0 0.0
        %1114 = vmatprep.subr.mxu0 0.0
        %1115 = vmatpush1.msra.mxu0 0.0
        %1116 = vmatprep.subr.mxu0 0.0
        %1117 = vmatpush1.msra.mxu0 0.0
        %1118 = vmatprep.subr.mxu0 0.0
        %1119 = vmatpush1.msra.mxu0 0.0
        %1120 = vmatprep.subr.mxu0 0.0
        %1121 = vmatpush1.msra.mxu0 0.0
        %1122 = vmatprep.subr.mxu0 0.0
        %1123 = vmatpush1.msra.mxu0 0.0
        %1124 = vmatprep.subr.mxu0 0.0
        %1125 = vmatpush1.msra.mxu0 0.0
        %1126 = vmatprep.subr.mxu0 0.0
        %1127 = vmatpush1.msra.mxu0 0.0
        %1128 = vmatprep.subr.mxu0 0.0
        %1129 = vmatpush1.msra.mxu0 0.0
        %1130 = vmatprep.subr.mxu0 0.0
        %1131 = vmatpush1.msra.mxu0 0.0
        %1132 = vmatprep.subr.mxu0 0.0
        %1133 = vmatpush1.msra.mxu0 0.0
        %1134 = vmatprep.subr.mxu0 0.0
        %1135 = vmatpush1.msra.mxu0 0.0
        %1136 = vmatprep.subr.mxu0 0.0
        %1137 = vmatpush1.msra.mxu0 0.0
        %1138 = vmatprep.subr.mxu0 0.0
        %1139 = vmatpush1.msra.mxu0 0.0
        %1140 = vmatprep.subr.mxu0 0.0
        %v1141 = vand.u32 %v387, 4294901760
        %v1142 = vsub.f32 %v387, %v1141
        %v1143 = vand.u32 %v1142, 4294901760
        %v1144 = vsub.f32 %v1142, %v1143
        %v1145 = vand.u32 %v1144, 4294901760
        %1146 = vmatpush1.msra.mxu0 %v1145
        %1147 = vmatprep.subr.mxu0 0.0
        %v1148 = vand.u32 %v386, 4294901760
        %v1149 = vsub.f32 %v386, %v1148
        %v1150 = vand.u32 %v1149, 4294901760
        %v1151 = vsub.f32 %v1149, %v1150
        %v1152 = vand.u32 %v1151, 4294901760
        %1153 = vmatpush1.msra.mxu0 %v1152
        %1154 = vmatprep.subr.mxu0 0.0
        %1155 = vmatpush2.msra.mxu0 0.0
        %1156 = vmatprep.subr.mxu0 0.0
        %1157 = vmatpush2.msra.mxu0 0.0
        %1158 = vmatprep.subr.mxu0 0.0
        %1159 = vmatpush2.msra.mxu0 0.0
        %1160 = vmatprep.subr.mxu0 0.0
        %1161 = vmatpush2.msra.mxu0 0.0
        %1162 = vmatprep.subr.mxu0 0.0
        %1163 = vmatpush2.msra.mxu0 0.0
        %1164 = vmatprep.subr.mxu0 0.0
        %1165 = vmatpush2.msra.mxu0 0.0
        %1166 = vmatprep.subr.mxu0 0.0
        %1167 = vmatpush2.msra.mxu0 0.0
        %1168 = vmatprep.subr.mxu0 0.0
        %1169 = vmatpush2.msra.mxu0 0.0
        %1170 = vmatprep.subr.mxu0 0.0
        %1171 = vmatpush2.msra.mxu0 0.0
        %1172 = vmatprep.subr.mxu0 0.0
        %1173 = vmatpush2.msra.mxu0 0.0
        %1174 = vmatprep.subr.mxu0 0.0
        %1175 = vmatpush2.msra.mxu0 0.0
        %1176 = vmatprep.subr.mxu0 0.0
        %1177 = vmatpush2.msra.mxu0 0.0
        %1178 = vmatprep.subr.mxu0 0.0
        %1179 = vmatpush2.msra.mxu0 0.0
        %1180 = vmatprep.subr.mxu0 0.0
        %1181 = vmatpush2.msra.mxu0 0.0
        %1182 = vmatprep.subr.mxu0 0.0
        %1183 = vmatpush2.msra.mxu0 0.0
        %1184 = vmatprep.subr.mxu0 0.0
        %1185 = vmatpush2.msra.mxu0 0.0
        %1186 = vmatprep.mubr.f32.mxu0 0.0
        %v1187 = vand.u32 %v994, 4294901760
        %1188 = vmatmul.mubr.f32.gmra.mxu0 %v1187
        %v1189 = vpop.f32.mrf.mxu0
        %v1190 = vadd.f32 %v1079, %v1189
        %v1191 = vpop.f32.mrf.mxu0
        %1192 = vmatprep.mubr.f32.mxu0 0.0
        %v1193 = vand.u32 %v997, 4294901760
        %1194 = vmatmul.mubr.f32.gmra.mxu0 %v1193
        %v1195 = vpop.f32.mrf.mxu0
        %v1196 = vadd.f32 %v1089, %v1195
        %v1197 = vpop.f32.mrf.mxu0
        %1198 = vmatprep.mubr.f32.mxu0 0.0
        %v1199 = vand.u32 %v1000, 4294901760
        %1200 = vmatmul.mubr.f32.gmra.mxu0 %v1199
        %v1201 = vpop.f32.mrf.mxu0
        %v1202 = vadd.f32 %v1099, %v1201
        %v1203 = vpop.f32.mrf.mxu0
        %1204 = vmatprep.mubr.f32.mxu0 0.0
        %v1205 = vand.u32 %v1003, 4294901760
        %1206 = vmatmul.mubr.f32.gmra.mxu0 %v1205
        %v1207 = vpop.f32.mrf.mxu0
        %v1208 = vadd.f32 %v1109, %v1207
        %v1209 = vpop.f32.mrf.mxu0
        %1210 = vdwg.mxu0
        %1211 = vmatprep.subr.mxu0 0.0
        %1212 = vmatpush1.msra.mxu0 0.0
        %1213 = vmatprep.subr.mxu0 0.0
        %1214 = vmatpush1.msra.mxu0 0.0
        %1215 = vmatprep.subr.mxu0 0.0
        %1216 = vmatpush1.msra.mxu0 0.0
        %1217 = vmatprep.subr.mxu0 0.0
        %1218 = vmatpush1.msra.mxu0 0.0
        %1219 = vmatprep.subr.mxu0 0.0
        %1220 = vmatpush1.msra.mxu0 0.0
        %1221 = vmatprep.subr.mxu0 0.0
        %1222 = vmatpush1.msra.mxu0 0.0
        %1223 = vmatprep.subr.mxu0 0.0
        %1224 = vmatpush1.msra.mxu0 0.0
        %1225 = vmatprep.subr.mxu0 0.0
        %1226 = vmatpush1.msra.mxu0 0.0
        %1227 = vmatprep.subr.mxu0 0.0
        %1228 = vmatpush1.msra.mxu0 0.0
        %1229 = vmatprep.subr.mxu0 0.0
        %1230 = vmatpush1.msra.mxu0 0.0
        %1231 = vmatprep.subr.mxu0 0.0
        %1232 = vmatpush1.msra.mxu0 0.0
        %1233 = vmatprep.subr.mxu0 0.0
        %1234 = vmatpush1.msra.mxu0 0.0
        %1235 = vmatprep.subr.mxu0 0.0
        %1236 = vmatpush1.msra.mxu0 0.0
        %1237 = vmatprep.subr.mxu0 0.0
        %1238 = vmatpush1.msra.mxu0 0.0
        %1239 = vmatprep.subr.mxu0 0.0
        %v1240 = vand.u32 %v387, 4294901760
        %v1241 = vsub.f32 %v387, %v1240
        %1242 = vmatpush1.msra.mxu0 %v1241
        %1243 = vmatprep.subr.mxu0 0.0
        %v1244 = vand.u32 %v386, 4294901760
        %v1245 = vsub.f32 %v386, %v1244
        %1246 = vmatpush1.msra.mxu0 %v1245
        %1247 = vmatprep.subr.mxu0 0.0
        %1248 = vmatpush2.msra.mxu0 0.0
        %1249 = vmatprep.subr.mxu0 0.0
        %1250 = vmatpush2.msra.mxu0 0.0
        %1251 = vmatprep.subr.mxu0 0.0
        %1252 = vmatpush2.msra.mxu0 0.0
        %1253 = vmatprep.subr.mxu0 0.0
        %1254 = vmatpush2.msra.mxu0 0.0
        %1255 = vmatprep.subr.mxu0 0.0
        %1256 = vmatpush2.msra.mxu0 0.0
        %1257 = vmatprep.subr.mxu0 0.0
        %1258 = vmatpush2.msra.mxu0 0.0
        %1259 = vmatprep.subr.mxu0 0.0
        %1260 = vmatpush2.msra.mxu0 0.0
        %1261 = vmatprep.subr.mxu0 0.0
        %1262 = vmatpush2.msra.mxu0 0.0
        %1263 = vmatprep.subr.mxu0 0.0
        %1264 = vmatpush2.msra.mxu0 0.0
        %1265 = vmatprep.subr.mxu0 0.0
        %1266 = vmatpush2.msra.mxu0 0.0
        %1267 = vmatprep.subr.mxu0 0.0
        %1268 = vmatpush2.msra.mxu0 0.0
        %1269 = vmatprep.subr.mxu0 0.0
        %1270 = vmatpush2.msra.mxu0 0.0
        %1271 = vmatprep.subr.mxu0 0.0
        %1272 = vmatpush2.msra.mxu0 0.0
        %1273 = vmatprep.subr.mxu0 0.0
        %1274 = vmatpush2.msra.mxu0 0.0
        %1275 = vmatprep.subr.mxu0 0.0
        %1276 = vmatpush2.msra.mxu0 0.0
        %1277 = vmatprep.subr.mxu0 0.0
        %1278 = vmatpush2.msra.mxu0 0.0
        %1279 = vmatprep.mubr.f32.mxu0 0.0
        %v1280 = vand.u32 %v994, 4294901760
        %v1281 = vsub.f32 %v994, %v1280
        %1282 = vmatmul.mubr.f32.gmra.mxu0 %v1281
        %v1283 = vpop.f32.mrf.mxu0
        %v1284 = vadd.f32 %v1190, %v1283
        %v1285 = vpop.f32.mrf.mxu0
        %1286 = vmatprep.mubr.f32.mxu0 0.0
        %v1287 = vand.u32 %v997, 4294901760
        %v1288 = vsub.f32 %v997, %v1287
        %1289 = vmatmul.mubr.f32.gmra.mxu0 %v1288
        %v1290 = vpop.f32.mrf.mxu0
        %v1291 = vadd.f32 %v1196, %v1290
        %v1292 = vpop.f32.mrf.mxu0
        %1293 = vmatprep.mubr.f32.mxu0 0.0
        %v1294 = vand.u32 %v1000, 4294901760
        %v1295 = vsub.f32 %v1000, %v1294
        %1296 = vmatmul.mubr.f32.gmra.mxu0 %v1295
        %v1297 = vpop.f32.mrf.mxu0
        %v1298 = vadd.f32 %v1202, %v1297
        %v1299 = vpop.f32.mrf.mxu0
        %1300 = vmatprep.mubr.f32.mxu0 0.0
        %v1301 = vand.u32 %v1003, 4294901760
        %v1302 = vsub.f32 %v1003, %v1301
        %1303 = vmatmul.mubr.f32.gmra.mxu0 %v1302
        %v1304 = vpop.f32.mrf.mxu0
        %v1305 = vadd.f32 %v1208, %v1304
        %v1306 = vpop.f32.mrf.mxu0
        %1307 = vdwg.mxu0
        %1308 = vmatprep.subr.mxu0 0.0
        %1309 = vmatpush1.msra.mxu0 0.0
        %1310 = vmatprep.subr.mxu0 0.0
        %1311 = vmatpush1.msra.mxu0 0.0
        %1312 = vmatprep.subr.mxu0 0.0
        %1313 = vmatpush1.msra.mxu0 0.0
        %1314 = vmatprep.subr.mxu0 0.0
        %1315 = vmatpush1.msra.mxu0 0.0
        %1316 = vmatprep.subr.mxu0 0.0
        %1317 = vmatpush1.msra.mxu0 0.0
        %1318 = vmatprep.subr.mxu0 0.0
        %1319 = vmatpush1.msra.mxu0 0.0
        %1320 = vmatprep.subr.mxu0 0.0
        %1321 = vmatpush1.msra.mxu0 0.0
        %1322 = vmatprep.subr.mxu0 0.0
        %1323 = vmatpush1.msra.mxu0 0.0
        %1324 = vmatprep.subr.mxu0 0.0
        %1325 = vmatpush1.msra.mxu0 0.0
        %1326 = vmatprep.subr.mxu0 0.0
        %1327 = vmatpush1.msra.mxu0 0.0
        %1328 = vmatprep.subr.mxu0 0.0
        %1329 = vmatpush1.msra.mxu0 0.0
        %1330 = vmatprep.subr.mxu0 0.0
        %1331 = vmatpush1.msra.mxu0 0.0
        %1332 = vmatprep.subr.mxu0 0.0
        %1333 = vmatpush1.msra.mxu0 0.0
        %1334 = vmatprep.subr.mxu0 0.0
        %1335 = vmatpush1.msra.mxu0 0.0
        %1336 = vmatprep.subr.mxu0 0.0
        %v1337 = vand.u32 %v387, 4294901760
        %1338 = vmatpush1.msra.mxu0 %v1337
        %1339 = vmatprep.subr.mxu0 0.0
        %v1340 = vand.u32 %v386, 4294901760
        %1341 = vmatpush1.msra.mxu0 %v1340
        %1342 = vmatprep.subr.mxu0 0.0
        %1343 = vmatpush2.msra.mxu0 0.0
        %1344 = vmatprep.subr.mxu0 0.0
        %1345 = vmatpush2.msra.mxu0 0.0
        %1346 = vmatprep.subr.mxu0 0.0
        %1347 = vmatpush2.msra.mxu0 0.0
        %1348 = vmatprep.subr.mxu0 0.0
        %1349 = vmatpush2.msra.mxu0 0.0
        %1350 = vmatprep.subr.mxu0 0.0
        %1351 = vmatpush2.msra.mxu0 0.0
        %1352 = vmatprep.subr.mxu0 0.0
        %1353 = vmatpush2.msra.mxu0 0.0
        %1354 = vmatprep.subr.mxu0 0.0
        %1355 = vmatpush2.msra.mxu0 0.0
        %1356 = vmatprep.subr.mxu0 0.0
        %1357 = vmatpush2.msra.mxu0 0.0
        %1358 = vmatprep.subr.mxu0 0.0
        %1359 = vmatpush2.msra.mxu0 0.0
        %1360 = vmatprep.subr.mxu0 0.0
        %1361 = vmatpush2.msra.mxu0 0.0
        %1362 = vmatprep.subr.mxu0 0.0
        %1363 = vmatpush2.msra.mxu0 0.0
        %1364 = vmatprep.subr.mxu0 0.0
        %1365 = vmatpush2.msra.mxu0 0.0
        %1366 = vmatprep.subr.mxu0 0.0
        %1367 = vmatpush2.msra.mxu0 0.0
        %1368 = vmatprep.subr.mxu0 0.0
        %1369 = vmatpush2.msra.mxu0 0.0
        %1370 = vmatprep.subr.mxu0 0.0
        %1371 = vmatpush2.msra.mxu0 0.0
        %1372 = vmatprep.subr.mxu0 0.0
        %1373 = vmatpush2.msra.mxu0 0.0
        %1374 = vmatprep.mubr.f32.mxu0 0.0
        %v1375 = vand.u32 %v994, 4294901760
        %v1376 = vsub.f32 %v994, %v1375
        %v1377 = vand.u32 %v1376, 4294901760
        %1378 = vmatmul.mubr.f32.gmra.mxu0 %v1377
        %v1379 = vpop.f32.mrf.mxu0
        %v1380 = vadd.f32 %v1284, %v1379
        %v1381 = vpop.f32.mrf.mxu0
        %1382 = vmatprep.mubr.f32.mxu0 0.0
        %v1383 = vand.u32 %v997, 4294901760
        %v1384 = vsub.f32 %v997, %v1383
        %v1385 = vand.u32 %v1384, 4294901760
        %1386 = vmatmul.mubr.f32.gmra.mxu0 %v1385
        %v1387 = vpop.f32.mrf.mxu0
        %v1388 = vadd.f32 %v1291, %v1387
        %v1389 = vpop.f32.mrf.mxu0
        %1390 = vmatprep.mubr.f32.mxu0 0.0
        %v1391 = vand.u32 %v1000, 4294901760
        %v1392 = vsub.f32 %v1000, %v1391
        %v1393 = vand.u32 %v1392, 4294901760
        %1394 = vmatmul.mubr.f32.gmra.mxu0 %v1393
        %v1395 = vpop.f32.mrf.mxu0
        %v1396 = vadd.f32 %v1298, %v1395
        %v1397 = vpop.f32.mrf.mxu0
        %1398 = vmatprep.mubr.f32.mxu0 0.0
        %v1399 = vand.u32 %v1003, 4294901760
        %v1400 = vsub.f32 %v1003, %v1399
        %v1401 = vand.u32 %v1400, 4294901760
        %1402 = vmatmul.mubr.f32.gmra.mxu0 %v1401
        %v1403 = vpop.f32.mrf.mxu0
        %v1404 = vadd.f32 %v1305, %v1403
        %v1405 = vpop.f32.mrf.mxu0
        %1406 = vdwg.mxu0
        %1407 = vmatprep.subr.mxu0 0.0
        %1408 = vmatpush1.msra.mxu0 0.0
        %1409 = vmatprep.subr.mxu0 0.0
        %1410 = vmatpush1.msra.mxu0 0.0
        %1411 = vmatprep.subr.mxu0 0.0
        %1412 = vmatpush1.msra.mxu0 0.0
        %1413 = vmatprep.subr.mxu0 0.0
        %1414 = vmatpush1.msra.mxu0 0.0
        %1415 = vmatprep.subr.mxu0 0.0
        %1416 = vmatpush1.msra.mxu0 0.0
        %1417 = vmatprep.subr.mxu0 0.0
        %1418 = vmatpush1.msra.mxu0 0.0
        %1419 = vmatprep.subr.mxu0 0.0
        %1420 = vmatpush1.msra.mxu0 0.0
        %1421 = vmatprep.subr.mxu0 0.0
        %1422 = vmatpush1.msra.mxu0 0.0
        %1423 = vmatprep.subr.mxu0 0.0
        %1424 = vmatpush1.msra.mxu0 0.0
        %1425 = vmatprep.subr.mxu0 0.0
        %1426 = vmatpush1.msra.mxu0 0.0
        %1427 = vmatprep.subr.mxu0 0.0
        %1428 = vmatpush1.msra.mxu0 0.0
        %1429 = vmatprep.subr.mxu0 0.0
        %1430 = vmatpush1.msra.mxu0 0.0
        %1431 = vmatprep.subr.mxu0 0.0
        %1432 = vmatpush1.msra.mxu0 0.0
        %1433 = vmatprep.subr.mxu0 0.0
        %1434 = vmatpush1.msra.mxu0 0.0
        %1435 = vmatprep.subr.mxu0 0.0
        %v1436 = vand.u32 %v387, 4294901760
        %v1437 = vsub.f32 %v387, %v1436
        %v1438 = vand.u32 %v1437, 4294901760
        %1439 = vmatpush1.msra.mxu0 %v1438
        %1440 = vmatprep.subr.mxu0 0.0
        %v1441 = vand.u32 %v386, 4294901760
        %v1442 = vsub.f32 %v386, %v1441
        %v1443 = vand.u32 %v1442, 4294901760
        %1444 = vmatpush1.msra.mxu0 %v1443
        %1445 = vmatprep.subr.mxu0 0.0
        %1446 = vmatpush2.msra.mxu0 0.0
        %1447 = vmatprep.subr.mxu0 0.0
        %1448 = vmatpush2.msra.mxu0 0.0
        %1449 = vmatprep.subr.mxu0 0.0
        %1450 = vmatpush2.msra.mxu0 0.0
        %1451 = vmatprep.subr.mxu0 0.0
        %1452 = vmatpush2.msra.mxu0 0.0
        %1453 = vmatprep.subr.mxu0 0.0
        %1454 = vmatpush2.msra.mxu0 0.0
        %1455 = vmatprep.subr.mxu0 0.0
        %1456 = vmatpush2.msra.mxu0 0.0
        %1457 = vmatprep.subr.mxu0 0.0
        %1458 = vmatpush2.msra.mxu0 0.0
        %1459 = vmatprep.subr.mxu0 0.0
        %1460 = vmatpush2.msra.mxu0 0.0
        %1461 = vmatprep.subr.mxu0 0.0
        %1462 = vmatpush2.msra.mxu0 0.0
        %1463 = vmatprep.subr.mxu0 0.0
        %1464 = vmatpush2.msra.mxu0 0.0
        %1465 = vmatprep.subr.mxu0 0.0
        %1466 = vmatpush2.msra.mxu0 0.0
        %1467 = vmatprep.subr.mxu0 0.0
        %1468 = vmatpush2.msra.mxu0 0.0
        %1469 = vmatprep.subr.mxu0 0.0
        %1470 = vmatpush2.msra.mxu0 0.0
        %1471 = vmatprep.subr.mxu0 0.0
        %1472 = vmatpush2.msra.mxu0 0.0
        %1473 = vmatprep.subr.mxu0 0.0
        %1474 = vmatpush2.msra.mxu0 0.0
        %1475 = vmatprep.subr.mxu0 0.0
        %1476 = vmatpush2.msra.mxu0 0.0
        %1477 = vmatprep.mubr.f32.mxu0 0.0
        %v1478 = vand.u32 %v994, 4294901760
        %1479 = vmatmul.mubr.f32.gmra.mxu0 %v1478
        %v1480 = vpop.f32.mrf.mxu0
        %v1481 = vadd.f32 %v1380, %v1480
        %v1482 = vpop.f32.mrf.mxu0
        %1483 = vmatprep.mubr.f32.mxu0 0.0
        %v1484 = vand.u32 %v997, 4294901760
        %1485 = vmatmul.mubr.f32.gmra.mxu0 %v1484
        %v1486 = vpop.f32.mrf.mxu0
        %v1487 = vadd.f32 %v1388, %v1486
        %v1488 = vpop.f32.mrf.mxu0
        %1489 = vmatprep.mubr.f32.mxu0 0.0
        %v1490 = vand.u32 %v1000, 4294901760
        %1491 = vmatmul.mubr.f32.gmra.mxu0 %v1490
        %v1492 = vpop.f32.mrf.mxu0
        %v1493 = vadd.f32 %v1396, %v1492
        %v1494 = vpop.f32.mrf.mxu0
        %1495 = vmatprep.mubr.f32.mxu0 0.0
        %v1496 = vand.u32 %v1003, 4294901760
        %1497 = vmatmul.mubr.f32.gmra.mxu0 %v1496
        %v1498 = vpop.f32.mrf.mxu0
        %v1499 = vadd.f32 %v1404, %v1498
        %v1500 = vpop.f32.mrf.mxu0
        %1501 = vdwg.mxu0
        %1502 = vmatprep.subr.mxu0 0.0
        %1503 = vmatpush1.msra.mxu0 0.0
        %1504 = vmatprep.subr.mxu0 0.0
        %1505 = vmatpush1.msra.mxu0 0.0
        %1506 = vmatprep.subr.mxu0 0.0
        %1507 = vmatpush1.msra.mxu0 0.0
        %1508 = vmatprep.subr.mxu0 0.0
        %1509 = vmatpush1.msra.mxu0 0.0
        %1510 = vmatprep.subr.mxu0 0.0
        %1511 = vmatpush1.msra.mxu0 0.0
        %1512 = vmatprep.subr.mxu0 0.0
        %1513 = vmatpush1.msra.mxu0 0.0
        %1514 = vmatprep.subr.mxu0 0.0
        %1515 = vmatpush1.msra.mxu0 0.0
        %1516 = vmatprep.subr.mxu0 0.0
        %1517 = vmatpush1.msra.mxu0 0.0
        %1518 = vmatprep.subr.mxu0 0.0
        %1519 = vmatpush1.msra.mxu0 0.0
        %1520 = vmatprep.subr.mxu0 0.0
        %1521 = vmatpush1.msra.mxu0 0.0
        %1522 = vmatprep.subr.mxu0 0.0
        %1523 = vmatpush1.msra.mxu0 0.0
        %1524 = vmatprep.subr.mxu0 0.0
        %1525 = vmatpush1.msra.mxu0 0.0
        %1526 = vmatprep.subr.mxu0 0.0
        %1527 = vmatpush1.msra.mxu0 0.0
        %1528 = vmatprep.subr.mxu0 0.0
        %1529 = vmatpush1.msra.mxu0 0.0
        %1530 = vmatprep.subr.mxu0 0.0
        %v1531 = vand.u32 %v387, 4294901760
        %1532 = vmatpush1.msra.mxu0 %v1531
        %1533 = vmatprep.subr.mxu0 0.0
        %v1534 = vand.u32 %v386, 4294901760
        %1535 = vmatpush1.msra.mxu0 %v1534
        %1536 = vmatprep.subr.mxu0 0.0
        %1537 = vmatpush2.msra.mxu0 0.0
        %1538 = vmatprep.subr.mxu0 0.0
        %1539 = vmatpush2.msra.mxu0 0.0
        %1540 = vmatprep.subr.mxu0 0.0
        %1541 = vmatpush2.msra.mxu0 0.0
        %1542 = vmatprep.subr.mxu0 0.0
        %1543 = vmatpush2.msra.mxu0 0.0
        %1544 = vmatprep.subr.mxu0 0.0
        %1545 = vmatpush2.msra.mxu0 0.0
        %1546 = vmatprep.subr.mxu0 0.0
        %1547 = vmatpush2.msra.mxu0 0.0
        %1548 = vmatprep.subr.mxu0 0.0
        %1549 = vmatpush2.msra.mxu0 0.0
        %1550 = vmatprep.subr.mxu0 0.0
        %1551 = vmatpush2.msra.mxu0 0.0
        %1552 = vmatprep.subr.mxu0 0.0
        %1553 = vmatpush2.msra.mxu0 0.0
        %1554 = vmatprep.subr.mxu0 0.0
        %1555 = vmatpush2.msra.mxu0 0.0
        %1556 = vmatprep.subr.mxu0 0.0
        %1557 = vmatpush2.msra.mxu0 0.0
        %1558 = vmatprep.subr.mxu0 0.0
        %1559 = vmatpush2.msra.mxu0 0.0
        %1560 = vmatprep.subr.mxu0 0.0
        %1561 = vmatpush2.msra.mxu0 0.0
        %1562 = vmatprep.subr.mxu0 0.0
        %1563 = vmatpush2.msra.mxu0 0.0
        %1564 = vmatprep.subr.mxu0 0.0
        %1565 = vmatpush2.msra.mxu0 0.0
        %1566 = vmatprep.subr.mxu0 0.0
        %1567 = vmatpush2.msra.mxu0 0.0
        %1568 = vmatprep.mubr.f32.mxu0 0.0
        %v1569 = vand.u32 %v994, 4294901760
        %1570 = vmatmul.mubr.f32.gmra.mxu0 %v1569
        %v1571 = vpop.f32.mrf.mxu0
        %v1572 = vadd.f32 %v1481, %v1571
        %v1573 = vpop.f32.mrf.mxu0
        %1574 = vmatprep.mubr.f32.mxu0 0.0
        %v1575 = vand.u32 %v997, 4294901760
        %1576 = vmatmul.mubr.f32.gmra.mxu0 %v1575
        %v1577 = vpop.f32.mrf.mxu0
        %v1578 = vadd.f32 %v1487, %v1577
        %v1579 = vpop.f32.mrf.mxu0
        %1580 = vmatprep.mubr.f32.mxu0 0.0
        %v1581 = vand.u32 %v1000, 4294901760
        %1582 = vmatmul.mubr.f32.gmra.mxu0 %v1581
        %v1583 = vpop.f32.mrf.mxu0
        %v1584 = vadd.f32 %v1493, %v1583
        %v1585 = vpop.f32.mrf.mxu0
        %1586 = vmatprep.mubr.f32.mxu0 0.0
        %v1587 = vand.u32 %v1003, 4294901760
        %1588 = vmatmul.mubr.f32.gmra.mxu0 %v1587
        %v1589 = vpop.f32.mrf.mxu0
        %v1590 = vadd.f32 %v1499, %v1589
        %v1591 = vpop.f32.mrf.mxu0
        %1592 = vdwg.mxu0
        %v1594 = vsel %vm388, %v989, 0
        %v1597 = vsel %vm388, %v990, 0
        %1599 = vmatprep.subr.mxu0 0.0
        %1600 = vmatpush1.msra.mxu0 0.0
        %1601 = vmatprep.subr.mxu0 0.0
        %1602 = vmatpush1.msra.mxu0 0.0
        %1603 = vmatprep.subr.mxu0 0.0
        %1604 = vmatpush1.msra.mxu0 0.0
        %1605 = vmatprep.subr.mxu0 0.0
        %1606 = vmatpush1.msra.mxu0 0.0
        %1607 = vmatprep.subr.mxu0 0.0
        %1608 = vmatpush1.msra.mxu0 0.0
        %1609 = vmatprep.subr.mxu0 0.0
        %1610 = vmatpush1.msra.mxu0 0.0
        %1611 = vmatprep.subr.mxu0 0.0
        %1612 = vmatpush1.msra.mxu0 0.0
        %1613 = vmatprep.subr.mxu0 0.0
        %1614 = vmatpush1.msra.mxu0 0.0
        %1615 = vmatprep.subr.mxu0 0.0
        %1616 = vmatpush1.msra.mxu0 0.0
        %1617 = vmatprep.subr.mxu0 0.0
        %1618 = vmatpush1.msra.mxu0 0.0
        %1619 = vmatprep.subr.mxu0 0.0
        %1620 = vmatpush1.msra.mxu0 0.0
        %1621 = vmatprep.subr.mxu0 0.0
        %1622 = vmatpush1.msra.mxu0 0.0
        %1623 = vmatprep.subr.mxu0 0.0
        %1624 = vmatpush1.msra.mxu0 0.0
        %1625 = vmatprep.subr.mxu0 0.0
        %1626 = vmatpush1.msra.mxu0 0.0
        %1627 = vmatprep.subr.mxu0 0.0
        %v1628 = vand.u32 %v1578, 4294901760
        %1629 = vmatpush1.msra.mxu0 %v1628
        %1630 = vmatprep.subr.mxu0 0.0
        %v1631 = vand.u32 %v1572, 4294901760
        %1632 = vmatpush1.msra.mxu0 %v1631
        %1633 = vmatprep.subr.mxu0 0.0
        %1634 = vmatpush2.msra.mxu0 0.0
        %1635 = vmatprep.subr.mxu0 0.0
        %1636 = vmatpush2.msra.mxu0 0.0
        %1637 = vmatprep.subr.mxu0 0.0
        %1638 = vmatpush2.msra.mxu0 0.0
        %1639 = vmatprep.subr.mxu0 0.0
        %1640 = vmatpush2.msra.mxu0 0.0
        %1641 = vmatprep.subr.mxu0 0.0
        %1642 = vmatpush2.msra.mxu0 0.0
        %1643 = vmatprep.subr.mxu0 0.0
        %1644 = vmatpush2.msra.mxu0 0.0
        %1645 = vmatprep.subr.mxu0 0.0
        %1646 = vmatpush2.msra.mxu0 0.0
        %1647 = vmatprep.subr.mxu0 0.0
        %1648 = vmatpush2.msra.mxu0 0.0
        %1649 = vmatprep.subr.mxu0 0.0
        %1650 = vmatpush2.msra.mxu0 0.0
        %1651 = vmatprep.subr.mxu0 0.0
        %1652 = vmatpush2.msra.mxu0 0.0
        %1653 = vmatprep.subr.mxu0 0.0
        %1654 = vmatpush2.msra.mxu0 0.0
        %1655 = vmatprep.subr.mxu0 0.0
        %1656 = vmatpush2.msra.mxu0 0.0
        %1657 = vmatprep.subr.mxu0 0.0
        %1658 = vmatpush2.msra.mxu0 0.0
        %1659 = vmatprep.subr.mxu0 0.0
        %1660 = vmatpush2.msra.mxu0 0.0
        %1661 = vmatprep.subr.mxu0 0.0
        %1662 = vmatpush2.msra.mxu0 0.0
        %1663 = vmatprep.subr.mxu0 0.0
        %1664 = vmatpush2.msra.mxu0 0.0
        %1665 = vmatprep.mubr.f32.mxu0 0.0
        %v1666 = vand.u32 %v1594, 4294901760
        %v1667 = vsub.f32 %v1594, %v1666
        %v1668 = vand.u32 %v1667, 4294901760
        %v1669 = vsub.f32 %v1667, %v1668
        %v1670 = vand.u32 %v1669, 4294901760
        %1671 = vmatmul.mubr.f32.gmra.mxu0 %v1670
        %v1672 = vpop.f32.mrf.mxu0
        %v1673 = vadd.f32 0.0, %v1672
        %v1674 = vpop.f32.mrf.mxu0
        %1675 = vmatprep.mubr.f32.mxu0 0.0
        %v1676 = vand.u32 %v1597, 4294901760
        %v1677 = vsub.f32 %v1597, %v1676
        %v1678 = vand.u32 %v1677, 4294901760
        %v1679 = vsub.f32 %v1677, %v1678
        %v1680 = vand.u32 %v1679, 4294901760
        %1681 = vmatmul.mubr.f32.gmra.mxu0 %v1680
        %v1682 = vpop.f32.mrf.mxu0
        %v1683 = vadd.f32 0.0, %v1682
        %v1684 = vpop.f32.mrf.mxu0
        %1685 = vdwg.mxu0
        %1686 = vmatprep.subr.mxu0 0.0
        %1687 = vmatpush1.msra.mxu0 0.0
        %1688 = vmatprep.subr.mxu0 0.0
        %1689 = vmatpush1.msra.mxu0 0.0
        %1690 = vmatprep.subr.mxu0 0.0
        %1691 = vmatpush1.msra.mxu0 0.0
        %1692 = vmatprep.subr.mxu0 0.0
        %1693 = vmatpush1.msra.mxu0 0.0
        %1694 = vmatprep.subr.mxu0 0.0
        %1695 = vmatpush1.msra.mxu0 0.0
        %1696 = vmatprep.subr.mxu0 0.0
        %1697 = vmatpush1.msra.mxu0 0.0
        %1698 = vmatprep.subr.mxu0 0.0
        %1699 = vmatpush1.msra.mxu0 0.0
        %1700 = vmatprep.subr.mxu0 0.0
        %1701 = vmatpush1.msra.mxu0 0.0
        %1702 = vmatprep.subr.mxu0 0.0
        %1703 = vmatpush1.msra.mxu0 0.0
        %1704 = vmatprep.subr.mxu0 0.0
        %1705 = vmatpush1.msra.mxu0 0.0
        %1706 = vmatprep.subr.mxu0 0.0
        %1707 = vmatpush1.msra.mxu0 0.0
        %1708 = vmatprep.subr.mxu0 0.0
        %1709 = vmatpush1.msra.mxu0 0.0
        %1710 = vmatprep.subr.mxu0 0.0
        %1711 = vmatpush1.msra.mxu0 0.0
        %1712 = vmatprep.subr.mxu0 0.0
        %1713 = vmatpush1.msra.mxu0 0.0
        %1714 = vmatprep.subr.mxu0 0.0
        %v1715 = vand.u32 %v1578, 4294901760
        %v1716 = vsub.f32 %v1578, %v1715
        %v1717 = vand.u32 %v1716, 4294901760
        %v1718 = vsub.f32 %v1716, %v1717
        %v1719 = vand.u32 %v1718, 4294901760
        %1720 = vmatpush1.msra.mxu0 %v1719
        %1721 = vmatprep.subr.mxu0 0.0
        %v1722 = vand.u32 %v1572, 4294901760
        %v1723 = vsub.f32 %v1572, %v1722
        %v1724 = vand.u32 %v1723, 4294901760
        %v1725 = vsub.f32 %v1723, %v1724
        %v1726 = vand.u32 %v1725, 4294901760
        %1727 = vmatpush1.msra.mxu0 %v1726
        %1728 = vmatprep.subr.mxu0 0.0
        %1729 = vmatpush2.msra.mxu0 0.0
        %1730 = vmatprep.subr.mxu0 0.0
        %1731 = vmatpush2.msra.mxu0 0.0
        %1732 = vmatprep.subr.mxu0 0.0
        %1733 = vmatpush2.msra.mxu0 0.0
        %1734 = vmatprep.subr.mxu0 0.0
        %1735 = vmatpush2.msra.mxu0 0.0
        %1736 = vmatprep.subr.mxu0 0.0
        %1737 = vmatpush2.msra.mxu0 0.0
        %1738 = vmatprep.subr.mxu0 0.0
        %1739 = vmatpush2.msra.mxu0 0.0
        %1740 = vmatprep.subr.mxu0 0.0
        %1741 = vmatpush2.msra.mxu0 0.0
        %1742 = vmatprep.subr.mxu0 0.0
        %1743 = vmatpush2.msra.mxu0 0.0
        %1744 = vmatprep.subr.mxu0 0.0
        %1745 = vmatpush2.msra.mxu0 0.0
        %1746 = vmatprep.subr.mxu0 0.0
        %1747 = vmatpush2.msra.mxu0 0.0
        %1748 = vmatprep.subr.mxu0 0.0
        %1749 = vmatpush2.msra.mxu0 0.0
        %1750 = vmatprep.subr.mxu0 0.0
        %1751 = vmatpush2.msra.mxu0 0.0
        %1752 = vmatprep.subr.mxu0 0.0
        %1753 = vmatpush2.msra.mxu0 0.0
        %1754 = vmatprep.subr.mxu0 0.0
        %1755 = vmatpush2.msra.mxu0 0.0
        %1756 = vmatprep.subr.mxu0 0.0
        %1757 = vmatpush2.msra.mxu0 0.0
        %1758 = vmatprep.subr.mxu0 0.0
        %1759 = vmatpush2.msra.mxu0 0.0
        %1760 = vmatprep.mubr.f32.mxu0 0.0
        %v1761 = vand.u32 %v1594, 4294901760
        %1762 = vmatmul.mubr.f32.gmra.mxu0 %v1761
        %v1763 = vpop.f32.mrf.mxu0
        %v1764 = vadd.f32 %v1673, %v1763
        %v1765 = vpop.f32.mrf.mxu0
        %1766 = vmatprep.mubr.f32.mxu0 0.0
        %v1767 = vand.u32 %v1597, 4294901760
        %1768 = vmatmul.mubr.f32.gmra.mxu0 %v1767
        %v1769 = vpop.f32.mrf.mxu0
        %v1770 = vadd.f32 %v1683, %v1769
        %v1771 = vpop.f32.mrf.mxu0
        %1772 = vdwg.mxu0
        %1773 = vmatprep.subr.mxu0 0.0
        %1774 = vmatpush1.msra.mxu0 0.0
        %1775 = vmatprep.subr.mxu0 0.0
        %1776 = vmatpush1.msra.mxu0 0.0
        %1777 = vmatprep.subr.mxu0 0.0
        %1778 = vmatpush1.msra.mxu0 0.0
        %1779 = vmatprep.subr.mxu0 0.0
        %1780 = vmatpush1.msra.mxu0 0.0
        %1781 = vmatprep.subr.mxu0 0.0
        %1782 = vmatpush1.msra.mxu0 0.0
        %1783 = vmatprep.subr.mxu0 0.0
        %1784 = vmatpush1.msra.mxu0 0.0
        %1785 = vmatprep.subr.mxu0 0.0
        %1786 = vmatpush1.msra.mxu0 0.0
        %1787 = vmatprep.subr.mxu0 0.0
        %1788 = vmatpush1.msra.mxu0 0.0
        %1789 = vmatprep.subr.mxu0 0.0
        %1790 = vmatpush1.msra.mxu0 0.0
        %1791 = vmatprep.subr.mxu0 0.0
        %1792 = vmatpush1.msra.mxu0 0.0
        %1793 = vmatprep.subr.mxu0 0.0
        %1794 = vmatpush1.msra.mxu0 0.0
        %1795 = vmatprep.subr.mxu0 0.0
        %1796 = vmatpush1.msra.mxu0 0.0
        %1797 = vmatprep.subr.mxu0 0.0
        %1798 = vmatpush1.msra.mxu0 0.0
        %1799 = vmatprep.subr.mxu0 0.0
        %1800 = vmatpush1.msra.mxu0 0.0
        %1801 = vmatprep.subr.mxu0 0.0
        %v1802 = vand.u32 %v1578, 4294901760
        %v1803 = vsub.f32 %v1578, %v1802
        %1804 = vmatpush1.msra.mxu0 %v1803
        %1805 = vmatprep.subr.mxu0 0.0
        %v1806 = vand.u32 %v1572, 4294901760
        %v1807 = vsub.f32 %v1572, %v1806
        %1808 = vmatpush1.msra.mxu0 %v1807
        %1809 = vmatprep.subr.mxu0 0.0
        %1810 = vmatpush2.msra.mxu0 0.0
        %1811 = vmatprep.subr.mxu0 0.0
        %1812 = vmatpush2.msra.mxu0 0.0
        %1813 = vmatprep.subr.mxu0 0.0
        %1814 = vmatpush2.msra.mxu0 0.0
        %1815 = vmatprep.subr.mxu0 0.0
        %1816 = vmatpush2.msra.mxu0 0.0
        %1817 = vmatprep.subr.mxu0 0.0
        %1818 = vmatpush2.msra.mxu0 0.0
        %1819 = vmatprep.subr.mxu0 0.0
        %1820 = vmatpush2.msra.mxu0 0.0
        %1821 = vmatprep.subr.mxu0 0.0
        %1822 = vmatpush2.msra.mxu0 0.0
        %1823 = vmatprep.subr.mxu0 0.0
        %1824 = vmatpush2.msra.mxu0 0.0
        %1825 = vmatprep.subr.mxu0 0.0
        %1826 = vmatpush2.msra.mxu0 0.0
        %1827 = vmatprep.subr.mxu0 0.0
        %1828 = vmatpush2.msra.mxu0 0.0
        %1829 = vmatprep.subr.mxu0 0.0
        %1830 = vmatpush2.msra.mxu0 0.0
        %1831 = vmatprep.subr.mxu0 0.0
        %1832 = vmatpush2.msra.mxu0 0.0
        %1833 = vmatprep.subr.mxu0 0.0
        %1834 = vmatpush2.msra.mxu0 0.0
        %1835 = vmatprep.subr.mxu0 0.0
        %1836 = vmatpush2.msra.mxu0 0.0
        %1837 = vmatprep.subr.mxu0 0.0
        %1838 = vmatpush2.msra.mxu0 0.0
        %1839 = vmatprep.subr.mxu0 0.0
        %1840 = vmatpush2.msra.mxu0 0.0
        %1841 = vmatprep.mubr.f32.mxu0 0.0
        %v1842 = vand.u32 %v1594, 4294901760
        %v1843 = vsub.f32 %v1594, %v1842
        %1844 = vmatmul.mubr.f32.gmra.mxu0 %v1843
        %v1845 = vpop.f32.mrf.mxu0
        %v1846 = vadd.f32 %v1764, %v1845
        %v1847 = vpop.f32.mrf.mxu0
        %1848 = vmatprep.mubr.f32.mxu0 0.0
        %v1849 = vand.u32 %v1597, 4294901760
        %v1850 = vsub.f32 %v1597, %v1849
        %1851 = vmatmul.mubr.f32.gmra.mxu0 %v1850
        %v1852 = vpop.f32.mrf.mxu0
        %v1853 = vadd.f32 %v1770, %v1852
        %v1854 = vpop.f32.mrf.mxu0
        %1855 = vdwg.mxu0
        %1856 = vmatprep.subr.mxu0 0.0
        %1857 = vmatpush1.msra.mxu0 0.0
        %1858 = vmatprep.subr.mxu0 0.0
        %1859 = vmatpush1.msra.mxu0 0.0
        %1860 = vmatprep.subr.mxu0 0.0
        %1861 = vmatpush1.msra.mxu0 0.0
        %1862 = vmatprep.subr.mxu0 0.0
        %1863 = vmatpush1.msra.mxu0 0.0
        %1864 = vmatprep.subr.mxu0 0.0
        %1865 = vmatpush1.msra.mxu0 0.0
        %1866 = vmatprep.subr.mxu0 0.0
        %1867 = vmatpush1.msra.mxu0 0.0
        %1868 = vmatprep.subr.mxu0 0.0
        %1869 = vmatpush1.msra.mxu0 0.0
        %1870 = vmatprep.subr.mxu0 0.0
        %1871 = vmatpush1.msra.mxu0 0.0
        %1872 = vmatprep.subr.mxu0 0.0
        %1873 = vmatpush1.msra.mxu0 0.0
        %1874 = vmatprep.subr.mxu0 0.0
        %1875 = vmatpush1.msra.mxu0 0.0
        %1876 = vmatprep.subr.mxu0 0.0
        %1877 = vmatpush1.msra.mxu0 0.0
        %1878 = vmatprep.subr.mxu0 0.0
        %1879 = vmatpush1.msra.mxu0 0.0
        %1880 = vmatprep.subr.mxu0 0.0
        %1881 = vmatpush1.msra.mxu0 0.0
        %1882 = vmatprep.subr.mxu0 0.0
        %1883 = vmatpush1.msra.mxu0 0.0
        %1884 = vmatprep.subr.mxu0 0.0
        %v1885 = vand.u32 %v1578, 4294901760
        %1886 = vmatpush1.msra.mxu0 %v1885
        %1887 = vmatprep.subr.mxu0 0.0
        %v1888 = vand.u32 %v1572, 4294901760
        %1889 = vmatpush1.msra.mxu0 %v1888
        %1890 = vmatprep.subr.mxu0 0.0
        %1891 = vmatpush2.msra.mxu0 0.0
        %1892 = vmatprep.subr.mxu0 0.0
        %1893 = vmatpush2.msra.mxu0 0.0
        %1894 = vmatprep.subr.mxu0 0.0
        %1895 = vmatpush2.msra.mxu0 0.0
        %1896 = vmatprep.subr.mxu0 0.0
        %1897 = vmatpush2.msra.mxu0 0.0
        %1898 = vmatprep.subr.mxu0 0.0
        %1899 = vmatpush2.msra.mxu0 0.0
        %1900 = vmatprep.subr.mxu0 0.0
        %1901 = vmatpush2.msra.mxu0 0.0
        %1902 = vmatprep.subr.mxu0 0.0
        %1903 = vmatpush2.msra.mxu0 0.0
        %1904 = vmatprep.subr.mxu0 0.0
        %1905 = vmatpush2.msra.mxu0 0.0
        %1906 = vmatprep.subr.mxu0 0.0
        %1907 = vmatpush2.msra.mxu0 0.0
        %1908 = vmatprep.subr.mxu0 0.0
        %1909 = vmatpush2.msra.mxu0 0.0
        %1910 = vmatprep.subr.mxu0 0.0
        %1911 = vmatpush2.msra.mxu0 0.0
        %1912 = vmatprep.subr.mxu0 0.0
        %1913 = vmatpush2.msra.mxu0 0.0
        %1914 = vmatprep.subr.mxu0 0.0
        %1915 = vmatpush2.msra.mxu0 0.0
        %1916 = vmatprep.subr.mxu0 0.0
        %1917 = vmatpush2.msra.mxu0 0.0
        %1918 = vmatprep.subr.mxu0 0.0
        %1919 = vmatpush2.msra.mxu0 0.0
        %1920 = vmatprep.subr.mxu0 0.0
        %1921 = vmatpush2.msra.mxu0 0.0
        %1922 = vmatprep.mubr.f32.mxu0 0.0
        %v1923 = vand.u32 %v1594, 4294901760
        %v1924 = vsub.f32 %v1594, %v1923
        %v1925 = vand.u32 %v1924, 4294901760
        %1926 = vmatmul.mubr.f32.gmra.mxu0 %v1925
        %v1927 = vpop.f32.mrf.mxu0
        %v1928 = vadd.f32 %v1846, %v1927
        %v1929 = vpop.f32.mrf.mxu0
        %1930 = vmatprep.mubr.f32.mxu0 0.0
        %v1931 = vand.u32 %v1597, 4294901760
        %v1932 = vsub.f32 %v1597, %v1931
        %v1933 = vand.u32 %v1932, 4294901760
        %1934 = vmatmul.mubr.f32.gmra.mxu0 %v1933
        %v1935 = vpop.f32.mrf.mxu0
        %v1936 = vadd.f32 %v1853, %v1935
        %v1937 = vpop.f32.mrf.mxu0
        %1938 = vdwg.mxu0
        %1939 = vmatprep.subr.mxu0 0.0
        %1940 = vmatpush1.msra.mxu0 0.0
        %1941 = vmatprep.subr.mxu0 0.0
        %1942 = vmatpush1.msra.mxu0 0.0
        %1943 = vmatprep.subr.mxu0 0.0
        %1944 = vmatpush1.msra.mxu0 0.0
        %1945 = vmatprep.subr.mxu0 0.0
        %1946 = vmatpush1.msra.mxu0 0.0
        %1947 = vmatprep.subr.mxu0 0.0
        %1948 = vmatpush1.msra.mxu0 0.0
        %1949 = vmatprep.subr.mxu0 0.0
        %1950 = vmatpush1.msra.mxu0 0.0
        %1951 = vmatprep.subr.mxu0 0.0
        %1952 = vmatpush1.msra.mxu0 0.0
        %1953 = vmatprep.subr.mxu0 0.0
        %1954 = vmatpush1.msra.mxu0 0.0
        %1955 = vmatprep.subr.mxu0 0.0
        %1956 = vmatpush1.msra.mxu0 0.0
        %1957 = vmatprep.subr.mxu0 0.0
        %1958 = vmatpush1.msra.mxu0 0.0
        %1959 = vmatprep.subr.mxu0 0.0
        %1960 = vmatpush1.msra.mxu0 0.0
        %1961 = vmatprep.subr.mxu0 0.0
        %1962 = vmatpush1.msra.mxu0 0.0
        %1963 = vmatprep.subr.mxu0 0.0
        %1964 = vmatpush1.msra.mxu0 0.0
        %1965 = vmatprep.subr.mxu0 0.0
        %1966 = vmatpush1.msra.mxu0 0.0
        %1967 = vmatprep.subr.mxu0 0.0
        %v1968 = vand.u32 %v1578, 4294901760
        %v1969 = vsub.f32 %v1578, %v1968
        %v1970 = vand.u32 %v1969, 4294901760
        %1971 = vmatpush1.msra.mxu0 %v1970
        %1972 = vmatprep.subr.mxu0 0.0
        %v1973 = vand.u32 %v1572, 4294901760
        %v1974 = vsub.f32 %v1572, %v1973
        %v1975 = vand.u32 %v1974, 4294901760
        %1976 = vmatpush1.msra.mxu0 %v1975
        %1977 = vmatprep.subr.mxu0 0.0
        %1978 = vmatpush2.msra.mxu0 0.0
        %1979 = vmatprep.subr.mxu0 0.0
        %1980 = vmatpush2.msra.mxu0 0.0
        %1981 = vmatprep.subr.mxu0 0.0
        %1982 = vmatpush2.msra.mxu0 0.0
        %1983 = vmatprep.subr.mxu0 0.0
        %1984 = vmatpush2.msra.mxu0 0.0
        %1985 = vmatprep.subr.mxu0 0.0
        %1986 = vmatpush2.msra.mxu0 0.0
        %1987 = vmatprep.subr.mxu0 0.0
        %1988 = vmatpush2.msra.mxu0 0.0
        %1989 = vmatprep.subr.mxu0 0.0
        %1990 = vmatpush2.msra.mxu0 0.0
        %1991 = vmatprep.subr.mxu0 0.0
        %1992 = vmatpush2.msra.mxu0 0.0
        %1993 = vmatprep.subr.mxu0 0.0
        %1994 = vmatpush2.msra.mxu0 0.0
        %1995 = vmatprep.subr.mxu0 0.0
        %1996 = vmatpush2.msra.mxu0 0.0
        %1997 = vmatprep.subr.mxu0 0.0
        %1998 = vmatpush2.msra.mxu0 0.0
        %1999 = vmatprep.subr.mxu0 0.0
        %2000 = vmatpush2.msra.mxu0 0.0
        %2001 = vmatprep.subr.mxu0 0.0
        %2002 = vmatpush2.msra.mxu0 0.0
        %2003 = vmatprep.subr.mxu0 0.0
        %2004 = vmatpush2.msra.mxu0 0.0
        %2005 = vmatprep.subr.mxu0 0.0
        %2006 = vmatpush2.msra.mxu0 0.0
        %2007 = vmatprep.subr.mxu0 0.0
        %2008 = vmatpush2.msra.mxu0 0.0
        %2009 = vmatprep.mubr.f32.mxu0 0.0
        %v2010 = vand.u32 %v1594, 4294901760
        %2011 = vmatmul.mubr.f32.gmra.mxu0 %v2010
        %v2012 = vpop.f32.mrf.mxu0
        %v2013 = vadd.f32 %v1928, %v2012
        %v2014 = vpop.f32.mrf.mxu0
        %2015 = vmatprep.mubr.f32.mxu0 0.0
        %v2016 = vand.u32 %v1597, 4294901760
        %2017 = vmatmul.mubr.f32.gmra.mxu0 %v2016
        %v2018 = vpop.f32.mrf.mxu0
        %v2019 = vadd.f32 %v1936, %v2018
        %v2020 = vpop.f32.mrf.mxu0
        %2021 = vdwg.mxu0
        %2022 = vmatprep.subr.mxu0 0.0
        %2023 = vmatpush1.msra.mxu0 0.0
        %2024 = vmatprep.subr.mxu0 0.0
        %2025 = vmatpush1.msra.mxu0 0.0
        %2026 = vmatprep.subr.mxu0 0.0
        %2027 = vmatpush1.msra.mxu0 0.0
        %2028 = vmatprep.subr.mxu0 0.0
        %2029 = vmatpush1.msra.mxu0 0.0
        %2030 = vmatprep.subr.mxu0 0.0
        %2031 = vmatpush1.msra.mxu0 0.0
        %2032 = vmatprep.subr.mxu0 0.0
        %2033 = vmatpush1.msra.mxu0 0.0
        %2034 = vmatprep.subr.mxu0 0.0
        %2035 = vmatpush1.msra.mxu0 0.0
        %2036 = vmatprep.subr.mxu0 0.0
        %2037 = vmatpush1.msra.mxu0 0.0
        %2038 = vmatprep.subr.mxu0 0.0
        %2039 = vmatpush1.msra.mxu0 0.0
        %2040 = vmatprep.subr.mxu0 0.0
        %2041 = vmatpush1.msra.mxu0 0.0
        %2042 = vmatprep.subr.mxu0 0.0
        %2043 = vmatpush1.msra.mxu0 0.0
        %2044 = vmatprep.subr.mxu0 0.0
        %2045 = vmatpush1.msra.mxu0 0.0
        %2046 = vmatprep.subr.mxu0 0.0
        %2047 = vmatpush1.msra.mxu0 0.0
        %2048 = vmatprep.subr.mxu0 0.0
        %2049 = vmatpush1.msra.mxu0 0.0
        %2050 = vmatprep.subr.mxu0 0.0
        %v2051 = vand.u32 %v1578, 4294901760
        %2052 = vmatpush1.msra.mxu0 %v2051
        %2053 = vmatprep.subr.mxu0 0.0
        %v2054 = vand.u32 %v1572, 4294901760
        %2055 = vmatpush1.msra.mxu0 %v2054
        %2056 = vmatprep.subr.mxu0 0.0
        %2057 = vmatpush2.msra.mxu0 0.0
        %2058 = vmatprep.subr.mxu0 0.0
        %2059 = vmatpush2.msra.mxu0 0.0
        %2060 = vmatprep.subr.mxu0 0.0
        %2061 = vmatpush2.msra.mxu0 0.0
        %2062 = vmatprep.subr.mxu0 0.0
        %2063 = vmatpush2.msra.mxu0 0.0
        %2064 = vmatprep.subr.mxu0 0.0
        %2065 = vmatpush2.msra.mxu0 0.0
        %2066 = vmatprep.subr.mxu0 0.0
        %2067 = vmatpush2.msra.mxu0 0.0
        %2068 = vmatprep.subr.mxu0 0.0
        %2069 = vmatpush2.msra.mxu0 0.0
        %2070 = vmatprep.subr.mxu0 0.0
        %2071 = vmatpush2.msra.mxu0 0.0
        %2072 = vmatprep.subr.mxu0 0.0
        %2073 = vmatpush2.msra.mxu0 0.0
        %2074 = vmatprep.subr.mxu0 0.0
        %2075 = vmatpush2.msra.mxu0 0.0
        %2076 = vmatprep.subr.mxu0 0.0
        %2077 = vmatpush2.msra.mxu0 0.0
        %2078 = vmatprep.subr.mxu0 0.0
        %2079 = vmatpush2.msra.mxu0 0.0
        %2080 = vmatprep.subr.mxu0 0.0
        %2081 = vmatpush2.msra.mxu0 0.0
        %2082 = vmatprep.subr.mxu0 0.0
        %2083 = vmatpush2.msra.mxu0 0.0
        %2084 = vmatprep.subr.mxu0 0.0
        %2085 = vmatpush2.msra.mxu0 0.0
        %2086 = vmatprep.subr.mxu0 0.0
        %2087 = vmatpush2.msra.mxu0 0.0
        %2088 = vmatprep.mubr.f32.mxu0 0.0
        %v2089 = vand.u32 %v1594, 4294901760
        %2090 = vmatmul.mubr.f32.gmra.mxu0 %v2089
        %v2091 = vpop.f32.mrf.mxu0
        %v2092 = vadd.f32 %v2013, %v2091
        %v2093 = vpop.f32.mrf.mxu0
        %2094 = vmatprep.mubr.f32.mxu0 0.0
        %v2095 = vand.u32 %v1597, 4294901760
        %2096 = vmatmul.mubr.f32.gmra.mxu0 %v2095
        %v2097 = vpop.f32.mrf.mxu0
        %v2098 = vadd.f32 %v2019, %v2097
        %v2099 = vpop.f32.mrf.mxu0
        %2100 = vdwg.mxu0
        %v2102 = vsel %vm388, %v991, 0
        %v2105 = vsel %vm388, %v992, 0
        %2107 = vmatprep.subr.mxu0 0.0
        %2108 = vmatpush1.msra.mxu0 0.0
        %2109 = vmatprep.subr.mxu0 0.0
        %2110 = vmatpush1.msra.mxu0 0.0
        %2111 = vmatprep.subr.mxu0 0.0
        %2112 = vmatpush1.msra.mxu0 0.0
        %2113 = vmatprep.subr.mxu0 0.0
        %2114 = vmatpush1.msra.mxu0 0.0
        %2115 = vmatprep.subr.mxu0 0.0
        %2116 = vmatpush1.msra.mxu0 0.0
        %2117 = vmatprep.subr.mxu0 0.0
        %2118 = vmatpush1.msra.mxu0 0.0
        %2119 = vmatprep.subr.mxu0 0.0
        %2120 = vmatpush1.msra.mxu0 0.0
        %2121 = vmatprep.subr.mxu0 0.0
        %2122 = vmatpush1.msra.mxu0 0.0
        %2123 = vmatprep.subr.mxu0 0.0
        %2124 = vmatpush1.msra.mxu0 0.0
        %2125 = vmatprep.subr.mxu0 0.0
        %2126 = vmatpush1.msra.mxu0 0.0
        %2127 = vmatprep.subr.mxu0 0.0
        %2128 = vmatpush1.msra.mxu0 0.0
        %2129 = vmatprep.subr.mxu0 0.0
        %2130 = vmatpush1.msra.mxu0 0.0
        %2131 = vmatprep.subr.mxu0 0.0
        %2132 = vmatpush1.msra.mxu0 0.0
        %2133 = vmatprep.subr.mxu0 0.0
        %2134 = vmatpush1.msra.mxu0 0.0
        %2135 = vmatprep.subr.mxu0 0.0
        %v2136 = vand.u32 %v1590, 4294901760
        %2137 = vmatpush1.msra.mxu0 %v2136
        %2138 = vmatprep.subr.mxu0 0.0
        %v2139 = vand.u32 %v1584, 4294901760
        %2140 = vmatpush1.msra.mxu0 %v2139
        %2141 = vmatprep.subr.mxu0 0.0
        %2142 = vmatpush2.msra.mxu0 0.0
        %2143 = vmatprep.subr.mxu0 0.0
        %2144 = vmatpush2.msra.mxu0 0.0
        %2145 = vmatprep.subr.mxu0 0.0
        %2146 = vmatpush2.msra.mxu0 0.0
        %2147 = vmatprep.subr.mxu0 0.0
        %2148 = vmatpush2.msra.mxu0 0.0
        %2149 = vmatprep.subr.mxu0 0.0
        %2150 = vmatpush2.msra.mxu0 0.0
        %2151 = vmatprep.subr.mxu0 0.0
        %2152 = vmatpush2.msra.mxu0 0.0
        %2153 = vmatprep.subr.mxu0 0.0
        %2154 = vmatpush2.msra.mxu0 0.0
        %2155 = vmatprep.subr.mxu0 0.0
        %2156 = vmatpush2.msra.mxu0 0.0
        %2157 = vmatprep.subr.mxu0 0.0
        %2158 = vmatpush2.msra.mxu0 0.0
        %2159 = vmatprep.subr.mxu0 0.0
        %2160 = vmatpush2.msra.mxu0 0.0
        %2161 = vmatprep.subr.mxu0 0.0
        %2162 = vmatpush2.msra.mxu0 0.0
        %2163 = vmatprep.subr.mxu0 0.0
        %2164 = vmatpush2.msra.mxu0 0.0
        %2165 = vmatprep.subr.mxu0 0.0
        %2166 = vmatpush2.msra.mxu0 0.0
        %2167 = vmatprep.subr.mxu0 0.0
        %2168 = vmatpush2.msra.mxu0 0.0
        %2169 = vmatprep.subr.mxu0 0.0
        %2170 = vmatpush2.msra.mxu0 0.0
        %2171 = vmatprep.subr.mxu0 0.0
        %2172 = vmatpush2.msra.mxu0 0.0
        %2173 = vmatprep.mubr.f32.mxu0 0.0
        %v2174 = vand.u32 %v2102, 4294901760
        %v2175 = vsub.f32 %v2102, %v2174
        %v2176 = vand.u32 %v2175, 4294901760
        %v2177 = vsub.f32 %v2175, %v2176
        %v2178 = vand.u32 %v2177, 4294901760
        %2179 = vmatmul.mubr.f32.gmra.mxu0 %v2178
        %v2180 = vpop.f32.mrf.mxu0
        %v2181 = vadd.f32 0.0, %v2180
        %v2182 = vpop.f32.mrf.mxu0
        %2183 = vmatprep.mubr.f32.mxu0 0.0
        %v2184 = vand.u32 %v2105, 4294901760
        %v2185 = vsub.f32 %v2105, %v2184
        %v2186 = vand.u32 %v2185, 4294901760
        %v2187 = vsub.f32 %v2185, %v2186
        %v2188 = vand.u32 %v2187, 4294901760
        %2189 = vmatmul.mubr.f32.gmra.mxu0 %v2188
        %v2190 = vpop.f32.mrf.mxu0
        %v2191 = vadd.f32 0.0, %v2190
        %v2192 = vpop.f32.mrf.mxu0
        %2193 = vdwg.mxu0
        %2194 = vmatprep.subr.mxu0 0.0
        %2195 = vmatpush1.msra.mxu0 0.0
        %2196 = vmatprep.subr.mxu0 0.0
        %2197 = vmatpush1.msra.mxu0 0.0
        %2198 = vmatprep.subr.mxu0 0.0
        %2199 = vmatpush1.msra.mxu0 0.0
        %2200 = vmatprep.subr.mxu0 0.0
        %2201 = vmatpush1.msra.mxu0 0.0
        %2202 = vmatprep.subr.mxu0 0.0
        %2203 = vmatpush1.msra.mxu0 0.0
        %2204 = vmatprep.subr.mxu0 0.0
        %2205 = vmatpush1.msra.mxu0 0.0
        %2206 = vmatprep.subr.mxu0 0.0
        %2207 = vmatpush1.msra.mxu0 0.0
        %2208 = vmatprep.subr.mxu0 0.0
        %2209 = vmatpush1.msra.mxu0 0.0
        %2210 = vmatprep.subr.mxu0 0.0
        %2211 = vmatpush1.msra.mxu0 0.0
        %2212 = vmatprep.subr.mxu0 0.0
        %2213 = vmatpush1.msra.mxu0 0.0
        %2214 = vmatprep.subr.mxu0 0.0
        %2215 = vmatpush1.msra.mxu0 0.0
        %2216 = vmatprep.subr.mxu0 0.0
        %2217 = vmatpush1.msra.mxu0 0.0
        %2218 = vmatprep.subr.mxu0 0.0
        %2219 = vmatpush1.msra.mxu0 0.0
        %2220 = vmatprep.subr.mxu0 0.0
        %2221 = vmatpush1.msra.mxu0 0.0
        %2222 = vmatprep.subr.mxu0 0.0
        %v2223 = vand.u32 %v1590, 4294901760
        %v2224 = vsub.f32 %v1590, %v2223
        %v2225 = vand.u32 %v2224, 4294901760
        %v2226 = vsub.f32 %v2224, %v2225
        %v2227 = vand.u32 %v2226, 4294901760
        %2228 = vmatpush1.msra.mxu0 %v2227
        %2229 = vmatprep.subr.mxu0 0.0
        %v2230 = vand.u32 %v1584, 4294901760
        %v2231 = vsub.f32 %v1584, %v2230
        %v2232 = vand.u32 %v2231, 4294901760
        %v2233 = vsub.f32 %v2231, %v2232
        %v2234 = vand.u32 %v2233, 4294901760
        %2235 = vmatpush1.msra.mxu0 %v2234
        %2236 = vmatprep.subr.mxu0 0.0
        %2237 = vmatpush2.msra.mxu0 0.0
        %2238 = vmatprep.subr.mxu0 0.0
        %2239 = vmatpush2.msra.mxu0 0.0
        %2240 = vmatprep.subr.mxu0 0.0
        %2241 = vmatpush2.msra.mxu0 0.0
        %2242 = vmatprep.subr.mxu0 0.0
        %2243 = vmatpush2.msra.mxu0 0.0
        %2244 = vmatprep.subr.mxu0 0.0
        %2245 = vmatpush2.msra.mxu0 0.0
        %2246 = vmatprep.subr.mxu0 0.0
        %2247 = vmatpush2.msra.mxu0 0.0
        %2248 = vmatprep.subr.mxu0 0.0
        %2249 = vmatpush2.msra.mxu0 0.0
        %2250 = vmatprep.subr.mxu0 0.0
        %2251 = vmatpush2.msra.mxu0 0.0
        %2252 = vmatprep.subr.mxu0 0.0
        %2253 = vmatpush2.msra.mxu0 0.0
        %2254 = vmatprep.subr.mxu0 0.0
        %2255 = vmatpush2.msra.mxu0 0.0
        %2256 = vmatprep.subr.mxu0 0.0
        %2257 = vmatpush2.msra.mxu0 0.0
        %2258 = vmatprep.subr.mxu0 0.0
        %2259 = vmatpush2.msra.mxu0 0.0
        %2260 = vmatprep.subr.mxu0 0.0
        %2261 = vmatpush2.msra.mxu0 0.0
        %2262 = vmatprep.subr.mxu0 0.0
        %2263 = vmatpush2.msra.mxu0 0.0
        %2264 = vmatprep.subr.mxu0 0.0
        %2265 = vmatpush2.msra.mxu0 0.0
        %2266 = vmatprep.subr.mxu0 0.0
        %2267 = vmatpush2.msra.mxu0 0.0
        %2268 = vmatprep.mubr.f32.mxu0 0.0
        %v2269 = vand.u32 %v2102, 4294901760
        %2270 = vmatmul.mubr.f32.gmra.mxu0 %v2269
        %v2271 = vpop.f32.mrf.mxu0
        %v2272 = vadd.f32 %v2181, %v2271
        %v2273 = vpop.f32.mrf.mxu0
        %2274 = vmatprep.mubr.f32.mxu0 0.0
        %v2275 = vand.u32 %v2105, 4294901760
        %2276 = vmatmul.mubr.f32.gmra.mxu0 %v2275
        %v2277 = vpop.f32.mrf.mxu0
        %v2278 = vadd.f32 %v2191, %v2277
        %v2279 = vpop.f32.mrf.mxu0
        %2280 = vdwg.mxu0
        %2281 = vmatprep.subr.mxu0 0.0
        %2282 = vmatpush1.msra.mxu0 0.0
        %2283 = vmatprep.subr.mxu0 0.0
        %2284 = vmatpush1.msra.mxu0 0.0
        %2285 = vmatprep.subr.mxu0 0.0
        %2286 = vmatpush1.msra.mxu0 0.0
        %2287 = vmatprep.subr.mxu0 0.0
        %2288 = vmatpush1.msra.mxu0 0.0
        %2289 = vmatprep.subr.mxu0 0.0
        %2290 = vmatpush1.msra.mxu0 0.0
        %2291 = vmatprep.subr.mxu0 0.0
        %2292 = vmatpush1.msra.mxu0 0.0
        %2293 = vmatprep.subr.mxu0 0.0
        %2294 = vmatpush1.msra.mxu0 0.0
        %2295 = vmatprep.subr.mxu0 0.0
        %2296 = vmatpush1.msra.mxu0 0.0
        %2297 = vmatprep.subr.mxu0 0.0
        %2298 = vmatpush1.msra.mxu0 0.0
        %2299 = vmatprep.subr.mxu0 0.0
        %2300 = vmatpush1.msra.mxu0 0.0
        %2301 = vmatprep.subr.mxu0 0.0
        %2302 = vmatpush1.msra.mxu0 0.0
        %2303 = vmatprep.subr.mxu0 0.0
        %2304 = vmatpush1.msra.mxu0 0.0
        %2305 = vmatprep.subr.mxu0 0.0
        %2306 = vmatpush1.msra.mxu0 0.0
        %2307 = vmatprep.subr.mxu0 0.0
        %2308 = vmatpush1.msra.mxu0 0.0
        %2309 = vmatprep.subr.mxu0 0.0
        %v2310 = vand.u32 %v1590, 4294901760
        %v2311 = vsub.f32 %v1590, %v2310
        %2312 = vmatpush1.msra.mxu0 %v2311
        %2313 = vmatprep.subr.mxu0 0.0
        %v2314 = vand.u32 %v1584, 4294901760
        %v2315 = vsub.f32 %v1584, %v2314
        %2316 = vmatpush1.msra.mxu0 %v2315
        %2317 = vmatprep.subr.mxu0 0.0
        %2318 = vmatpush2.msra.mxu0 0.0
        %2319 = vmatprep.subr.mxu0 0.0
        %2320 = vmatpush2.msra.mxu0 0.0
        %2321 = vmatprep.subr.mxu0 0.0
        %2322 = vmatpush2.msra.mxu0 0.0
        %2323 = vmatprep.subr.mxu0 0.0
        %2324 = vmatpush2.msra.mxu0 0.0
        %2325 = vmatprep.subr.mxu0 0.0
        %2326 = vmatpush2.msra.mxu0 0.0
        %2327 = vmatprep.subr.mxu0 0.0
        %2328 = vmatpush2.msra.mxu0 0.0
        %2329 = vmatprep.subr.mxu0 0.0
        %2330 = vmatpush2.msra.mxu0 0.0
        %2331 = vmatprep.subr.mxu0 0.0
        %2332 = vmatpush2.msra.mxu0 0.0
        %2333 = vmatprep.subr.mxu0 0.0
        %2334 = vmatpush2.msra.mxu0 0.0
        %2335 = vmatprep.subr.mxu0 0.0
        %2336 = vmatpush2.msra.mxu0 0.0
        %2337 = vmatprep.subr.mxu0 0.0
        %2338 = vmatpush2.msra.mxu0 0.0
        %2339 = vmatprep.subr.mxu0 0.0
        %2340 = vmatpush2.msra.mxu0 0.0
        %2341 = vmatprep.subr.mxu0 0.0
        %2342 = vmatpush2.msra.mxu0 0.0
        %2343 = vmatprep.subr.mxu0 0.0
        %2344 = vmatpush2.msra.mxu0 0.0
        %2345 = vmatprep.subr.mxu0 0.0
        %2346 = vmatpush2.msra.mxu0 0.0
        %2347 = vmatprep.subr.mxu0 0.0
        %2348 = vmatpush2.msra.mxu0 0.0
        %2349 = vmatprep.mubr.f32.mxu0 0.0
        %v2350 = vand.u32 %v2102, 4294901760
        %v2351 = vsub.f32 %v2102, %v2350
        %2352 = vmatmul.mubr.f32.gmra.mxu0 %v2351
        %v2353 = vpop.f32.mrf.mxu0
        %v2354 = vadd.f32 %v2272, %v2353
        %v2355 = vpop.f32.mrf.mxu0
        %2356 = vmatprep.mubr.f32.mxu0 0.0
        %v2357 = vand.u32 %v2105, 4294901760
        %v2358 = vsub.f32 %v2105, %v2357
        %2359 = vmatmul.mubr.f32.gmra.mxu0 %v2358
        %v2360 = vpop.f32.mrf.mxu0
        %v2361 = vadd.f32 %v2278, %v2360
        %v2362 = vpop.f32.mrf.mxu0
        %2363 = vdwg.mxu0
        %2364 = vmatprep.subr.mxu0 0.0
        %2365 = vmatpush1.msra.mxu0 0.0
        %2366 = vmatprep.subr.mxu0 0.0
        %2367 = vmatpush1.msra.mxu0 0.0
        %2368 = vmatprep.subr.mxu0 0.0
        %2369 = vmatpush1.msra.mxu0 0.0
        %2370 = vmatprep.subr.mxu0 0.0
        %2371 = vmatpush1.msra.mxu0 0.0
        %2372 = vmatprep.subr.mxu0 0.0
        %2373 = vmatpush1.msra.mxu0 0.0
        %2374 = vmatprep.subr.mxu0 0.0
        %2375 = vmatpush1.msra.mxu0 0.0
        %2376 = vmatprep.subr.mxu0 0.0
        %2377 = vmatpush1.msra.mxu0 0.0
        %2378 = vmatprep.subr.mxu0 0.0
        %2379 = vmatpush1.msra.mxu0 0.0
        %2380 = vmatprep.subr.mxu0 0.0
        %2381 = vmatpush1.msra.mxu0 0.0
        %2382 = vmatprep.subr.mxu0 0.0
        %2383 = vmatpush1.msra.mxu0 0.0
        %2384 = vmatprep.subr.mxu0 0.0
        %2385 = vmatpush1.msra.mxu0 0.0
        %2386 = vmatprep.subr.mxu0 0.0
        %2387 = vmatpush1.msra.mxu0 0.0
        %2388 = vmatprep.subr.mxu0 0.0
        %2389 = vmatpush1.msra.mxu0 0.0
        %2390 = vmatprep.subr.mxu0 0.0
        %2391 = vmatpush1.msra.mxu0 0.0
        %2392 = vmatprep.subr.mxu0 0.0
        %v2393 = vand.u32 %v1590, 4294901760
        %2394 = vmatpush1.msra.mxu0 %v2393
        %2395 = vmatprep.subr.mxu0 0.0
        %v2396 = vand.u32 %v1584, 4294901760
        %2397 = vmatpush1.msra.mxu0 %v2396
        %2398 = vmatprep.subr.mxu0 0.0
        %2399 = vmatpush2.msra.mxu0 0.0
        %2400 = vmatprep.subr.mxu0 0.0
        %2401 = vmatpush2.msra.mxu0 0.0
        %2402 = vmatprep.subr.mxu0 0.0
        %2403 = vmatpush2.msra.mxu0 0.0
        %2404 = vmatprep.subr.mxu0 0.0
        %2405 = vmatpush2.msra.mxu0 0.0
        %2406 = vmatprep.subr.mxu0 0.0
        %2407 = vmatpush2.msra.mxu0 0.0
        %2408 = vmatprep.subr.mxu0 0.0
        %2409 = vmatpush2.msra.mxu0 0.0
        %2410 = vmatprep.subr.mxu0 0.0
        %2411 = vmatpush2.msra.mxu0 0.0
        %2412 = vmatprep.subr.mxu0 0.0
        %2413 = vmatpush2.msra.mxu0 0.0
        %2414 = vmatprep.subr.mxu0 0.0
        %2415 = vmatpush2.msra.mxu0 0.0
        %2416 = vmatprep.subr.mxu0 0.0
        %2417 = vmatpush2.msra.mxu0 0.0
        %2418 = vmatprep.subr.mxu0 0.0
        %2419 = vmatpush2.msra.mxu0 0.0
        %2420 = vmatprep.subr.mxu0 0.0
        %2421 = vmatpush2.msra.mxu0 0.0
        %2422 = vmatprep.subr.mxu0 0.0
        %2423 = vmatpush2.msra.mxu0 0.0
        %2424 = vmatprep.subr.mxu0 0.0
        %2425 = vmatpush2.msra.mxu0 0.0
        %2426 = vmatprep.subr.mxu0 0.0
        %2427 = vmatpush2.msra.mxu0 0.0
        %2428 = vmatprep.subr.mxu0 0.0
        %2429 = vmatpush2.msra.mxu0 0.0
        %2430 = vmatprep.mubr.f32.mxu0 0.0
        %v2431 = vand.u32 %v2102, 4294901760
        %v2432 = vsub.f32 %v2102, %v2431
        %v2433 = vand.u32 %v2432, 4294901760
        %2434 = vmatmul.mubr.f32.gmra.mxu0 %v2433
        %v2435 = vpop.f32.mrf.mxu0
        %v2436 = vadd.f32 %v2354, %v2435
        %v2437 = vpop.f32.mrf.mxu0
        %2438 = vmatprep.mubr.f32.mxu0 0.0
        %v2439 = vand.u32 %v2105, 4294901760
        %v2440 = vsub.f32 %v2105, %v2439
        %v2441 = vand.u32 %v2440, 4294901760
        %2442 = vmatmul.mubr.f32.gmra.mxu0 %v2441
        %v2443 = vpop.f32.mrf.mxu0
        %v2444 = vadd.f32 %v2361, %v2443
        %v2445 = vpop.f32.mrf.mxu0
        %2446 = vdwg.mxu0
        %2447 = vmatprep.subr.mxu0 0.0
        %2448 = vmatpush1.msra.mxu0 0.0
        %2449 = vmatprep.subr.mxu0 0.0
        %2450 = vmatpush1.msra.mxu0 0.0
        %2451 = vmatprep.subr.mxu0 0.0
        %2452 = vmatpush1.msra.mxu0 0.0
        %2453 = vmatprep.subr.mxu0 0.0
        %2454 = vmatpush1.msra.mxu0 0.0
        %2455 = vmatprep.subr.mxu0 0.0
        %2456 = vmatpush1.msra.mxu0 0.0
        %2457 = vmatprep.subr.mxu0 0.0
        %2458 = vmatpush1.msra.mxu0 0.0
        %2459 = vmatprep.subr.mxu0 0.0
        %2460 = vmatpush1.msra.mxu0 0.0
        %2461 = vmatprep.subr.mxu0 0.0
        %2462 = vmatpush1.msra.mxu0 0.0
        %2463 = vmatprep.subr.mxu0 0.0
        %2464 = vmatpush1.msra.mxu0 0.0
        %2465 = vmatprep.subr.mxu0 0.0
        %2466 = vmatpush1.msra.mxu0 0.0
        %2467 = vmatprep.subr.mxu0 0.0
        %2468 = vmatpush1.msra.mxu0 0.0
        %2469 = vmatprep.subr.mxu0 0.0
        %2470 = vmatpush1.msra.mxu0 0.0
        %2471 = vmatprep.subr.mxu0 0.0
        %2472 = vmatpush1.msra.mxu0 0.0
        %2473 = vmatprep.subr.mxu0 0.0
        %2474 = vmatpush1.msra.mxu0 0.0
        %2475 = vmatprep.subr.mxu0 0.0
        %v2476 = vand.u32 %v1590, 4294901760
        %v2477 = vsub.f32 %v1590, %v2476
        %v2478 = vand.u32 %v2477, 4294901760
        %2479 = vmatpush1.msra.mxu0 %v2478
        %2480 = vmatprep.subr.mxu0 0.0
        %v2481 = vand.u32 %v1584, 4294901760
        %v2482 = vsub.f32 %v1584, %v2481
        %v2483 = vand.u32 %v2482, 4294901760
        %2484 = vmatpush1.msra.mxu0 %v2483
        %2485 = vmatprep.subr.mxu0 0.0
        %2486 = vmatpush2.msra.mxu0 0.0
        %2487 = vmatprep.subr.mxu0 0.0
        %2488 = vmatpush2.msra.mxu0 0.0
        %2489 = vmatprep.subr.mxu0 0.0
        %2490 = vmatpush2.msra.mxu0 0.0
        %2491 = vmatprep.subr.mxu0 0.0
        %2492 = vmatpush2.msra.mxu0 0.0
        %2493 = vmatprep.subr.mxu0 0.0
        %2494 = vmatpush2.msra.mxu0 0.0
        %2495 = vmatprep.subr.mxu0 0.0
        %2496 = vmatpush2.msra.mxu0 0.0
        %2497 = vmatprep.subr.mxu0 0.0
        %2498 = vmatpush2.msra.mxu0 0.0
        %2499 = vmatprep.subr.mxu0 0.0
        %2500 = vmatpush2.msra.mxu0 0.0
        %2501 = vmatprep.subr.mxu0 0.0
        %2502 = vmatpush2.msra.mxu0 0.0
        %2503 = vmatprep.subr.mxu0 0.0
        %2504 = vmatpush2.msra.mxu0 0.0
        %2505 = vmatprep.subr.mxu0 0.0
        %2506 = vmatpush2.msra.mxu0 0.0
        %2507 = vmatprep.subr.mxu0 0.0
        %2508 = vmatpush2.msra.mxu0 0.0
        %2509 = vmatprep.subr.mxu0 0.0
        %2510 = vmatpush2.msra.mxu0 0.0
        %2511 = vmatprep.subr.mxu0 0.0
        %2512 = vmatpush2.msra.mxu0 0.0
        %2513 = vmatprep.subr.mxu0 0.0
        %2514 = vmatpush2.msra.mxu0 0.0
        %2515 = vmatprep.subr.mxu0 0.0
        %2516 = vmatpush2.msra.mxu0 0.0
        %2517 = vmatprep.mubr.f32.mxu0 0.0
        %v2518 = vand.u32 %v2102, 4294901760
        %2519 = vmatmul.mubr.f32.gmra.mxu0 %v2518
        %v2520 = vpop.f32.mrf.mxu0
        %v2521 = vadd.f32 %v2436, %v2520
        %v2522 = vpop.f32.mrf.mxu0
        %2523 = vmatprep.mubr.f32.mxu0 0.0
        %v2524 = vand.u32 %v2105, 4294901760
        %2525 = vmatmul.mubr.f32.gmra.mxu0 %v2524
        %v2526 = vpop.f32.mrf.mxu0
        %v2527 = vadd.f32 %v2444, %v2526
        %v2528 = vpop.f32.mrf.mxu0
        %2529 = vdwg.mxu0
        %2530 = vmatprep.subr.mxu0 0.0
        %2531 = vmatpush1.msra.mxu0 0.0
        %2532 = vmatprep.subr.mxu0 0.0
        %2533 = vmatpush1.msra.mxu0 0.0
        %2534 = vmatprep.subr.mxu0 0.0
        %2535 = vmatpush1.msra.mxu0 0.0
        %2536 = vmatprep.subr.mxu0 0.0
        %2537 = vmatpush1.msra.mxu0 0.0
        %2538 = vmatprep.subr.mxu0 0.0
        %2539 = vmatpush1.msra.mxu0 0.0
        %2540 = vmatprep.subr.mxu0 0.0
        %2541 = vmatpush1.msra.mxu0 0.0
        %2542 = vmatprep.subr.mxu0 0.0
        %2543 = vmatpush1.msra.mxu0 0.0
        %2544 = vmatprep.subr.mxu0 0.0
        %2545 = vmatpush1.msra.mxu0 0.0
        %2546 = vmatprep.subr.mxu0 0.0
        %2547 = vmatpush1.msra.mxu0 0.0
        %2548 = vmatprep.subr.mxu0 0.0
        %2549 = vmatpush1.msra.mxu0 0.0
        %2550 = vmatprep.subr.mxu0 0.0
        %2551 = vmatpush1.msra.mxu0 0.0
        %2552 = vmatprep.subr.mxu0 0.0
        %2553 = vmatpush1.msra.mxu0 0.0
        %2554 = vmatprep.subr.mxu0 0.0
        %2555 = vmatpush1.msra.mxu0 0.0
        %2556 = vmatprep.subr.mxu0 0.0
        %2557 = vmatpush1.msra.mxu0 0.0
        %2558 = vmatprep.subr.mxu0 0.0
        %v2559 = vand.u32 %v1590, 4294901760
        %2560 = vmatpush1.msra.mxu0 %v2559
        %2561 = vmatprep.subr.mxu0 0.0
        %v2562 = vand.u32 %v1584, 4294901760
        %2563 = vmatpush1.msra.mxu0 %v2562
        %2564 = vmatprep.subr.mxu0 0.0
        %2565 = vmatpush2.msra.mxu0 0.0
        %2566 = vmatprep.subr.mxu0 0.0
        %2567 = vmatpush2.msra.mxu0 0.0
        %2568 = vmatprep.subr.mxu0 0.0
        %2569 = vmatpush2.msra.mxu0 0.0
        %2570 = vmatprep.subr.mxu0 0.0
        %2571 = vmatpush2.msra.mxu0 0.0
        %2572 = vmatprep.subr.mxu0 0.0
        %2573 = vmatpush2.msra.mxu0 0.0
        %2574 = vmatprep.subr.mxu0 0.0
        %2575 = vmatpush2.msra.mxu0 0.0
        %2576 = vmatprep.subr.mxu0 0.0
        %2577 = vmatpush2.msra.mxu0 0.0
        %2578 = vmatprep.subr.mxu0 0.0
        %2579 = vmatpush2.msra.mxu0 0.0
        %2580 = vmatprep.subr.mxu0 0.0
        %2581 = vmatpush2.msra.mxu0 0.0
        %2582 = vmatprep.subr.mxu0 0.0
        %2583 = vmatpush2.msra.mxu0 0.0
        %2584 = vmatprep.subr.mxu0 0.0
        %2585 = vmatpush2.msra.mxu0 0.0
        %2586 = vmatprep.subr.mxu0 0.0
        %2587 = vmatpush2.msra.mxu0 0.0
        %2588 = vmatprep.subr.mxu0 0.0
        %2589 = vmatpush2.msra.mxu0 0.0
        %2590 = vmatprep.subr.mxu0 0.0
        %2591 = vmatpush2.msra.mxu0 0.0
        %2592 = vmatprep.subr.mxu0 0.0
        %2593 = vmatpush2.msra.mxu0 0.0
        %2594 = vmatprep.subr.mxu0 0.0
        %2595 = vmatpush2.msra.mxu0 0.0
        %2596 = vmatprep.mubr.f32.mxu0 0.0
        %v2597 = vand.u32 %v2102, 4294901760
        %2598 = vmatmul.mubr.f32.gmra.mxu0 %v2597
        %v2599 = vpop.f32.mrf.mxu0
        %v2600 = vadd.f32 %v2521, %v2599
        %v2601 = vpop.f32.mrf.mxu0
        %2602 = vmatprep.mubr.f32.mxu0 0.0
        %v2603 = vand.u32 %v2105, 4294901760
        %2604 = vmatmul.mubr.f32.gmra.mxu0 %v2603
        %v2605 = vpop.f32.mrf.mxu0
        %v2606 = vadd.f32 %v2527, %v2605
        %v2607 = vpop.f32.mrf.mxu0
        %2608 = vdwg.mxu0
        %v2609 = vsel %vm388, %v2092, -inf
        %2610 = vmax.xlane.f32.xlu0 %v2609
        %v2611 = vpop.xlane.xlu0 %2610
        %v2612 = vsel %vm388, %v2098, -inf
        %2613 = vmax.xlane.f32.xlu0 %v2612
        %v2614 = vpop.xlane.xlu0 %2613
        %v2615 = vsel %vm388, %v2600, -inf
        %2616 = vmax.xlane.f32.xlu0 %v2615
        %v2617 = vpop.xlane.xlu0 %2616
        %v2618 = vsel %vm388, %v2606, -inf
        %2619 = vmax.xlane.f32.xlu0 %v2618
        %v2620 = vpop.xlane.xlu0 %2619
        %v2621 = vsub.f32 %v2092, %v2611
        %v2622 = vsub.f32 %v2098, %v2614
        %v2623 = vsub.f32 %v2600, %v2617
        %v2624 = vsub.f32 %v2606, %v2620
        %v2625 = vmul.f32 %v2621, 1.442695
        %v2626 = vpow.pop %v2625
        %v2627 = vmul.f32 %v2622, 1.442695
        %v2628 = vpow.pop %v2627
        %v2629 = vmul.f32 %v2623, 1.442695
        %v2630 = vpow.pop %v2629
        %v2631 = vmul.f32 %v2624, 1.442695
        %v2632 = vpow.pop %v2631
        %v2633 = vsel %vm388, %v2626, 0.0
        %2634 = vadd.xlane.f32.xlu0 %v2633
        %v2635 = vpop.xlane.xlu0 %2634
        %v2636 = vsel %vm388, %v2628, 0.0
        %2637 = vadd.xlane.f32.xlu0 %v2636
        %v2638 = vpop.xlane.xlu0 %2637
        %v2639 = vsel %vm388, %v2630, 0.0
        %2640 = vadd.xlane.f32.xlu0 %v2639
        %v2641 = vpop.xlane.xlu0 %2640
        %v2642 = vsel %vm388, %v2632, 0.0
        %2643 = vadd.xlane.f32.xlu0 %v2642
        %v2644 = vpop.xlane.xlu0 %2643
        %v2645 = vrcp.pop %v2635
        %v2646 = vmul.f32 %v2626, %v2645
        %v2647 = vrcp.pop %v2638
        %v2648 = vmul.f32 %v2628, %v2647
        %v2649 = vrcp.pop %v2641
        %v2650 = vmul.f32 %v2630, %v2649
        %v2651 = vrcp.pop %v2644
        %v2652 = vmul.f32 %v2632, %v2651
        %2655 = vrot.lane.b32.xlu0 %v1572, 112
        %v2656 = vpop.permute.xlu0 %2655
        %2657 = vrot.lane.b32.xlu0 %v1578, 112
        %v2658 = vpop.permute.xlu0 %2657
        %v2662 = vsel %vm388, %v2646, 0
        %v2665 = vsel %vm388, %v2648, 0
        %2667 = vmatprep.subr.mxu0 0.0
        %2668 = vmatpush1.msra.mxu0 0.0
        %2669 = vmatprep.subr.mxu0 0.0
        %2670 = vmatpush1.msra.mxu0 0.0
        %2671 = vmatprep.subr.mxu0 0.0
        %2672 = vmatpush1.msra.mxu0 0.0
        %2673 = vmatprep.subr.mxu0 0.0
        %2674 = vmatpush1.msra.mxu0 0.0
        %2675 = vmatprep.subr.mxu0 0.0
        %2676 = vmatpush1.msra.mxu0 0.0
        %2677 = vmatprep.subr.mxu0 0.0
        %2678 = vmatpush1.msra.mxu0 0.0
        %2679 = vmatprep.subr.mxu0 0.0
        %2680 = vmatpush1.msra.mxu0 0.0
        %2681 = vmatprep.subr.mxu0 0.0
        %2682 = vmatpush1.msra.mxu0 0.0
        %2683 = vmatprep.subr.mxu0 0.0
        %2684 = vmatpush1.msra.mxu0 0.0
        %2685 = vmatprep.subr.mxu0 0.0
        %2686 = vmatpush1.msra.mxu0 0.0
        %2687 = vmatprep.subr.mxu0 0.0
        %2688 = vmatpush1.msra.mxu0 0.0
        %2689 = vmatprep.subr.mxu0 0.0
        %2690 = vmatpush1.msra.mxu0 0.0
        %2691 = vmatprep.subr.mxu0 0.0
        %2692 = vmatpush1.msra.mxu0 0.0
        %2693 = vmatprep.subr.mxu0 0.0
        %2694 = vmatpush1.msra.mxu0 0.0
        %2695 = vmatprep.subr.mxu0 0.0
        %v2696 = vand.u32 %v2658, 4294901760
        %2697 = vmatpush1.msra.mxu0 %v2696
        %2698 = vmatprep.subr.mxu0 0.0
        %v2699 = vand.u32 %v2656, 4294901760
        %2700 = vmatpush1.msra.mxu0 %v2699
        %2701 = vmatprep.subr.mxu0 0.0
        %2702 = vmatpush2.msra.mxu0 0.0
        %2703 = vmatprep.subr.mxu0 0.0
        %2704 = vmatpush2.msra.mxu0 0.0
        %2705 = vmatprep.subr.mxu0 0.0
        %2706 = vmatpush2.msra.mxu0 0.0
        %2707 = vmatprep.subr.mxu0 0.0
        %2708 = vmatpush2.msra.mxu0 0.0
        %2709 = vmatprep.subr.mxu0 0.0
        %2710 = vmatpush2.msra.mxu0 0.0
        %2711 = vmatprep.subr.mxu0 0.0
        %2712 = vmatpush2.msra.mxu0 0.0
        %2713 = vmatprep.subr.mxu0 0.0
        %2714 = vmatpush2.msra.mxu0 0.0
        %2715 = vmatprep.subr.mxu0 0.0
        %2716 = vmatpush2.msra.mxu0 0.0
        %2717 = vmatprep.subr.mxu0 0.0
        %2718 = vmatpush2.msra.mxu0 0.0
        %2719 = vmatprep.subr.mxu0 0.0
        %2720 = vmatpush2.msra.mxu0 0.0
        %2721 = vmatprep.subr.mxu0 0.0
        %2722 = vmatpush2.msra.mxu0 0.0
        %2723 = vmatprep.subr.mxu0 0.0
        %2724 = vmatpush2.msra.mxu0 0.0
        %2725 = vmatprep.subr.mxu0 0.0
        %2726 = vmatpush2.msra.mxu0 0.0
        %2727 = vmatprep.subr.mxu0 0.0
        %2728 = vmatpush2.msra.mxu0 0.0
        %2729 = vmatprep.subr.mxu0 0.0
        %2730 = vmatpush2.msra.mxu0 0.0
        %2731 = vmatprep.subr.mxu0 0.0
        %2732 = vmatpush2.msra.mxu0 0.0
        %2733 = vmatprep.mubr.f32.mxu0 0.0
        %v2734 = vand.u32 %v2662, 4294901760
        %v2735 = vsub.f32 %v2662, %v2734
        %v2736 = vand.u32 %v2735, 4294901760
        %v2737 = vsub.f32 %v2735, %v2736
        %v2738 = vand.u32 %v2737, 4294901760
        %2739 = vmatmul.mubr.f32.gmra.mxu0 %v2738
        %v2740 = vpop.f32.mrf.mxu0
        %v2741 = vadd.f32 0.0, %v2740
        %v2742 = vpop.f32.mrf.mxu0
        %2743 = vmatprep.mubr.f32.mxu0 0.0
        %v2744 = vand.u32 %v2665, 4294901760
        %v2745 = vsub.f32 %v2665, %v2744
        %v2746 = vand.u32 %v2745, 4294901760
        %v2747 = vsub.f32 %v2745, %v2746
        %v2748 = vand.u32 %v2747, 4294901760
        %2749 = vmatmul.mubr.f32.gmra.mxu0 %v2748
        %v2750 = vpop.f32.mrf.mxu0
        %v2751 = vadd.f32 0.0, %v2750
        %v2752 = vpop.f32.mrf.mxu0
        %2753 = vdwg.mxu0
        %2754 = vmatprep.subr.mxu0 0.0
        %2755 = vmatpush1.msra.mxu0 0.0
        %2756 = vmatprep.subr.mxu0 0.0
        %2757 = vmatpush1.msra.mxu0 0.0
        %2758 = vmatprep.subr.mxu0 0.0
        %2759 = vmatpush1.msra.mxu0 0.0
        %2760 = vmatprep.subr.mxu0 0.0
        %2761 = vmatpush1.msra.mxu0 0.0
        %2762 = vmatprep.subr.mxu0 0.0
        %2763 = vmatpush1.msra.mxu0 0.0
        %2764 = vmatprep.subr.mxu0 0.0
        %2765 = vmatpush1.msra.mxu0 0.0
        %2766 = vmatprep.subr.mxu0 0.0
        %2767 = vmatpush1.msra.mxu0 0.0
        %2768 = vmatprep.subr.mxu0 0.0
        %2769 = vmatpush1.msra.mxu0 0.0
        %2770 = vmatprep.subr.mxu0 0.0
        %2771 = vmatpush1.msra.mxu0 0.0
        %2772 = vmatprep.subr.mxu0 0.0
        %2773 = vmatpush1.msra.mxu0 0.0
        %2774 = vmatprep.subr.mxu0 0.0
        %2775 = vmatpush1.msra.mxu0 0.0
        %2776 = vmatprep.subr.mxu0 0.0
        %2777 = vmatpush1.msra.mxu0 0.0
        %2778 = vmatprep.subr.mxu0 0.0
        %2779 = vmatpush1.msra.mxu0 0.0
        %2780 = vmatprep.subr.mxu0 0.0
        %2781 = vmatpush1.msra.mxu0 0.0
        %2782 = vmatprep.subr.mxu0 0.0
        %v2783 = vand.u32 %v2658, 4294901760
        %v2784 = vsub.f32 %v2658, %v2783
        %v2785 = vand.u32 %v2784, 4294901760
        %v2786 = vsub.f32 %v2784, %v2785
        %v2787 = vand.u32 %v2786, 4294901760
        %2788 = vmatpush1.msra.mxu0 %v2787
        %2789 = vmatprep.subr.mxu0 0.0
        %v2790 = vand.u32 %v2656, 4294901760
        %v2791 = vsub.f32 %v2656, %v2790
        %v2792 = vand.u32 %v2791, 4294901760
        %v2793 = vsub.f32 %v2791, %v2792
        %v2794 = vand.u32 %v2793, 4294901760
        %2795 = vmatpush1.msra.mxu0 %v2794
        %2796 = vmatprep.subr.mxu0 0.0
        %2797 = vmatpush2.msra.mxu0 0.0
        %2798 = vmatprep.subr.mxu0 0.0
        %2799 = vmatpush2.msra.mxu0 0.0
        %2800 = vmatprep.subr.mxu0 0.0
        %2801 = vmatpush2.msra.mxu0 0.0
        %2802 = vmatprep.subr.mxu0 0.0
        %2803 = vmatpush2.msra.mxu0 0.0
        %2804 = vmatprep.subr.mxu0 0.0
        %2805 = vmatpush2.msra.mxu0 0.0
        %2806 = vmatprep.subr.mxu0 0.0
        %2807 = vmatpush2.msra.mxu0 0.0
        %2808 = vmatprep.subr.mxu0 0.0
        %2809 = vmatpush2.msra.mxu0 0.0
        %2810 = vmatprep.subr.mxu0 0.0
        %2811 = vmatpush2.msra.mxu0 0.0
        %2812 = vmatprep.subr.mxu0 0.0
        %2813 = vmatpush2.msra.mxu0 0.0
        %2814 = vmatprep.subr.mxu0 0.0
        %2815 = vmatpush2.msra.mxu0 0.0
        %2816 = vmatprep.subr.mxu0 0.0
        %2817 = vmatpush2.msra.mxu0 0.0
        %2818 = vmatprep.subr.mxu0 0.0
        %2819 = vmatpush2.msra.mxu0 0.0
        %2820 = vmatprep.subr.mxu0 0.0
        %2821 = vmatpush2.msra.mxu0 0.0
        %2822 = vmatprep.subr.mxu0 0.0
        %2823 = vmatpush2.msra.mxu0 0.0
        %2824 = vmatprep.subr.mxu0 0.0
        %2825 = vmatpush2.msra.mxu0 0.0
        %2826 = vmatprep.subr.mxu0 0.0
        %2827 = vmatpush2.msra.mxu0 0.0
        %2828 = vmatprep.mubr.f32.mxu0 0.0
        %v2829 = vand.u32 %v2662, 4294901760
        %2830 = vmatmul.mubr.f32.gmra.mxu0 %v2829
        %v2831 = vpop.f32.mrf.mxu0
        %v2832 = vadd.f32 %v2741, %v2831
        %v2833 = vpop.f32.mrf.mxu0
        %2834 = vmatprep.mubr.f32.mxu0 0.0
        %v2835 = vand.u32 %v2665, 4294901760
        %2836 = vmatmul.mubr.f32.gmra.mxu0 %v2835
        %v2837 = vpop.f32.mrf.mxu0
        %v2838 = vadd.f32 %v2751, %v2837
        %v2839 = vpop.f32.mrf.mxu0
        %2840 = vdwg.mxu0
        %2841 = vmatprep.subr.mxu0 0.0
        %2842 = vmatpush1.msra.mxu0 0.0
        %2843 = vmatprep.subr.mxu0 0.0
        %2844 = vmatpush1.msra.mxu0 0.0
        %2845 = vmatprep.subr.mxu0 0.0
        %2846 = vmatpush1.msra.mxu0 0.0
        %2847 = vmatprep.subr.mxu0 0.0
        %2848 = vmatpush1.msra.mxu0 0.0
        %2849 = vmatprep.subr.mxu0 0.0
        %2850 = vmatpush1.msra.mxu0 0.0
        %2851 = vmatprep.subr.mxu0 0.0
        %2852 = vmatpush1.msra.mxu0 0.0
        %2853 = vmatprep.subr.mxu0 0.0
        %2854 = vmatpush1.msra.mxu0 0.0
        %2855 = vmatprep.subr.mxu0 0.0
        %2856 = vmatpush1.msra.mxu0 0.0
        %2857 = vmatprep.subr.mxu0 0.0
        %2858 = vmatpush1.msra.mxu0 0.0
        %2859 = vmatprep.subr.mxu0 0.0
        %2860 = vmatpush1.msra.mxu0 0.0
        %2861 = vmatprep.subr.mxu0 0.0
        %2862 = vmatpush1.msra.mxu0 0.0
        %2863 = vmatprep.subr.mxu0 0.0
        %2864 = vmatpush1.msra.mxu0 0.0
        %2865 = vmatprep.subr.mxu0 0.0
        %2866 = vmatpush1.msra.mxu0 0.0
        %2867 = vmatprep.subr.mxu0 0.0
        %2868 = vmatpush1.msra.mxu0 0.0
        %2869 = vmatprep.subr.mxu0 0.0
        %v2870 = vand.u32 %v2658, 4294901760
        %v2871 = vsub.f32 %v2658, %v2870
        %2872 = vmatpush1.msra.mxu0 %v2871
        %2873 = vmatprep.subr.mxu0 0.0
        %v2874 = vand.u32 %v2656, 4294901760
        %v2875 = vsub.f32 %v2656, %v2874
        %2876 = vmatpush1.msra.mxu0 %v2875
        %2877 = vmatprep.subr.mxu0 0.0
        %2878 = vmatpush2.msra.mxu0 0.0
        %2879 = vmatprep.subr.mxu0 0.0
        %2880 = vmatpush2.msra.mxu0 0.0
        %2881 = vmatprep.subr.mxu0 0.0
        %2882 = vmatpush2.msra.mxu0 0.0
        %2883 = vmatprep.subr.mxu0 0.0
        %2884 = vmatpush2.msra.mxu0 0.0
        %2885 = vmatprep.subr.mxu0 0.0
        %2886 = vmatpush2.msra.mxu0 0.0
        %2887 = vmatprep.subr.mxu0 0.0
        %2888 = vmatpush2.msra.mxu0 0.0
        %2889 = vmatprep.subr.mxu0 0.0
        %2890 = vmatpush2.msra.mxu0 0.0
        %2891 = vmatprep.subr.mxu0 0.0
        %2892 = vmatpush2.msra.mxu0 0.0
        %2893 = vmatprep.subr.mxu0 0.0
        %2894 = vmatpush2.msra.mxu0 0.0
        %2895 = vmatprep.subr.mxu0 0.0
        %2896 = vmatpush2.msra.mxu0 0.0
        %2897 = vmatprep.subr.mxu0 0.0
        %2898 = vmatpush2.msra.mxu0 0.0
        %2899 = vmatprep.subr.mxu0 0.0
        %2900 = vmatpush2.msra.mxu0 0.0
        %2901 = vmatprep.subr.mxu0 0.0
        %2902 = vmatpush2.msra.mxu0 0.0
        %2903 = vmatprep.subr.mxu0 0.0
        %2904 = vmatpush2.msra.mxu0 0.0
        %2905 = vmatprep.subr.mxu0 0.0
        %2906 = vmatpush2.msra.mxu0 0.0
        %2907 = vmatprep.subr.mxu0 0.0
        %2908 = vmatpush2.msra.mxu0 0.0
        %2909 = vmatprep.mubr.f32.mxu0 0.0
        %v2910 = vand.u32 %v2662, 4294901760
        %v2911 = vsub.f32 %v2662, %v2910
        %2912 = vmatmul.mubr.f32.gmra.mxu0 %v2911
        %v2913 = vpop.f32.mrf.mxu0
        %v2914 = vadd.f32 %v2832, %v2913
        %v2915 = vpop.f32.mrf.mxu0
        %2916 = vmatprep.mubr.f32.mxu0 0.0
        %v2917 = vand.u32 %v2665, 4294901760
        %v2918 = vsub.f32 %v2665, %v2917
        %2919 = vmatmul.mubr.f32.gmra.mxu0 %v2918
        %v2920 = vpop.f32.mrf.mxu0
        %v2921 = vadd.f32 %v2838, %v2920
        %v2922 = vpop.f32.mrf.mxu0
        %2923 = vdwg.mxu0
        %2924 = vmatprep.subr.mxu0 0.0
        %2925 = vmatpush1.msra.mxu0 0.0
        %2926 = vmatprep.subr.mxu0 0.0
        %2927 = vmatpush1.msra.mxu0 0.0
        %2928 = vmatprep.subr.mxu0 0.0
        %2929 = vmatpush1.msra.mxu0 0.0
        %2930 = vmatprep.subr.mxu0 0.0
        %2931 = vmatpush1.msra.mxu0 0.0
        %2932 = vmatprep.subr.mxu0 0.0
        %2933 = vmatpush1.msra.mxu0 0.0
        %2934 = vmatprep.subr.mxu0 0.0
        %2935 = vmatpush1.msra.mxu0 0.0
        %2936 = vmatprep.subr.mxu0 0.0
        %2937 = vmatpush1.msra.mxu0 0.0
        %2938 = vmatprep.subr.mxu0 0.0
        %2939 = vmatpush1.msra.mxu0 0.0
        %2940 = vmatprep.subr.mxu0 0.0
        %2941 = vmatpush1.msra.mxu0 0.0
        %2942 = vmatprep.subr.mxu0 0.0
        %2943 = vmatpush1.msra.mxu0 0.0
        %2944 = vmatprep.subr.mxu0 0.0
        %2945 = vmatpush1.msra.mxu0 0.0
        %2946 = vmatprep.subr.mxu0 0.0
        %2947 = vmatpush1.msra.mxu0 0.0
        %2948 = vmatprep.subr.mxu0 0.0
        %2949 = vmatpush1.msra.mxu0 0.0
        %2950 = vmatprep.subr.mxu0 0.0
        %2951 = vmatpush1.msra.mxu0 0.0
        %2952 = vmatprep.subr.mxu0 0.0
        %v2953 = vand.u32 %v2658, 4294901760
        %2954 = vmatpush1.msra.mxu0 %v2953
        %2955 = vmatprep.subr.mxu0 0.0
        %v2956 = vand.u32 %v2656, 4294901760
        %2957 = vmatpush1.msra.mxu0 %v2956
        %2958 = vmatprep.subr.mxu0 0.0
        %2959 = vmatpush2.msra.mxu0 0.0
        %2960 = vmatprep.subr.mxu0 0.0
        %2961 = vmatpush2.msra.mxu0 0.0
        %2962 = vmatprep.subr.mxu0 0.0
        %2963 = vmatpush2.msra.mxu0 0.0
        %2964 = vmatprep.subr.mxu0 0.0
        %2965 = vmatpush2.msra.mxu0 0.0
        %2966 = vmatprep.subr.mxu0 0.0
        %2967 = vmatpush2.msra.mxu0 0.0
        %2968 = vmatprep.subr.mxu0 0.0
        %2969 = vmatpush2.msra.mxu0 0.0
        %2970 = vmatprep.subr.mxu0 0.0
        %2971 = vmatpush2.msra.mxu0 0.0
        %2972 = vmatprep.subr.mxu0 0.0
        %2973 = vmatpush2.msra.mxu0 0.0
        %2974 = vmatprep.subr.mxu0 0.0
        %2975 = vmatpush2.msra.mxu0 0.0
        %2976 = vmatprep.subr.mxu0 0.0
        %2977 = vmatpush2.msra.mxu0 0.0
        %2978 = vmatprep.subr.mxu0 0.0
        %2979 = vmatpush2.msra.mxu0 0.0
        %2980 = vmatprep.subr.mxu0 0.0
        %2981 = vmatpush2.msra.mxu0 0.0
        %2982 = vmatprep.subr.mxu0 0.0
        %2983 = vmatpush2.msra.mxu0 0.0
        %2984 = vmatprep.subr.mxu0 0.0
        %2985 = vmatpush2.msra.mxu0 0.0
        %2986 = vmatprep.subr.mxu0 0.0
        %2987 = vmatpush2.msra.mxu0 0.0
        %2988 = vmatprep.subr.mxu0 0.0
        %2989 = vmatpush2.msra.mxu0 0.0
        %2990 = vmatprep.mubr.f32.mxu0 0.0
        %v2991 = vand.u32 %v2662, 4294901760
        %v2992 = vsub.f32 %v2662, %v2991
        %v2993 = vand.u32 %v2992, 4294901760
        %2994 = vmatmul.mubr.f32.gmra.mxu0 %v2993
        %v2995 = vpop.f32.mrf.mxu0
        %v2996 = vadd.f32 %v2914, %v2995
        %v2997 = vpop.f32.mrf.mxu0
        %2998 = vmatprep.mubr.f32.mxu0 0.0
        %v2999 = vand.u32 %v2665, 4294901760
        %v3000 = vsub.f32 %v2665, %v2999
        %v3001 = vand.u32 %v3000, 4294901760
        %3002 = vmatmul.mubr.f32.gmra.mxu0 %v3001
        %v3003 = vpop.f32.mrf.mxu0
        %v3004 = vadd.f32 %v2921, %v3003
        %v3005 = vpop.f32.mrf.mxu0
        %3006 = vdwg.mxu0
        %3007 = vmatprep.subr.mxu0 0.0
        %3008 = vmatpush1.msra.mxu0 0.0
        %3009 = vmatprep.subr.mxu0 0.0
        %3010 = vmatpush1.msra.mxu0 0.0
        %3011 = vmatprep.subr.mxu0 0.0
        %3012 = vmatpush1.msra.mxu0 0.0
        %3013 = vmatprep.subr.mxu0 0.0
        %3014 = vmatpush1.msra.mxu0 0.0
        %3015 = vmatprep.subr.mxu0 0.0
        %3016 = vmatpush1.msra.mxu0 0.0
        %3017 = vmatprep.subr.mxu0 0.0
        %3018 = vmatpush1.msra.mxu0 0.0
        %3019 = vmatprep.subr.mxu0 0.0
        %3020 = vmatpush1.msra.mxu0 0.0
        %3021 = vmatprep.subr.mxu0 0.0
        %3022 = vmatpush1.msra.mxu0 0.0
        %3023 = vmatprep.subr.mxu0 0.0
        %3024 = vmatpush1.msra.mxu0 0.0
        %3025 = vmatprep.subr.mxu0 0.0
        %3026 = vmatpush1.msra.mxu0 0.0
        %3027 = vmatprep.subr.mxu0 0.0
        %3028 = vmatpush1.msra.mxu0 0.0
        %3029 = vmatprep.subr.mxu0 0.0
        %3030 = vmatpush1.msra.mxu0 0.0
        %3031 = vmatprep.subr.mxu0 0.0
        %3032 = vmatpush1.msra.mxu0 0.0
        %3033 = vmatprep.subr.mxu0 0.0
        %3034 = vmatpush1.msra.mxu0 0.0
        %3035 = vmatprep.subr.mxu0 0.0
        %v3036 = vand.u32 %v2658, 4294901760
        %v3037 = vsub.f32 %v2658, %v3036
        %v3038 = vand.u32 %v3037, 4294901760
        %3039 = vmatpush1.msra.mxu0 %v3038
        %3040 = vmatprep.subr.mxu0 0.0
        %v3041 = vand.u32 %v2656, 4294901760
        %v3042 = vsub.f32 %v2656, %v3041
        %v3043 = vand.u32 %v3042, 4294901760
        %3044 = vmatpush1.msra.mxu0 %v3043
        %3045 = vmatprep.subr.mxu0 0.0
        %3046 = vmatpush2.msra.mxu0 0.0
        %3047 = vmatprep.subr.mxu0 0.0
        %3048 = vmatpush2.msra.mxu0 0.0
        %3049 = vmatprep.subr.mxu0 0.0
        %3050 = vmatpush2.msra.mxu0 0.0
        %3051 = vmatprep.subr.mxu0 0.0
        %3052 = vmatpush2.msra.mxu0 0.0
        %3053 = vmatprep.subr.mxu0 0.0
        %3054 = vmatpush2.msra.mxu0 0.0
        %3055 = vmatprep.subr.mxu0 0.0
        %3056 = vmatpush2.msra.mxu0 0.0
        %3057 = vmatprep.subr.mxu0 0.0
        %3058 = vmatpush2.msra.mxu0 0.0
        %3059 = vmatprep.subr.mxu0 0.0
        %3060 = vmatpush2.msra.mxu0 0.0
        %3061 = vmatprep.subr.mxu0 0.0
        %3062 = vmatpush2.msra.mxu0 0.0
        %3063 = vmatprep.subr.mxu0 0.0
        %3064 = vmatpush2.msra.mxu0 0.0
        %3065 = vmatprep.subr.mxu0 0.0
        %3066 = vmatpush2.msra.mxu0 0.0
        %3067 = vmatprep.subr.mxu0 0.0
        %3068 = vmatpush2.msra.mxu0 0.0
        %3069 = vmatprep.subr.mxu0 0.0
        %3070 = vmatpush2.msra.mxu0 0.0
        %3071 = vmatprep.subr.mxu0 0.0
        %3072 = vmatpush2.msra.mxu0 0.0
        %3073 = vmatprep.subr.mxu0 0.0
        %3074 = vmatpush2.msra.mxu0 0.0
        %3075 = vmatprep.subr.mxu0 0.0
        %3076 = vmatpush2.msra.mxu0 0.0
        %3077 = vmatprep.mubr.f32.mxu0 0.0
        %v3078 = vand.u32 %v2662, 4294901760
        %3079 = vmatmul.mubr.f32.gmra.mxu0 %v3078
        %v3080 = vpop.f32.mrf.mxu0
        %v3081 = vadd.f32 %v2996, %v3080
        %v3082 = vpop.f32.mrf.mxu0
        %3083 = vmatprep.mubr.f32.mxu0 0.0
        %v3084 = vand.u32 %v2665, 4294901760
        %3085 = vmatmul.mubr.f32.gmra.mxu0 %v3084
        %v3086 = vpop.f32.mrf.mxu0
        %v3087 = vadd.f32 %v3004, %v3086
        %v3088 = vpop.f32.mrf.mxu0
        %3089 = vdwg.mxu0
        %3090 = vmatprep.subr.mxu0 0.0
        %3091 = vmatpush1.msra.mxu0 0.0
        %3092 = vmatprep.subr.mxu0 0.0
        %3093 = vmatpush1.msra.mxu0 0.0
        %3094 = vmatprep.subr.mxu0 0.0
        %3095 = vmatpush1.msra.mxu0 0.0
        %3096 = vmatprep.subr.mxu0 0.0
        %3097 = vmatpush1.msra.mxu0 0.0
        %3098 = vmatprep.subr.mxu0 0.0
        %3099 = vmatpush1.msra.mxu0 0.0
        %3100 = vmatprep.subr.mxu0 0.0
        %3101 = vmatpush1.msra.mxu0 0.0
        %3102 = vmatprep.subr.mxu0 0.0
        %3103 = vmatpush1.msra.mxu0 0.0
        %3104 = vmatprep.subr.mxu0 0.0
        %3105 = vmatpush1.msra.mxu0 0.0
        %3106 = vmatprep.subr.mxu0 0.0
        %3107 = vmatpush1.msra.mxu0 0.0
        %3108 = vmatprep.subr.mxu0 0.0
        %3109 = vmatpush1.msra.mxu0 0.0
        %3110 = vmatprep.subr.mxu0 0.0
        %3111 = vmatpush1.msra.mxu0 0.0
        %3112 = vmatprep.subr.mxu0 0.0
        %3113 = vmatpush1.msra.mxu0 0.0
        %3114 = vmatprep.subr.mxu0 0.0
        %3115 = vmatpush1.msra.mxu0 0.0
        %3116 = vmatprep.subr.mxu0 0.0
        %3117 = vmatpush1.msra.mxu0 0.0
        %3118 = vmatprep.subr.mxu0 0.0
        %v3119 = vand.u32 %v2658, 4294901760
        %3120 = vmatpush1.msra.mxu0 %v3119
        %3121 = vmatprep.subr.mxu0 0.0
        %v3122 = vand.u32 %v2656, 4294901760
        %3123 = vmatpush1.msra.mxu0 %v3122
        %3124 = vmatprep.subr.mxu0 0.0
        %3125 = vmatpush2.msra.mxu0 0.0
        %3126 = vmatprep.subr.mxu0 0.0
        %3127 = vmatpush2.msra.mxu0 0.0
        %3128 = vmatprep.subr.mxu0 0.0
        %3129 = vmatpush2.msra.mxu0 0.0
        %3130 = vmatprep.subr.mxu0 0.0
        %3131 = vmatpush2.msra.mxu0 0.0
        %3132 = vmatprep.subr.mxu0 0.0
        %3133 = vmatpush2.msra.mxu0 0.0
        %3134 = vmatprep.subr.mxu0 0.0
        %3135 = vmatpush2.msra.mxu0 0.0
        %3136 = vmatprep.subr.mxu0 0.0
        %3137 = vmatpush2.msra.mxu0 0.0
        %3138 = vmatprep.subr.mxu0 0.0
        %3139 = vmatpush2.msra.mxu0 0.0
        %3140 = vmatprep.subr.mxu0 0.0
        %3141 = vmatpush2.msra.mxu0 0.0
        %3142 = vmatprep.subr.mxu0 0.0
        %3143 = vmatpush2.msra.mxu0 0.0
        %3144 = vmatprep.subr.mxu0 0.0
        %3145 = vmatpush2.msra.mxu0 0.0
        %3146 = vmatprep.subr.mxu0 0.0
        %3147 = vmatpush2.msra.mxu0 0.0
        %3148 = vmatprep.subr.mxu0 0.0
        %3149 = vmatpush2.msra.mxu0 0.0
        %3150 = vmatprep.subr.mxu0 0.0
        %3151 = vmatpush2.msra.mxu0 0.0
        %3152 = vmatprep.subr.mxu0 0.0
        %3153 = vmatpush2.msra.mxu0 0.0
        %3154 = vmatprep.subr.mxu0 0.0
        %3155 = vmatpush2.msra.mxu0 0.0
        %3156 = vmatprep.mubr.f32.mxu0 0.0
        %v3157 = vand.u32 %v2662, 4294901760
        %3158 = vmatmul.mubr.f32.gmra.mxu0 %v3157
        %v3159 = vpop.f32.mrf.mxu0
        %v3160 = vadd.f32 %v3081, %v3159
        %v3161 = vpop.f32.mrf.mxu0
        %3162 = vmatprep.mubr.f32.mxu0 0.0
        %v3163 = vand.u32 %v2665, 4294901760
        %3164 = vmatmul.mubr.f32.gmra.mxu0 %v3163
        %v3165 = vpop.f32.mrf.mxu0
        %v3166 = vadd.f32 %v3087, %v3165
        %v3167 = vpop.f32.mrf.mxu0
        %3168 = vdwg.mxu0
        %3171 = vrot.lane.b32.xlu0 %v1584, 112
        %v3172 = vpop.permute.xlu0 %3171
        %3173 = vrot.lane.b32.xlu0 %v1590, 112
        %v3174 = vpop.permute.xlu0 %3173
        %v3178 = vsel %vm388, %v2650, 0
        %v3181 = vsel %vm388, %v2652, 0
        %3183 = vmatprep.subr.mxu0 0.0
        %3184 = vmatpush1.msra.mxu0 0.0
        %3185 = vmatprep.subr.mxu0 0.0
        %3186 = vmatpush1.msra.mxu0 0.0
        %3187 = vmatprep.subr.mxu0 0.0
        %3188 = vmatpush1.msra.mxu0 0.0
        %3189 = vmatprep.subr.mxu0 0.0
        %3190 = vmatpush1.msra.mxu0 0.0
        %3191 = vmatprep.subr.mxu0 0.0
        %3192 = vmatpush1.msra.mxu0 0.0
        %3193 = vmatprep.subr.mxu0 0.0
        %3194 = vmatpush1.msra.mxu0 0.0
        %3195 = vmatprep.subr.mxu0 0.0
        %3196 = vmatpush1.msra.mxu0 0.0
        %3197 = vmatprep.subr.mxu0 0.0
        %3198 = vmatpush1.msra.mxu0 0.0
        %3199 = vmatprep.subr.mxu0 0.0
        %3200 = vmatpush1.msra.mxu0 0.0
        %3201 = vmatprep.subr.mxu0 0.0
        %3202 = vmatpush1.msra.mxu0 0.0
        %3203 = vmatprep.subr.mxu0 0.0
        %3204 = vmatpush1.msra.mxu0 0.0
        %3205 = vmatprep.subr.mxu0 0.0
        %3206 = vmatpush1.msra.mxu0 0.0
        %3207 = vmatprep.subr.mxu0 0.0
        %3208 = vmatpush1.msra.mxu0 0.0
        %3209 = vmatprep.subr.mxu0 0.0
        %3210 = vmatpush1.msra.mxu0 0.0
        %3211 = vmatprep.subr.mxu0 0.0
        %v3212 = vand.u32 %v3174, 4294901760
        %3213 = vmatpush1.msra.mxu0 %v3212
        %3214 = vmatprep.subr.mxu0 0.0
        %v3215 = vand.u32 %v3172, 4294901760
        %3216 = vmatpush1.msra.mxu0 %v3215
        %3217 = vmatprep.subr.mxu0 0.0
        %3218 = vmatpush2.msra.mxu0 0.0
        %3219 = vmatprep.subr.mxu0 0.0
        %3220 = vmatpush2.msra.mxu0 0.0
        %3221 = vmatprep.subr.mxu0 0.0
        %3222 = vmatpush2.msra.mxu0 0.0
        %3223 = vmatprep.subr.mxu0 0.0
        %3224 = vmatpush2.msra.mxu0 0.0
        %3225 = vmatprep.subr.mxu0 0.0
        %3226 = vmatpush2.msra.mxu0 0.0
        %3227 = vmatprep.subr.mxu0 0.0
        %3228 = vmatpush2.msra.mxu0 0.0
        %3229 = vmatprep.subr.mxu0 0.0
        %3230 = vmatpush2.msra.mxu0 0.0
        %3231 = vmatprep.subr.mxu0 0.0
        %3232 = vmatpush2.msra.mxu0 0.0
        %3233 = vmatprep.subr.mxu0 0.0
        %3234 = vmatpush2.msra.mxu0 0.0
        %3235 = vmatprep.subr.mxu0 0.0
        %3236 = vmatpush2.msra.mxu0 0.0
        %3237 = vmatprep.subr.mxu0 0.0
        %3238 = vmatpush2.msra.mxu0 0.0
        %3239 = vmatprep.subr.mxu0 0.0
        %3240 = vmatpush2.msra.mxu0 0.0
        %3241 = vmatprep.subr.mxu0 0.0
        %3242 = vmatpush2.msra.mxu0 0.0
        %3243 = vmatprep.subr.mxu0 0.0
        %3244 = vmatpush2.msra.mxu0 0.0
        %3245 = vmatprep.subr.mxu0 0.0
        %3246 = vmatpush2.msra.mxu0 0.0
        %3247 = vmatprep.subr.mxu0 0.0
        %3248 = vmatpush2.msra.mxu0 0.0
        %3249 = vmatprep.mubr.f32.mxu0 0.0
        %v3250 = vand.u32 %v3178, 4294901760
        %v3251 = vsub.f32 %v3178, %v3250
        %v3252 = vand.u32 %v3251, 4294901760
        %v3253 = vsub.f32 %v3251, %v3252
        %v3254 = vand.u32 %v3253, 4294901760
        %3255 = vmatmul.mubr.f32.gmra.mxu0 %v3254
        %v3256 = vpop.f32.mrf.mxu0
        %v3257 = vadd.f32 0.0, %v3256
        %v3258 = vpop.f32.mrf.mxu0
        %3259 = vmatprep.mubr.f32.mxu0 0.0
        %v3260 = vand.u32 %v3181, 4294901760
        %v3261 = vsub.f32 %v3181, %v3260
        %v3262 = vand.u32 %v3261, 4294901760
        %v3263 = vsub.f32 %v3261, %v3262
        %v3264 = vand.u32 %v3263, 4294901760
        %3265 = vmatmul.mubr.f32.gmra.mxu0 %v3264
        %v3266 = vpop.f32.mrf.mxu0
        %v3267 = vadd.f32 0.0, %v3266
        %v3268 = vpop.f32.mrf.mxu0
        %3269 = vdwg.mxu0
        %3270 = vmatprep.subr.mxu0 0.0
        %3271 = vmatpush1.msra.mxu0 0.0
        %3272 = vmatprep.subr.mxu0 0.0
        %3273 = vmatpush1.msra.mxu0 0.0
        %3274 = vmatprep.subr.mxu0 0.0
        %3275 = vmatpush1.msra.mxu0 0.0
        %3276 = vmatprep.subr.mxu0 0.0
        %3277 = vmatpush1.msra.mxu0 0.0
        %3278 = vmatprep.subr.mxu0 0.0
        %3279 = vmatpush1.msra.mxu0 0.0
        %3280 = vmatprep.subr.mxu0 0.0
        %3281 = vmatpush1.msra.mxu0 0.0
        %3282 = vmatprep.subr.mxu0 0.0
        %3283 = vmatpush1.msra.mxu0 0.0
        %3284 = vmatprep.subr.mxu0 0.0
        %3285 = vmatpush1.msra.mxu0 0.0
        %3286 = vmatprep.subr.mxu0 0.0
        %3287 = vmatpush1.msra.mxu0 0.0
        %3288 = vmatprep.subr.mxu0 0.0
        %3289 = vmatpush1.msra.mxu0 0.0
        %3290 = vmatprep.subr.mxu0 0.0
        %3291 = vmatpush1.msra.mxu0 0.0
        %3292 = vmatprep.subr.mxu0 0.0
        %3293 = vmatpush1.msra.mxu0 0.0
        %3294 = vmatprep.subr.mxu0 0.0
        %3295 = vmatpush1.msra.mxu0 0.0
        %3296 = vmatprep.subr.mxu0 0.0
        %3297 = vmatpush1.msra.mxu0 0.0
        %3298 = vmatprep.subr.mxu0 0.0
        %v3299 = vand.u32 %v3174, 4294901760
        %v3300 = vsub.f32 %v3174, %v3299
        %v3301 = vand.u32 %v3300, 4294901760
        %v3302 = vsub.f32 %v3300, %v3301
        %v3303 = vand.u32 %v3302, 4294901760
        %3304 = vmatpush1.msra.mxu0 %v3303
        %3305 = vmatprep.subr.mxu0 0.0
        %v3306 = vand.u32 %v3172, 4294901760
        %v3307 = vsub.f32 %v3172, %v3306
        %v3308 = vand.u32 %v3307, 4294901760
        %v3309 = vsub.f32 %v3307, %v3308
        %v3310 = vand.u32 %v3309, 4294901760
        %3311 = vmatpush1.msra.mxu0 %v3310
        %3312 = vmatprep.subr.mxu0 0.0
        %3313 = vmatpush2.msra.mxu0 0.0
        %3314 = vmatprep.subr.mxu0 0.0
        %3315 = vmatpush2.msra.mxu0 0.0
        %3316 = vmatprep.subr.mxu0 0.0
        %3317 = vmatpush2.msra.mxu0 0.0
        %3318 = vmatprep.subr.mxu0 0.0
        %3319 = vmatpush2.msra.mxu0 0.0
        %3320 = vmatprep.subr.mxu0 0.0
        %3321 = vmatpush2.msra.mxu0 0.0
        %3322 = vmatprep.subr.mxu0 0.0
        %3323 = vmatpush2.msra.mxu0 0.0
        %3324 = vmatprep.subr.mxu0 0.0
        %3325 = vmatpush2.msra.mxu0 0.0
        %3326 = vmatprep.subr.mxu0 0.0
        %3327 = vmatpush2.msra.mxu0 0.0
        %3328 = vmatprep.subr.mxu0 0.0
        %3329 = vmatpush2.msra.mxu0 0.0
        %3330 = vmatprep.subr.mxu0 0.0
        %3331 = vmatpush2.msra.mxu0 0.0
        %3332 = vmatprep.subr.mxu0 0.0
        %3333 = vmatpush2.msra.mxu0 0.0
        %3334 = vmatprep.subr.mxu0 0.0
        %3335 = vmatpush2.msra.mxu0 0.0
        %3336 = vmatprep.subr.mxu0 0.0
        %3337 = vmatpush2.msra.mxu0 0.0
        %3338 = vmatprep.subr.mxu0 0.0
        %3339 = vmatpush2.msra.mxu0 0.0
        %3340 = vmatprep.subr.mxu0 0.0
        %3341 = vmatpush2.msra.mxu0 0.0
        %3342 = vmatprep.subr.mxu0 0.0
        %3343 = vmatpush2.msra.mxu0 0.0
        %3344 = vmatprep.mubr.f32.mxu0 0.0
        %v3345 = vand.u32 %v3178, 4294901760
        %3346 = vmatmul.mubr.f32.gmra.mxu0 %v3345
        %v3347 = vpop.f32.mrf.mxu0
        %v3348 = vadd.f32 %v3257, %v3347
        %v3349 = vpop.f32.mrf.mxu0
        %3350 = vmatprep.mubr.f32.mxu0 0.0
        %v3351 = vand.u32 %v3181, 4294901760
        %3352 = vmatmul.mubr.f32.gmra.mxu0 %v3351
        %v3353 = vpop.f32.mrf.mxu0
        %v3354 = vadd.f32 %v3267, %v3353
        %v3355 = vpop.f32.mrf.mxu0
        %3356 = vdwg.mxu0
        %3357 = vmatprep.subr.mxu0 0.0
        %3358 = vmatpush1.msra.mxu0 0.0
        %3359 = vmatprep.subr.mxu0 0.0
        %3360 = vmatpush1.msra.mxu0 0.0
        %3361 = vmatprep.subr.mxu0 0.0
        %3362 = vmatpush1.msra.mxu0 0.0
        %3363 = vmatprep.subr.mxu0 0.0
        %3364 = vmatpush1.msra.mxu0 0.0
        %3365 = vmatprep.subr.mxu0 0.0
        %3366 = vmatpush1.msra.mxu0 0.0
        %3367 = vmatprep.subr.mxu0 0.0
        %3368 = vmatpush1.msra.mxu0 0.0
        %3369 = vmatprep.subr.mxu0 0.0
        %3370 = vmatpush1.msra.mxu0 0.0
        %3371 = vmatprep.subr.mxu0 0.0
        %3372 = vmatpush1.msra.mxu0 0.0
        %3373 = vmatprep.subr.mxu0 0.0
        %3374 = vmatpush1.msra.mxu0 0.0
        %3375 = vmatprep.subr.mxu0 0.0
        %3376 = vmatpush1.msra.mxu0 0.0
        %3377 = vmatprep.subr.mxu0 0.0
        %3378 = vmatpush1.msra.mxu0 0.0
        %3379 = vmatprep.subr.mxu0 0.0
        %3380 = vmatpush1.msra.mxu0 0.0
        %3381 = vmatprep.subr.mxu0 0.0
        %3382 = vmatpush1.msra.mxu0 0.0
        %3383 = vmatprep.subr.mxu0 0.0
        %3384 = vmatpush1.msra.mxu0 0.0
        %3385 = vmatprep.subr.mxu0 0.0
        %v3386 = vand.u32 %v3174, 4294901760
        %v3387 = vsub.f32 %v3174, %v3386
        %3388 = vmatpush1.msra.mxu0 %v3387
        %3389 = vmatprep.subr.mxu0 0.0
        %v3390 = vand.u32 %v3172, 4294901760
        %v3391 = vsub.f32 %v3172, %v3390
        %3392 = vmatpush1.msra.mxu0 %v3391
        %3393 = vmatprep.subr.mxu0 0.0
        %3394 = vmatpush2.msra.mxu0 0.0
        %3395 = vmatprep.subr.mxu0 0.0
        %3396 = vmatpush2.msra.mxu0 0.0
        %3397 = vmatprep.subr.mxu0 0.0
        %3398 = vmatpush2.msra.mxu0 0.0
        %3399 = vmatprep.subr.mxu0 0.0
        %3400 = vmatpush2.msra.mxu0 0.0
        %3401 = vmatprep.subr.mxu0 0.0
        %3402 = vmatpush2.msra.mxu0 0.0
        %3403 = vmatprep.subr.mxu0 0.0
        %3404 = vmatpush2.msra.mxu0 0.0
        %3405 = vmatprep.subr.mxu0 0.0
        %3406 = vmatpush2.msra.mxu0 0.0
        %3407 = vmatprep.subr.mxu0 0.0
        %3408 = vmatpush2.msra.mxu0 0.0
        %3409 = vmatprep.subr.mxu0 0.0
        %3410 = vmatpush2.msra.mxu0 0.0
        %3411 = vmatprep.subr.mxu0 0.0
        %3412 = vmatpush2.msra.mxu0 0.0
        %3413 = vmatprep.subr.mxu0 0.0
        %3414 = vmatpush2.msra.mxu0 0.0
        %3415 = vmatprep.subr.mxu0 0.0
        %3416 = vmatpush2.msra.mxu0 0.0
        %3417 = vmatprep.subr.mxu0 0.0
        %3418 = vmatpush2.msra.mxu0 0.0
        %3419 = vmatprep.subr.mxu0 0.0
        %3420 = vmatpush2.msra.mxu0 0.0
        %3421 = vmatprep.subr.mxu0 0.0
        %3422 = vmatpush2.msra.mxu0 0.0
        %3423 = vmatprep.subr.mxu0 0.0
        %3424 = vmatpush2.msra.mxu0 0.0
        %3425 = vmatprep.mubr.f32.mxu0 0.0
        %v3426 = vand.u32 %v3178, 4294901760
        %v3427 = vsub.f32 %v3178, %v3426
        %3428 = vmatmul.mubr.f32.gmra.mxu0 %v3427
        %v3429 = vpop.f32.mrf.mxu0
        %v3430 = vadd.f32 %v3348, %v3429
        %v3431 = vpop.f32.mrf.mxu0
        %3432 = vmatprep.mubr.f32.mxu0 0.0
        %v3433 = vand.u32 %v3181, 4294901760
        %v3434 = vsub.f32 %v3181, %v3433
        %3435 = vmatmul.mubr.f32.gmra.mxu0 %v3434
        %v3436 = vpop.f32.mrf.mxu0
        %v3437 = vadd.f32 %v3354, %v3436
        %v3438 = vpop.f32.mrf.mxu0
        %3439 = vdwg.mxu0
        %3440 = vmatprep.subr.mxu0 0.0
        %3441 = vmatpush1.msra.mxu0 0.0
        %3442 = vmatprep.subr.mxu0 0.0
        %3443 = vmatpush1.msra.mxu0 0.0
        %3444 = vmatprep.subr.mxu0 0.0
        %3445 = vmatpush1.msra.mxu0 0.0
        %3446 = vmatprep.subr.mxu0 0.0
        %3447 = vmatpush1.msra.mxu0 0.0
        %3448 = vmatprep.subr.mxu0 0.0
        %3449 = vmatpush1.msra.mxu0 0.0
        %3450 = vmatprep.subr.mxu0 0.0
        %3451 = vmatpush1.msra.mxu0 0.0
        %3452 = vmatprep.subr.mxu0 0.0
        %3453 = vmatpush1.msra.mxu0 0.0
        %3454 = vmatprep.subr.mxu0 0.0
        %3455 = vmatpush1.msra.mxu0 0.0
        %3456 = vmatprep.subr.mxu0 0.0
        %3457 = vmatpush1.msra.mxu0 0.0
        %3458 = vmatprep.subr.mxu0 0.0
        %3459 = vmatpush1.msra.mxu0 0.0
        %3460 = vmatprep.subr.mxu0 0.0
        %3461 = vmatpush1.msra.mxu0 0.0
        %3462 = vmatprep.subr.mxu0 0.0
        %3463 = vmatpush1.msra.mxu0 0.0
        %3464 = vmatprep.subr.mxu0 0.0
        %3465 = vmatpush1.msra.mxu0 0.0
        %3466 = vmatprep.subr.mxu0 0.0
        %3467 = vmatpush1.msra.mxu0 0.0
        %3468 = vmatprep.subr.mxu0 0.0
        %v3469 = vand.u32 %v3174, 4294901760
        %3470 = vmatpush1.msra.mxu0 %v3469
        %3471 = vmatprep.subr.mxu0 0.0
        %v3472 = vand.u32 %v3172, 4294901760
        %3473 = vmatpush1.msra.mxu0 %v3472
        %3474 = vmatprep.subr.mxu0 0.0
        %3475 = vmatpush2.msra.mxu0 0.0
        %3476 = vmatprep.subr.mxu0 0.0
        %3477 = vmatpush2.msra.mxu0 0.0
        %3478 = vmatprep.subr.mxu0 0.0
        %3479 = vmatpush2.msra.mxu0 0.0
        %3480 = vmatprep.subr.mxu0 0.0
        %3481 = vmatpush2.msra.mxu0 0.0
        %3482 = vmatprep.subr.mxu0 0.0
        %3483 = vmatpush2.msra.mxu0 0.0
        %3484 = vmatprep.subr.mxu0 0.0
        %3485 = vmatpush2.msra.mxu0 0.0
        %3486 = vmatprep.subr.mxu0 0.0
        %3487 = vmatpush2.msra.mxu0 0.0
        %3488 = vmatprep.subr.mxu0 0.0
        %3489 = vmatpush2.msra.mxu0 0.0
        %3490 = vmatprep.subr.mxu0 0.0
        %3491 = vmatpush2.msra.mxu0 0.0
        %3492 = vmatprep.subr.mxu0 0.0
        %3493 = vmatpush2.msra.mxu0 0.0
        %3494 = vmatprep.subr.mxu0 0.0
        %3495 = vmatpush2.msra.mxu0 0.0
        %3496 = vmatprep.subr.mxu0 0.0
        %3497 = vmatpush2.msra.mxu0 0.0
        %3498 = vmatprep.subr.mxu0 0.0
        %3499 = vmatpush2.msra.mxu0 0.0
        %3500 = vmatprep.subr.mxu0 0.0
        %3501 = vmatpush2.msra.mxu0 0.0
        %3502 = vmatprep.subr.mxu0 0.0
        %3503 = vmatpush2.msra.mxu0 0.0
        %3504 = vmatprep.subr.mxu0 0.0
        %3505 = vmatpush2.msra.mxu0 0.0
        %3506 = vmatprep.mubr.f32.mxu0 0.0
        %v3507 = vand.u32 %v3178, 4294901760
        %v3508 = vsub.f32 %v3178, %v3507
        %v3509 = vand.u32 %v3508, 4294901760
        %3510 = vmatmul.mubr.f32.gmra.mxu0 %v3509
        %v3511 = vpop.f32.mrf.mxu0
        %v3512 = vadd.f32 %v3430, %v3511
        %v3513 = vpop.f32.mrf.mxu0
        %3514 = vmatprep.mubr.f32.mxu0 0.0
        %v3515 = vand.u32 %v3181, 4294901760
        %v3516 = vsub.f32 %v3181, %v3515
        %v3517 = vand.u32 %v3516, 4294901760
        %3518 = vmatmul.mubr.f32.gmra.mxu0 %v3517
        %v3519 = vpop.f32.mrf.mxu0
        %v3520 = vadd.f32 %v3437, %v3519
        %v3521 = vpop.f32.mrf.mxu0
        %3522 = vdwg.mxu0
        %3523 = vmatprep.subr.mxu0 0.0
        %3524 = vmatpush1.msra.mxu0 0.0
        %3525 = vmatprep.subr.mxu0 0.0
        %3526 = vmatpush1.msra.mxu0 0.0
        %3527 = vmatprep.subr.mxu0 0.0
        %3528 = vmatpush1.msra.mxu0 0.0
        %3529 = vmatprep.subr.mxu0 0.0
        %3530 = vmatpush1.msra.mxu0 0.0
        %3531 = vmatprep.subr.mxu0 0.0
        %3532 = vmatpush1.msra.mxu0 0.0
        %3533 = vmatprep.subr.mxu0 0.0
        %3534 = vmatpush1.msra.mxu0 0.0
        %3535 = vmatprep.subr.mxu0 0.0
        %3536 = vmatpush1.msra.mxu0 0.0
        %3537 = vmatprep.subr.mxu0 0.0
        %3538 = vmatpush1.msra.mxu0 0.0
        %3539 = vmatprep.subr.mxu0 0.0
        %3540 = vmatpush1.msra.mxu0 0.0
        %3541 = vmatprep.subr.mxu0 0.0
        %3542 = vmatpush1.msra.mxu0 0.0
        %3543 = vmatprep.subr.mxu0 0.0
        %3544 = vmatpush1.msra.mxu0 0.0
        %3545 = vmatprep.subr.mxu0 0.0
        %3546 = vmatpush1.msra.mxu0 0.0
        %3547 = vmatprep.subr.mxu0 0.0
        %3548 = vmatpush1.msra.mxu0 0.0
        %3549 = vmatprep.subr.mxu0 0.0
        %3550 = vmatpush1.msra.mxu0 0.0
        %3551 = vmatprep.subr.mxu0 0.0
        %v3552 = vand.u32 %v3174, 4294901760
        %v3553 = vsub.f32 %v3174, %v3552
        %v3554 = vand.u32 %v3553, 4294901760
        %3555 = vmatpush1.msra.mxu0 %v3554
        %3556 = vmatprep.subr.mxu0 0.0
        %v3557 = vand.u32 %v3172, 4294901760
        %v3558 = vsub.f32 %v3172, %v3557
        %v3559 = vand.u32 %v3558, 4294901760
        %3560 = vmatpush1.msra.mxu0 %v3559
        %3561 = vmatprep.subr.mxu0 0.0
        %3562 = vmatpush2.msra.mxu0 0.0
        %3563 = vmatprep.subr.mxu0 0.0
        %3564 = vmatpush2.msra.mxu0 0.0
        %3565 = vmatprep.subr.mxu0 0.0
        %3566 = vmatpush2.msra.mxu0 0.0
        %3567 = vmatprep.subr.mxu0 0.0
        %3568 = vmatpush2.msra.mxu0 0.0
        %3569 = vmatprep.subr.mxu0 0.0
        %3570 = vmatpush2.msra.mxu0 0.0
        %3571 = vmatprep.subr.mxu0 0.0
        %3572 = vmatpush2.msra.mxu0 0.0
        %3573 = vmatprep.subr.mxu0 0.0
        %3574 = vmatpush2.msra.mxu0 0.0
        %3575 = vmatprep.subr.mxu0 0.0
        %3576 = vmatpush2.msra.mxu0 0.0
        %3577 = vmatprep.subr.mxu0 0.0
        %3578 = vmatpush2.msra.mxu0 0.0
        %3579 = vmatprep.subr.mxu0 0.0
        %3580 = vmatpush2.msra.mxu0 0.0
        %3581 = vmatprep.subr.mxu0 0.0
        %3582 = vmatpush2.msra.mxu0 0.0
        %3583 = vmatprep.subr.mxu0 0.0
        %3584 = vmatpush2.msra.mxu0 0.0
        %3585 = vmatprep.subr.mxu0 0.0
        %3586 = vmatpush2.msra.mxu0 0.0
        %3587 = vmatprep.subr.mxu0 0.0
        %3588 = vmatpush2.msra.mxu0 0.0
        %3589 = vmatprep.subr.mxu0 0.0
        %3590 = vmatpush2.msra.mxu0 0.0
        %3591 = vmatprep.subr.mxu0 0.0
        %3592 = vmatpush2.msra.mxu0 0.0
        %3593 = vmatprep.mubr.f32.mxu0 0.0
        %v3594 = vand.u32 %v3178, 4294901760
        %3595 = vmatmul.mubr.f32.gmra.mxu0 %v3594
        %v3596 = vpop.f32.mrf.mxu0
        %v3597 = vadd.f32 %v3512, %v3596
        %v3598 = vpop.f32.mrf.mxu0
        %3599 = vmatprep.mubr.f32.mxu0 0.0
        %v3600 = vand.u32 %v3181, 4294901760
        %3601 = vmatmul.mubr.f32.gmra.mxu0 %v3600
        %v3602 = vpop.f32.mrf.mxu0
        %v3603 = vadd.f32 %v3520, %v3602
        %v3604 = vpop.f32.mrf.mxu0
        %3605 = vdwg.mxu0
        %3606 = vmatprep.subr.mxu0 0.0
        %3607 = vmatpush1.msra.mxu0 0.0
        %3608 = vmatprep.subr.mxu0 0.0
        %3609 = vmatpush1.msra.mxu0 0.0
        %3610 = vmatprep.subr.mxu0 0.0
        %3611 = vmatpush1.msra.mxu0 0.0
        %3612 = vmatprep.subr.mxu0 0.0
        %3613 = vmatpush1.msra.mxu0 0.0
        %3614 = vmatprep.subr.mxu0 0.0
        %3615 = vmatpush1.msra.mxu0 0.0
        %3616 = vmatprep.subr.mxu0 0.0
        %3617 = vmatpush1.msra.mxu0 0.0
        %3618 = vmatprep.subr.mxu0 0.0
        %3619 = vmatpush1.msra.mxu0 0.0
        %3620 = vmatprep.subr.mxu0 0.0
        %3621 = vmatpush1.msra.mxu0 0.0
        %3622 = vmatprep.subr.mxu0 0.0
        %3623 = vmatpush1.msra.mxu0 0.0
        %3624 = vmatprep.subr.mxu0 0.0
        %3625 = vmatpush1.msra.mxu0 0.0
        %3626 = vmatprep.subr.mxu0 0.0
        %3627 = vmatpush1.msra.mxu0 0.0
        %3628 = vmatprep.subr.mxu0 0.0
        %3629 = vmatpush1.msra.mxu0 0.0
        %3630 = vmatprep.subr.mxu0 0.0
        %3631 = vmatpush1.msra.mxu0 0.0
        %3632 = vmatprep.subr.mxu0 0.0
        %3633 = vmatpush1.msra.mxu0 0.0
        %3634 = vmatprep.subr.mxu0 0.0
        %v3635 = vand.u32 %v3174, 4294901760
        %3636 = vmatpush1.msra.mxu0 %v3635
        %3637 = vmatprep.subr.mxu0 0.0
        %v3638 = vand.u32 %v3172, 4294901760
        %3639 = vmatpush1.msra.mxu0 %v3638
        %3640 = vmatprep.subr.mxu0 0.0
        %3641 = vmatpush2.msra.mxu0 0.0
        %3642 = vmatprep.subr.mxu0 0.0
        %3643 = vmatpush2.msra.mxu0 0.0
        %3644 = vmatprep.subr.mxu0 0.0
        %3645 = vmatpush2.msra.mxu0 0.0
        %3646 = vmatprep.subr.mxu0 0.0
        %3647 = vmatpush2.msra.mxu0 0.0
        %3648 = vmatprep.subr.mxu0 0.0
        %3649 = vmatpush2.msra.mxu0 0.0
        %3650 = vmatprep.subr.mxu0 0.0
        %3651 = vmatpush2.msra.mxu0 0.0
        %3652 = vmatprep.subr.mxu0 0.0
        %3653 = vmatpush2.msra.mxu0 0.0
        %3654 = vmatprep.subr.mxu0 0.0
        %3655 = vmatpush2.msra.mxu0 0.0
        %3656 = vmatprep.subr.mxu0 0.0
        %3657 = vmatpush2.msra.mxu0 0.0
        %3658 = vmatprep.subr.mxu0 0.0
        %3659 = vmatpush2.msra.mxu0 0.0
        %3660 = vmatprep.subr.mxu0 0.0
        %3661 = vmatpush2.msra.mxu0 0.0
        %3662 = vmatprep.subr.mxu0 0.0
        %3663 = vmatpush2.msra.mxu0 0.0
        %3664 = vmatprep.subr.mxu0 0.0
        %3665 = vmatpush2.msra.mxu0 0.0
        %3666 = vmatprep.subr.mxu0 0.0
        %3667 = vmatpush2.msra.mxu0 0.0
        %3668 = vmatprep.subr.mxu0 0.0
        %3669 = vmatpush2.msra.mxu0 0.0
        %3670 = vmatprep.subr.mxu0 0.0
        %3671 = vmatpush2.msra.mxu0 0.0
        %3672 = vmatprep.mubr.f32.mxu0 0.0
        %v3673 = vand.u32 %v3178, 4294901760
        %3674 = vmatmul.mubr.f32.gmra.mxu0 %v3673
        %v3675 = vpop.f32.mrf.mxu0
        %v3676 = vadd.f32 %v3597, %v3675
        %v3677 = vpop.f32.mrf.mxu0
        %3678 = vmatprep.mubr.f32.mxu0 0.0
        %v3679 = vand.u32 %v3181, 4294901760
        %3680 = vmatmul.mubr.f32.gmra.mxu0 %v3679
        %v3681 = vpop.f32.mrf.mxu0
        %v3682 = vadd.f32 %v3603, %v3681
        %v3683 = vpop.f32.mrf.mxu0
        %3684 = vdwg.mxu0
        %3685 = vst.msk [vmem:[%s362] sm:$0xff] %vm388, %v3160
        %3686 = vst.msk [vmem:[%s362 + $0x8] sm:$0xff] %vm388, %v3166
        %3687 = vst.msk [vmem:[%s362 + $0x10] sm:$0xff] %vm388, %v3676
        %3688 = vst.msk [vmem:[%s362 + $0x18] sm:$0xff] %vm388, %v3682
        %s3689 = sand.u32 %s151, 1
        %s3690 = scalar_lea.sflag [#allocation5], %s3689
        %s3691 = sand.u32 %s151, 1
        %s3692 = smul.addr %s3691, 32
        %s3693 = scalar_lea.vmem [#allocation6], %s3692
        // Predicated region
        $region79: #{_cross_attention_4d.1} parent=69 // pred_check
          %p3694 = pneg %p161
        $region80: #{_cross_attention_4d.1} parent=69 // pred_check_branch
          %3696 = sbr.rel (%p3694) target = $region82
        $region81: #{_cross_attention_4d.1} parent=69 // pred_region
          #allocation10 [shape = 'u32[6]{0}', space=smem, size = 0x18, scoped, tag = 'DMA stride descriptor']
          %s3697 = smul.u32 2, %s26
          %s3699 = ssub.s32 512, 512
          %3700 = vsyncadd %s3690, %s3699
          %s3701 = smul.addr %s25, 2
          %s3702 = smul.addr %s3697, 8
          %s3703 = sadd.s32 %s3701, %s3702
          %s3704 = smul.addr %s3703, 128
          %s3705 = scalar_lea.hbm %s4, %s3704
          %s3707 = sshll.u32 1, 14
          %s3708 = sxor.u32 4294967295, %s3707
          %s3711 = sshll.u32 7, 18
          %s3712 = sxor.u32 4294967295, %s3711
          %s3713 = sand.u32 0, %s3712
          %s3715 = sor.u32 %s3713, 0
          %s3716 = sshll.u32 %s3693, 4
          %s3717 = int_to_ptr.vmem [resolvable:$true] %s3716
          %3723 = sst [smem:[#allocation10]] 256
          %s3724 = scalar_lea.smem [#allocation10], 1
          %3725 = sst [smem:[%s3724]] 1024
          %s3726 = scalar_lea.smem [#allocation10], 2
          %3727 = sst [smem:[%s3726]] 2
          %s3728 = scalar_lea.smem [#allocation10], 3
          %3729 = sst [smem:[%s3728]] 128
          %s3730 = scalar_lea.smem [#allocation10], 4
          %3731 = sst [smem:[%s3730]] 128
          %s3732 = scalar_lea.smem [#allocation10], 5
          %3733 = sst [smem:[%s3732]] 8
          %3735 = dma.general %s3717, 512, %s3705, %s3690, 131072, [#allocation10], %s3715, 0
        $region82: #{_cross_attention_4d.1} parent=69 // pred_fallthru
          _
      $region70: #{_cross_attention_4d.1} parent=5 // pred_fallthru
        _
      %p3736 = scmp.le.s32.totalorder 2, %s16
      // Predicated region
      $region83: #{_cross_attention_4d.1} parent=5 // pred_check
        %p3737 = pneg %p3736
      $region84: #{_cross_attention_4d.1} parent=5 // pred_check_branch
        %3739 = sbr.rel (%p3737) target = $region86
      $region85: #{_cross_attention_4d.1} parent=5 // pred_region
        %s3740 = ssub.s32 %s16, 2
        // Predicated region
        $region87: #{_cross_attention_4d.1} parent=85 // pred_check
          %p3741 = pneg %p167
        $region88: #{_cross_attention_4d.1} parent=85 // pred_check_branch
          %3743 = sbr.rel (%p3741) target = $region90
        $region89: #{_cross_attention_4d.1} parent=85 // pred_region
          %s3744 = sand.u32 %s152, 1
          %s3745 = scalar_lea.sflag [#allocation5], %s3744
          %s3746 = sand.u32 %s152, 1
          %s3747 = smul.addr %s3746, 32
          %s3748 = scalar_lea.vmem [#allocation6], %s3747
          %3749 = dma.done %s3745, 512
        $region90: #{_cross_attention_4d.1} parent=85 // pred_fallthru
          _
      $region86: #{_cross_attention_4d.1} parent=5 // pred_fallthru
        _
    $region6: #{_cross_attention_4d.1} parent=1 // loop_footer
      %s20 = sadd.s32 1, %s16
    $region7: #{_cross_attention_4d.1} parent=1 // loop_footer_branch
      %15 = sbr.rel target = $region3
    $region8: #{_cross_attention_4d.1} parent=1 // loop_exit
      _
    %3750 = vsyncpa [#allocation4], 1
    %s3751 = scalar_lea.sflag [#allocation4], 1
    %3752 = vsyncpa %s3751, 1
    %3753 = vsyncpa [#allocation5], 1
    %s3754 = scalar_lea.sflag [#allocation5], 1
    %3755 = vsyncpa %s3754, 1

</llo_original>
